<compile_context>
chip_gen: v7x
topology: tpu7x:2x2x1
jax: 0.10.0
libtpu: 0.0.40
codegen_flags: <defaults>
</compile_context>

<pallas_src>
import functools

import jax
import jax.numpy as jnp
from jax.experimental import pallas as pl
from jax.experimental.pallas import tpu as pltpu


def _vmem_limit_bytes():
    # Explicit scoped-VMEM limit with headroom per generation (~3/4 of physical,
    # capped at 100 MiB so v5e/v6e get ~96-100 MiB and v7x gets ~48 MiB).
    try:
        cap = pltpu.get_tpu_info().vmem_capacity_bytes
    except Exception:
        cap = 64 * 1024 * 1024
    return int(min(100 * 1024 * 1024, cap * 3 // 4))


# ----------------------------------------------------------------------------
# Kernel 1: fused 3x3 conv (pad=1) + bias + ReLU + 2x2/2 maxpool
# ----------------------------------------------------------------------------
def _conv_relu_pool_kernel(x_ref, w_ref, b_ref, o_ref, row_buf):
    """Computes one pooled output row.

    x_ref:   (H+2, W+2, Cin) padded input image (f32); same block across the row
             axis of the grid, so it is DMA'd into VMEM once per image.
    w_ref:   (9, Cin, Cout)  conv taps, bf16.
    b_ref:   (1, Cout)       bias, f32.
    o_ref:   (Wo, Cout)      one pooled output row, f32.
    row_buf: (W, Cout)       f32 VMEM scratch (vertically pooled conv-row pair).
    """
    W, Cout = row_buf.shape
    Wo = W // 2
    ho = pl.program_id(1)
    bias = b_ref[...]                                        # (1, Cout)

    def conv_row(h):
        # One conv output row = 9 shifted bf16 GEMMs on the haloed tile (MXU),
        # accumulated in f32 — no im2col buffer ever touches HBM.
        acc = jnp.zeros((W, Cout), jnp.float32)
        for kh in range(3):
            for kw in range(3):
                patch = x_ref[h + kh, pl.ds(kw, W), :]        # (W, Cin)
                acc = acc + jnp.dot(patch.astype(jnp.bfloat16),
                                    w_ref[kh * 3 + kw],
                                    preferred_element_type=jnp.float32)
        return jnp.maximum(acc + bias, 0.0)                   # bias + ReLU

    # vertical 2->1 max pool of the two conv rows feeding pooled row `ho`
    row_buf[...] = jnp.maximum(conv_row(2 * ho), conv_row(2 * ho + 1))
    # horizontal 2->1 max pool via stride-2 VMEM reads (lane dim = channels untouched)
    o_ref[...] = jnp.maximum(row_buf[pl.ds(0, Wo, 2), :],
                             row_buf[pl.ds(1, Wo, 2), :])


def conv3x3_relu_pool(x_nhwc, w_taps, bias):
    """x: (N, H, W, Cin) f32;  w_taps: (9, Cin, Cout) bf16;  bias: (Cout,) f32.
    Returns pooled activations (N, H//2, W//2, Cout) f32."""
    N, H, W, Cin = x_nhwc.shape
    Cout = w_taps.shape[-1]
    Ho, Wo = H // 2, W // 2
    xp = jnp.pad(x_nhwc, ((0, 0), (1, 1), (1, 1), (0, 0)))   # zero halo (glue)

    grid_spec = pltpu.PrefetchScalarGridSpec(
        num_scalar_prefetch=0,
        grid=(N, Ho),
        in_specs=[
            pl.BlockSpec((pl.Squeezed(), H + 2, W + 2, Cin),
                         lambda n, ho: (n, 0, 0, 0)),
            pl.BlockSpec((9, Cin, Cout), lambda n, ho: (0, 0, 0)),
            pl.BlockSpec((1, Cout), lambda n, ho: (0, 0)),
        ],
        out_specs=pl.BlockSpec((pl.Squeezed(), pl.Squeezed(), Wo, Cout),
                               lambda n, ho: (n, ho, 0, 0)),
        scratch_shapes=[pltpu.VMEM((W, Cout), jnp.float32)],
    )
    return pl.pallas_call(
        _conv_relu_pool_kernel,
        out_shape=jax.ShapeDtypeStruct((N, Ho, Wo, Cout), jnp.float32),
        grid_spec=grid_spec,
        compiler_params=pltpu.CompilerParams(
            # both axes are independent -> shard across megacore TCs on v7x
            dimension_semantics=("parallel", "parallel"),
            vmem_limit_bytes=_vmem_limit_bytes(),
        ),
    )(xp, w_taps, bias.reshape(1, Cout))


# ----------------------------------------------------------------------------
# Kernel 2: fused fc1 (K-tiled, f32 accumulator) + ReLU + fc2 (lane-dense output)
# ----------------------------------------------------------------------------
def _mlp_kernel(x_ref, w1_ref, b1_ref, w2_ref, b2_ref, o_ref, acc_ref):
    k = pl.program_id(0)

    @pl.when(k == 0)
    def _():
        acc_ref[...] = jnp.zeros_like(acc_ref)

    acc_ref[...] += jnp.dot(x_ref[...], w1_ref[...],
                            preferred_element_type=jnp.float32)

    @pl.when(k == pl.num_programs(0) - 1)
    def _():
        h = jnp.maximum(acc_ref[...] + b1_ref[...], 0.0).astype(jnp.bfloat16)
        o_ref[...] = (jnp.dot(h, w2_ref[...], preferred_element_type=jnp.float32)
                      + b2_ref[...])


def mlp_fc1_relu_fc2(x_flat_bf16, w1, b1, w2_pad, b2_pad, *, k_tile):
    N, feat = x_flat_bf16.shape
    hidden = w1.shape[1]
    ncp = w2_pad.shape[1]
    assert feat % k_tile == 0, (feat, k_tile)

    grid_spec = pltpu.PrefetchScalarGridSpec(
        num_scalar_prefetch=0,
        grid=(feat // k_tile,),
        in_specs=[
            pl.BlockSpec((N, k_tile), lambda k: (0, k)),
            # fc1 weight streaming; at full scale sweep pipeline_mode=pl.Buffered(3)
            pl.BlockSpec((k_tile, hidden), lambda k: (k, 0)),
            pl.BlockSpec((1, hidden), lambda k: (0, 0)),
            pl.BlockSpec((hidden, ncp), lambda k: (0, 0)),
            pl.BlockSpec((1, ncp), lambda k: (0, 0)),
        ],
        out_specs=pl.BlockSpec((N, ncp), lambda k: (0, 0)),
        scratch_shapes=[pltpu.VMEM((N, hidden), jnp.float32)],
    )
    return pl.pallas_call(
        _mlp_kernel,
        out_shape=jax.ShapeDtypeStruct((N, ncp), jnp.float32),
        grid_spec=grid_spec,
        compiler_params=pltpu.CompilerParams(
            dimension_semantics=("arbitrary",),   # K reduction axis
            vmem_limit_bytes=_vmem_limit_bytes(),
        ),
    )(x_flat_bf16, w1, b1.reshape(1, hidden), w2_pad, b2_pad.reshape(1, ncp))


# ----------------------------------------------------------------------------
# Forward pass
# ----------------------------------------------------------------------------
def better_cnn_forward(x_nchw, params, num_classes):
    x = jnp.transpose(x_nchw, (0, 2, 3, 1)).astype(jnp.float32)   # NCHW -> NHWC (once)

    x = conv3x3_relu_pool(x, params["w1"], params["b1"])
    x = conv3x3_relu_pool(x, params["w2"], params["b2"])
    x = conv3x3_relu_pool(x, params["w3"], params["b3"])

    # torch.flatten(x, 1) flattens in (C, H, W) order; fc1_w's rows were permuted
    # once at init to consume the NHWC flatten order directly -> no runtime transpose.
    N = x.shape[0]
    flat = x.reshape(N, -1).astype(jnp.bfloat16)
    feat = flat.shape[1]

    # K tile sized for the smallest-VMEM generation (v7x, 64 MiB): 4096 x 512 bf16
    # double-buffered stays well under budget; fall back to 128 / full at toy sizes.
    k_tile = 4096 if feat % 4096 == 0 else (128 if feat % 128 == 0 else feat)

    logits_pad = mlp_fc1_relu_fc2(flat, params["fc1_w"], params["fc1_b"],
                                  params["fc2_w"], params["fc2_b"], k_tile=k_tile)
    # logSoftmax is computed-and-discarded in the PyTorch forward (it returns x);
    # we return the fc2 logits to match exactly, sliced back from the padded lanes.
    return logits_pad[:, :num_classes]


# ----------------------------------------------------------------------------
# Deterministic parameter init (shapes from BetterCNN.__init__, scaled fc1),
# pre-laid-out for the TPU kernels.
# ----------------------------------------------------------------------------
def init_params(key, num_classes, in_h, in_w):
    def uniform(k, shape, fan_in):
        bound = 1.0 / jnp.sqrt(jnp.float32(fan_in))
        return jax.random.uniform(k, shape, jnp.float32, -bound, bound)

    ks = jax.random.split(key, 10)
    Hf, Wf, Cf = in_h // 8, in_w // 8, 64
    feat = Cf * Hf * Wf
    ncp = -(-num_classes // 128) * 128        # pad classes to full 128-lane stores

    def conv_taps(k, cin, cout):
        w_hwio = uniform(k, (3, 3, cin, cout), 9 * cin)        # HWIO
        return w_hwio.reshape(9, cin, cout).astype(jnp.bfloat16)

    # fc1 generated in the PyTorch (C,H,W)-flatten row order, then permuted ONCE
    # so the kernel consumes the NHWC flatten order directly.
    fc1_chw = uniform(ks[6], (feat, 512), feat)
    fc1_nhwc = (fc1_chw.reshape(Cf, Hf, Wf, 512)
                .transpose(1, 2, 0, 3).reshape(feat, 512)).astype(jnp.bfloat16)

    fc2 = uniform(ks[8], (512, num_classes), 512)
    fc2_pad = jnp.zeros((512, ncp), jnp.float32).at[:, :num_classes].set(fc2)
    fc2_b = uniform(ks[9], (num_classes,), 512)
    fc2_b_pad = jnp.zeros((ncp,), jnp.float32).at[:num_classes].set(fc2_b)

    return {
        "w1": conv_taps(ks[0], 1, 16),  "b1": uniform(ks[1], (16,), 9 * 1),
        "w2": conv_taps(ks[2], 16, 32), "b2": uniform(ks[3], (32,), 9 * 16),
        "w3": conv_taps(ks[4], 32, 64), "b3": uniform(ks[5], (64,), 9 * 32),
        "fc1_w": fc1_nhwc, "fc1_b": uniform(ks[7], (512,), feat),
        "fc2_w": fc2_pad.astype(jnp.bfloat16), "fc2_b": fc2_b_pad,
    }


if __name__ == "__main__":
    key = jax.random.PRNGKey(0)
    k_x, k_p = jax.random.split(key)

    N, C, H, W = 2, 1, 16, 16
    num_classes = 10

    x = jax.random.normal(k_x, (N, C, H, W), jnp.float32)
    params = init_params(k_p, num_classes, H, W)

    fwd = jax.jit(functools.partial(better_cnn_forward, num_classes=num_classes))
    out = jax.block_until_ready(fwd(x, params))

    assert out.shape == (N, num_classes), out.shape
    assert out.dtype == jnp.float32
    assert bool(jnp.all(jnp.isfinite(out)))
    print("KERNEL_OK")
</pallas_src>

<mosaic_0001>
module attributes {stable_mosaic.version = 11 : i64} {
  func.func @_conv_relu_pool_kernel(%arg0: i32, %arg1: i32, %arg2: memref<1x18x18x1xf32, #tpu.memory_space<vmem>>, %arg3: memref<9x1x16xbf16, #tpu.memory_space<vmem>>, %arg4: memref<1x16xf32, #tpu.memory_space<vmem>>, %arg5: memref<1x1x8x16xf32, #tpu.memory_space<vmem>>, %arg6: memref<16x16xf32, #tpu.memory_space<vmem>>) attributes {dimension_semantics = [#tpu.dimension_semantics<parallel>, #tpu.dimension_semantics<parallel>], iteration_bounds = array<i64: 2, 8>, scalar_prefetch = 0 : i64, scratch_operands = 1 : i64, tpu.core_type = #tpu.core_type<tc>, window_params = [{transform_indices = @transform_0, window_bounds = array<i64: 1, 18, 18, 1>}, {pipeline_mode = #tpu.pipeline_mode<synchronous>, transform_indices = @transform_1, window_bounds = array<i64: 9, 1, 16>}, {pipeline_mode = #tpu.pipeline_mode<synchronous>, transform_indices = @transform_2, window_bounds = array<i64: 1, 16>}, {transform_indices = @transform_3, window_bounds = array<i64: 1, 1, 8, 16>}]} {
    %c0 = arith.constant 0 : index
    %c0_0 = arith.constant 0 : index
    %0 = vector.load %arg4[%c0, %c0_0] : memref<1x16xf32, #tpu.memory_space<vmem>>, vector<1x16xf32>
    %c2_i32 = arith.constant 2 : i32
    %1 = arith.muli %c2_i32, %arg1 : i32
    %cst = arith.constant 0.000000e+00 : f32
    %2 = vector.broadcast %cst : f32 to vector<16x16xf32>
    %c0_i32 = arith.constant 0 : i32
    %3 = arith.addi %1, %c0_i32 : i32
    %c0_1 = arith.constant 0 : index
    %4 = arith.index_cast %3 : i32 to index
    %c0_2 = arith.constant 0 : index
    %c0_3 = arith.constant 0 : index
    %5 = vector.load %arg2[%c0_1, %4, %c0_2, %c0_3] : memref<1x18x18x1xf32, #tpu.memory_space<vmem>>, vector<1x1x16x1xf32>
    %6 = vector.shape_cast %5 : vector<1x1x16x1xf32> to vector<16x1xf32>
    %7 = arith.truncf %6 : vector<16x1xf32> to vector<16x1xbf16>
    %c0_4 = arith.constant 0 : index
    %c0_5 = arith.constant 0 : index
    %c0_6 = arith.constant 0 : index
    %8 = vector.load %arg3[%c0_4, %c0_5, %c0_6] : memref<9x1x16xbf16, #tpu.memory_space<vmem>>, vector<1x1x16xbf16>
    %9 = vector.shape_cast %8 : vector<1x1x16xbf16> to vector<1x16xbf16>
    %cst_7 = arith.constant dense<0.000000e+00> : vector<16x16xf32>
    %10 = tpu.matmul %7, %9, %cst_7 {dimension_numbers = #tpu.dot_dimension_numbers<[1], [0], [0], [1], [0, 0, 1, 1], [], []>} : vector<16x1xbf16>, vector<1x16xbf16>, vector<16x16xf32> -> vector<16x16xf32>
    %11 = arith.addf %2, %10 : vector<16x16xf32>
    %c0_i32_8 = arith.constant 0 : i32
    %12 = arith.addi %1, %c0_i32_8 : i32
    %c0_9 = arith.constant 0 : index
    %13 = arith.index_cast %12 : i32 to index
    %c1 = arith.constant 1 : index
    %c0_10 = arith.constant 0 : index
    %14 = vector.load %arg2[%c0_9, %13, %c1, %c0_10] : memref<1x18x18x1xf32, #tpu.memory_space<vmem>>, vector<1x1x16x1xf32>
    %15 = vector.shape_cast %14 : vector<1x1x16x1xf32> to vector<16x1xf32>
    %16 = arith.truncf %15 : vector<16x1xf32> to vector<16x1xbf16>
    %c1_11 = arith.constant 1 : index
    %c0_12 = arith.constant 0 : index
    %c0_13 = arith.constant 0 : index
    %17 = vector.load %arg3[%c1_11, %c0_12, %c0_13] : memref<9x1x16xbf16, #tpu.memory_space<vmem>>, vector<1x1x16xbf16>
    %18 = vector.shape_cast %17 : vector<1x1x16xbf16> to vector<1x16xbf16>
    %cst_14 = arith.constant dense<0.000000e+00> : vector<16x16xf32>
    %19 = tpu.matmul %16, %18, %cst_14 {dimension_numbers = #tpu.dot_dimension_numbers<[1], [0], [0], [1], [0, 0, 1, 1], [], []>} : vector<16x1xbf16>, vector<1x16xbf16>, vector<16x16xf32> -> vector<16x16xf32>
    %20 = arith.addf %11, %19 : vector<16x16xf32>
    %c0_i32_15 = arith.constant 0 : i32
    %21 = arith.addi %1, %c0_i32_15 : i32
    %c0_16 = arith.constant 0 : index
    %22 = arith.index_cast %21 : i32 to index
    %c2 = arith.constant 2 : index
    %c0_17 = arith.constant 0 : index
    %23 = vector.load %arg2[%c0_16, %22, %c2, %c0_17] : memref<1x18x18x1xf32, #tpu.memory_space<vmem>>, vector<1x1x16x1xf32>
    %24 = vector.shape_cast %23 : vector<1x1x16x1xf32> to vector<16x1xf32>
    %25 = arith.truncf %24 : vector<16x1xf32> to vector<16x1xbf16>
    %c2_18 = arith.constant 2 : index
    %c0_19 = arith.constant 0 : index
    %c0_20 = arith.constant 0 : index
    %26 = vector.load %arg3[%c2_18, %c0_19, %c0_20] : memref<9x1x16xbf16, #tpu.memory_space<vmem>>, vector<1x1x16xbf16>
    %27 = vector.shape_cast %26 : vector<1x1x16xbf16> to vector<1x16xbf16>
    %cst_21 = arith.constant dense<0.000000e+00> : vector<16x16xf32>
    %28 = tpu.matmul %25, %27, %cst_21 {dimension_numbers = #tpu.dot_dimension_numbers<[1], [0], [0], [1], [0, 0, 1, 1], [], []>} : vector<16x1xbf16>, vector<1x16xbf16>, vector<16x16xf32> -> vector<16x16xf32>
    %29 = arith.addf %20, %28 : vector<16x16xf32>
    %c1_i32 = arith.constant 1 : i32
    %30 = arith.addi %1, %c1_i32 : i32
    %c0_22 = arith.constant 0 : index
    %31 = arith.index_cast %30 : i32 to index
    %c0_23 = arith.constant 0 : index
    %c0_24 = arith.constant 0 : index
    %32 = vector.load %arg2[%c0_22, %31, %c0_23, %c0_24] : memref<1x18x18x1xf32, #tpu.memory_space<vmem>>, vector<1x1x16x1xf32>
    %33 = vector.shape_cast %32 : vector<1x1x16x1xf32> to vector<16x1xf32>
    %34 = arith.truncf %33 : vector<16x1xf32> to vector<16x1xbf16>
    %c3 = arith.constant 3 : index
    %c0_25 = arith.constant 0 : index
    %c0_26 = arith.constant 0 : index
    %35 = vector.load %arg3[%c3, %c0_25, %c0_26] : memref<9x1x16xbf16, #tpu.memory_space<vmem>>, vector<1x1x16xbf16>
    %36 = vector.shape_cast %35 : vector<1x1x16xbf16> to vector<1x16xbf16>
    %cst_27 = arith.constant dense<0.000000e+00> : vector<16x16xf32>
    %37 = tpu.matmul %34, %36, %cst_27 {dimension_numbers = #tpu.dot_dimension_numbers<[1], [0], [0], [1], [0, 0, 1, 1], [], []>} : vector<16x1xbf16>, vector<1x16xbf16>, vector<16x16xf32> -> vector<16x16xf32>
    %38 = arith.addf %29, %37 : vector<16x16xf32>
    %c1_i32_28 = arith.constant 1 : i32
    %39 = arith.addi %1, %c1_i32_28 : i32
    %c0_29 = arith.constant 0 : index
    %40 = arith.index_cast %39 : i32 to index
    %c1_30 = arith.constant 1 : index
    %c0_31 = arith.constant 0 : index
    %41 = vector.load %arg2[%c0_29, %40, %c1_30, %c0_31] : memref<1x18x18x1xf32, #tpu.memory_space<vmem>>, vector<1x1x16x1xf32>
    %42 = vector.shape_cast %41 : vector<1x1x16x1xf32> to vector<16x1xf32>
    %43 = arith.truncf %42 : vector<16x1xf32> to vector<16x1xbf16>
    %c4 = arith.constant 4 : index
    %c0_32 = arith.constant 0 : index
    %c0_33 = arith.constant 0 : index
    %44 = vector.load %arg3[%c4, %c0_32, %c0_33] : memref<9x1x16xbf16, #tpu.memory_space<vmem>>, vector<1x1x16xbf16>
    %45 = vector.shape_cast %44 : vector<1x1x16xbf16> to vector<1x16xbf16>
    %cst_34 = arith.constant dense<0.000000e+00> : vector<16x16xf32>
    %46 = tpu.matmul %43, %45, %cst_34 {dimension_numbers = #tpu.dot_dimension_numbers<[1], [0], [0], [1], [0, 0, 1, 1], [], []>} : vector<16x1xbf16>, vector<1x16xbf16>, vector<16x16xf32> -> vector<16x16xf32>
    %47 = arith.addf %38, %46 : vector<16x16xf32>
    %c1_i32_35 = arith.constant 1 : i32
    %48 = arith.addi %1, %c1_i32_35 : i32
    %c0_36 = arith.constant 0 : index
    %49 = arith.index_cast %48 : i32 to index
    %c2_37 = arith.constant 2 : index
    %c0_38 = arith.constant 0 : index
    %50 = vector.load %arg2[%c0_36, %49, %c2_37, %c0_38] : memref<1x18x18x1xf32, #tpu.memory_space<vmem>>, vector<1x1x16x1xf32>
    %51 = vector.shape_cast %50 : vector<1x1x16x1xf32> to vector<16x1xf32>
    %52 = arith.truncf %51 : vector<16x1xf32> to vector<16x1xbf16>
    %c5 = arith.constant 5 : index
    %c0_39 = arith.constant 0 : index
    %c0_40 = arith.constant 0 : index
    %53 = vector.load %arg3[%c5, %c0_39, %c0_40] : memref<9x1x16xbf16, #tpu.memory_space<vmem>>, vector<1x1x16xbf16>
    %54 = vector.shape_cast %53 : vector<1x1x16xbf16> to vector<1x16xbf16>
    %cst_41 = arith.constant dense<0.000000e+00> : vector<16x16xf32>
    %55 = tpu.matmul %52, %54, %cst_41 {dimension_numbers = #tpu.dot_dimension_numbers<[1], [0], [0], [1], [0, 0, 1, 1], [], []>} : vector<16x1xbf16>, vector<1x16xbf16>, vector<16x16xf32> -> vector<16x16xf32>
    %56 = arith.addf %47, %55 : vector<16x16xf32>
    %c2_i32_42 = arith.constant 2 : i32
    %57 = arith.addi %1, %c2_i32_42 : i32
    %c0_43 = arith.constant 0 : index
    %58 = arith.index_cast %57 : i32 to index
    %c0_44 = arith.constant 0 : index
    %c0_45 = arith.constant 0 : index
    %59 = vector.load %arg2[%c0_43, %58, %c0_44, %c0_45] : memref<1x18x18x1xf32, #tpu.memory_space<vmem>>, vector<1x1x16x1xf32>
    %60 = vector.shape_cast %59 : vector<1x1x16x1xf32> to vector<16x1xf32>
    %61 = arith.truncf %60 : vector<16x1xf32> to vector<16x1xbf16>
    %c6 = arith.constant 6 : index
    %c0_46 = arith.constant 0 : index
    %c0_47 = arith.constant 0 : index
    %62 = vector.load %arg3[%c6, %c0_46, %c0_47] : memref<9x1x16xbf16, #tpu.memory_space<vmem>>, vector<1x1x16xbf16>
    %63 = vector.shape_cast %62 : vector<1x1x16xbf16> to vector<1x16xbf16>
    %cst_48 = arith.constant dense<0.000000e+00> : vector<16x16xf32>
    %64 = tpu.matmul %61, %63, %cst_48 {dimension_numbers = #tpu.dot_dimension_numbers<[1], [0], [0], [1], [0, 0, 1, 1], [], []>} : vector<16x1xbf16>, vector<1x16xbf16>, vector<16x16xf32> -> vector<16x16xf32>
    %65 = arith.addf %56, %64 : vector<16x16xf32>
    %c2_i32_49 = arith.constant 2 : i32
    %66 = arith.addi %1, %c2_i32_49 : i32
    %c0_50 = arith.constant 0 : index
    %67 = arith.index_cast %66 : i32 to index
    %c1_51 = arith.constant 1 : index
    %c0_52 = arith.constant 0 : index
    %68 = vector.load %arg2[%c0_50, %67, %c1_51, %c0_52] : memref<1x18x18x1xf32, #tpu.memory_space<vmem>>, vector<1x1x16x1xf32>
    %69 = vector.shape_cast %68 : vector<1x1x16x1xf32> to vector<16x1xf32>
    %70 = arith.truncf %69 : vector<16x1xf32> to vector<16x1xbf16>
    %c7 = arith.constant 7 : index
    %c0_53 = arith.constant 0 : index
    %c0_54 = arith.constant 0 : index
    %71 = vector.load %arg3[%c7, %c0_53, %c0_54] : memref<9x1x16xbf16, #tpu.memory_space<vmem>>, vector<1x1x16xbf16>
    %72 = vector.shape_cast %71 : vector<1x1x16xbf16> to vector<1x16xbf16>
    %cst_55 = arith.constant dense<0.000000e+00> : vector<16x16xf32>
    %73 = tpu.matmul %70, %72, %cst_55 {dimension_numbers = #tpu.dot_dimension_numbers<[1], [0], [0], [1], [0, 0, 1, 1], [], []>} : vector<16x1xbf16>, vector<1x16xbf16>, vector<16x16xf32> -> vector<16x16xf32>
    %74 = arith.addf %65, %73 : vector<16x16xf32>
    %c2_i32_56 = arith.constant 2 : i32
    %75 = arith.addi %1, %c2_i32_56 : i32
    %c0_57 = arith.constant 0 : index
    %76 = arith.index_cast %75 : i32 to index
    %c2_58 = arith.constant 2 : index
    %c0_59 = arith.constant 0 : index
    %77 = vector.load %arg2[%c0_57, %76, %c2_58, %c0_59] : memref<1x18x18x1xf32, #tpu.memory_space<vmem>>, vector<1x1x16x1xf32>
    %78 = vector.shape_cast %77 : vector<1x1x16x1xf32> to vector<16x1xf32>
    %79 = arith.truncf %78 : vector<16x1xf32> to vector<16x1xbf16>
    %c8 = arith.constant 8 : index
    %c0_60 = arith.constant 0 : index
    %c0_61 = arith.constant 0 : index
    %80 = vector.load %arg3[%c8, %c0_60, %c0_61] : memref<9x1x16xbf16, #tpu.memory_space<vmem>>, vector<1x1x16xbf16>
    %81 = vector.shape_cast %80 : vector<1x1x16xbf16> to vector<1x16xbf16>
    %cst_62 = arith.constant dense<0.000000e+00> : vector<16x16xf32>
    %82 = tpu.matmul %79, %81, %cst_62 {dimension_numbers = #tpu.dot_dimension_numbers<[1], [0], [0], [1], [0, 0, 1, 1], [], []>} : vector<16x1xbf16>, vector<1x16xbf16>, vector<16x16xf32> -> vector<16x16xf32>
    %83 = arith.addf %74, %82 : vector<16x16xf32>
    %84 = vector.broadcast %0 : vector<1x16xf32> to vector<16x16xf32>
    %85 = arith.addf %83, %84 : vector<16x16xf32>
    %cst_63 = arith.constant 0.000000e+00 : f32
    %86 = vector.broadcast %cst_63 : f32 to vector<16x16xf32>
    %87 = arith.maximumf %85, %86 : vector<16x16xf32>
    %c2_i32_64 = arith.constant 2 : i32
    %88 = arith.muli %c2_i32_64, %arg1 : i32
    %c1_i32_65 = arith.constant 1 : i32
    %89 = arith.addi %88, %c1_i32_65 : i32
    %cst_66 = arith.constant 0.000000e+00 : f32
    %90 = vector.broadcast %cst_66 : f32 to vector<16x16xf32>
    %c0_i32_67 = arith.constant 0 : i32
    %91 = arith.addi %89, %c0_i32_67 : i32
    %c0_68 = arith.constant 0 : index
    %92 = arith.index_cast %91 : i32 to index
    %c0_69 = arith.constant 0 : index
    %c0_70 = arith.constant 0 : index
    %93 = vector.load %arg2[%c0_68, %92, %c0_69, %c0_70] : memref<1x18x18x1xf32, #tpu.memory_space<vmem>>, vector<1x1x16x1xf32>
    %94 = vector.shape_cast %93 : vector<1x1x16x1xf32> to vector<16x1xf32>
    %95 = arith.truncf %94 : vector<16x1xf32> to vector<16x1xbf16>
    %c0_71 = arith.constant 0 : index
    %c0_72 = arith.constant 0 : index
    %c0_73 = arith.constant 0 : index
    %96 = vector.load %arg3[%c0_71, %c0_72, %c0_73] : memref<9x1x16xbf16, #tpu.memory_space<vmem>>, vector<1x1x16xbf16>
    %97 = vector.shape_cast %96 : vector<1x1x16xbf16> to vector<1x16xbf16>
    %cst_74 = arith.constant dense<0.000000e+00> : vector<16x16xf32>
    %98 = tpu.matmul %95, %97, %cst_74 {dimension_numbers = #tpu.dot_dimension_numbers<[1], [0], [0], [1], [0, 0, 1, 1], [], []>} : vector<16x1xbf16>, vector<1x16xbf16>, vector<16x16xf32> -> vector<16x16xf32>
    %99 = arith.addf %90, %98 : vector<16x16xf32>
    %c0_i32_75 = arith.constant 0 : i32
    %100 = arith.addi %89, %c0_i32_75 : i32
    %c0_76 = arith.constant 0 : index
    %101 = arith.index_cast %100 : i32 to index
    %c1_77 = arith.constant 1 : index
    %c0_78 = arith.constant 0 : index
    %102 = vector.load %arg2[%c0_76, %101, %c1_77, %c0_78] : memref<1x18x18x1xf32, #tpu.memory_space<vmem>>, vector<1x1x16x1xf32>
    %103 = vector.shape_cast %102 : vector<1x1x16x1xf32> to vector<16x1xf32>
    %104 = arith.truncf %103 : vector<16x1xf32> to vector<16x1xbf16>
    %c1_79 = arith.constant 1 : index
    %c0_80 = arith.constant 0 : index
    %c0_81 = arith.constant 0 : index
    %105 = vector.load %arg3[%c1_79, %c0_80, %c0_81] : memref<9x1x16xbf16, #tpu.memory_space<vmem>>, vector<1x1x16xbf16>
    %106 = vector.shape_cast %105 : vector<1x1x16xbf16> to vector<1x16xbf16>
    %cst_82 = arith.constant dense<0.000000e+00> : vector<16x16xf32>
    %107 = tpu.matmul %104, %106, %cst_82 {dimension_numbers = #tpu.dot_dimension_numbers<[1], [0], [0], [1], [0, 0, 1, 1], [], []>} : vector<16x1xbf16>, vector<1x16xbf16>, vector<16x16xf32> -> vector<16x16xf32>
    %108 = arith.addf %99, %107 : vector<16x16xf32>
    %c0_i32_83 = arith.constant 0 : i32
    %109 = arith.addi %89, %c0_i32_83 : i32
    %c0_84 = arith.constant 0 : index
    %110 = arith.index_cast %109 : i32 to index
    %c2_85 = arith.constant 2 : index
    %c0_86 = arith.constant 0 : index
    %111 = vector.load %arg2[%c0_84, %110, %c2_85, %c0_86] : memref<1x18x18x1xf32, #tpu.memory_space<vmem>>, vector<1x1x16x1xf32>
    %112 = vector.shape_cast %111 : vector<1x1x16x1xf32> to vector<16x1xf32>
    %113 = arith.truncf %112 : vector<16x1xf32> to vector<16x1xbf16>
    %c2_87 = arith.constant 2 : index
    %c0_88 = arith.constant 0 : index
    %c0_89 = arith.constant 0 : index
    %114 = vector.load %arg3[%c2_87, %c0_88, %c0_89] : memref<9x1x16xbf16, #tpu.memory_space<vmem>>, vector<1x1x16xbf16>
    %115 = vector.shape_cast %114 : vector<1x1x16xbf16> to vector<1x16xbf16>
    %cst_90 = arith.constant dense<0.000000e+00> : vector<16x16xf32>
    %116 = tpu.matmul %113, %115, %cst_90 {dimension_numbers = #tpu.dot_dimension_numbers<[1], [0], [0], [1], [0, 0, 1, 1], [], []>} : vector<16x1xbf16>, vector<1x16xbf16>, vector<16x16xf32> -> vector<16x16xf32>
    %117 = arith.addf %108, %116 : vector<16x16xf32>
    %c1_i32_91 = arith.constant 1 : i32
    %118 = arith.addi %89, %c1_i32_91 : i32
    %c0_92 = arith.constant 0 : index
    %119 = arith.index_cast %118 : i32 to index
    %c0_93 = arith.constant 0 : index
    %c0_94 = arith.constant 0 : index
    %120 = vector.load %arg2[%c0_92, %119, %c0_93, %c0_94] : memref<1x18x18x1xf32, #tpu.memory_space<vmem>>, vector<1x1x16x1xf32>
    %121 = vector.shape_cast %120 : vector<1x1x16x1xf32> to vector<16x1xf32>
    %122 = arith.truncf %121 : vector<16x1xf32> to vector<16x1xbf16>
    %c3_95 = arith.constant 3 : index
    %c0_96 = arith.constant 0 : index
    %c0_97 = arith.constant 0 : index
    %123 = vector.load %arg3[%c3_95, %c0_96, %c0_97] : memref<9x1x16xbf16, #tpu.memory_space<vmem>>, vector<1x1x16xbf16>
    %124 = vector.shape_cast %123 : vector<1x1x16xbf16> to vector<1x16xbf16>
    %cst_98 = arith.constant dense<0.000000e+00> : vector<16x16xf32>
    %125 = tpu.matmul %122, %124, %cst_98 {dimension_numbers = #tpu.dot_dimension_numbers<[1], [0], [0], [1], [0, 0, 1, 1], [], []>} : vector<16x1xbf16>, vector<1x16xbf16>, vector<16x16xf32> -> vector<16x16xf32>
    %126 = arith.addf %117, %125 : vector<16x16xf32>
    %c1_i32_99 = arith.constant 1 : i32
    %127 = arith.addi %89, %c1_i32_99 : i32
    %c0_100 = arith.constant 0 : index
    %128 = arith.index_cast %127 : i32 to index
    %c1_101 = arith.constant 1 : index
    %c0_102 = arith.constant 0 : index
    %129 = vector.load %arg2[%c0_100, %128, %c1_101, %c0_102] : memref<1x18x18x1xf32, #tpu.memory_space<vmem>>, vector<1x1x16x1xf32>
    %130 = vector.shape_cast %129 : vector<1x1x16x1xf32> to vector<16x1xf32>
    %131 = arith.truncf %130 : vector<16x1xf32> to vector<16x1xbf16>
    %c4_103 = arith.constant 4 : index
    %c0_104 = arith.constant 0 : index
    %c0_105 = arith.constant 0 : index
    %132 = vector.load %arg3[%c4_103, %c0_104, %c0_105] : memref<9x1x16xbf16, #tpu.memory_space<vmem>>, vector<1x1x16xbf16>
    %133 = vector.shape_cast %132 : vector<1x1x16xbf16> to vector<1x16xbf16>
    %cst_106 = arith.constant dense<0.000000e+00> : vector<16x16xf32>
    %134 = tpu.matmul %131, %133, %cst_106 {dimension_numbers = #tpu.dot_dimension_numbers<[1], [0], [0], [1], [0, 0, 1, 1], [], []>} : vector<16x1xbf16>, vector<1x16xbf16>, vector<16x16xf32> -> vector<16x16xf32>
    %135 = arith.addf %126, %134 : vector<16x16xf32>
    %c1_i32_107 = arith.constant 1 : i32
    %136 = arith.addi %89, %c1_i32_107 : i32
    %c0_108 = arith.constant 0 : index
    %137 = arith.index_cast %136 : i32 to index
    %c2_109 = arith.constant 2 : index
    %c0_110 = arith.constant 0 : index
    %138 = vector.load %arg2[%c0_108, %137, %c2_109, %c0_110] : memref<1x18x18x1xf32, #tpu.memory_space<vmem>>, vector<1x1x16x1xf32>
    %139 = vector.shape_cast %138 : vector<1x1x16x1xf32> to vector<16x1xf32>
    %140 = arith.truncf %139 : vector<16x1xf32> to vector<16x1xbf16>
    %c5_111 = arith.constant 5 : index
    %c0_112 = arith.constant 0 : index
    %c0_113 = arith.constant 0 : index
    %141 = vector.load %arg3[%c5_111, %c0_112, %c0_113] : memref<9x1x16xbf16, #tpu.memory_space<vmem>>, vector<1x1x16xbf16>
    %142 = vector.shape_cast %141 : vector<1x1x16xbf16> to vector<1x16xbf16>
    %cst_114 = arith.constant dense<0.000000e+00> : vector<16x16xf32>
    %143 = tpu.matmul %140, %142, %cst_114 {dimension_numbers = #tpu.dot_dimension_numbers<[1], [0], [0], [1], [0, 0, 1, 1], [], []>} : vector<16x1xbf16>, vector<1x16xbf16>, vector<16x16xf32> -> vector<16x16xf32>
    %144 = arith.addf %135, %143 : vector<16x16xf32>
    %c2_i32_115 = arith.constant 2 : i32
    %145 = arith.addi %89, %c2_i32_115 : i32
    %c0_116 = arith.constant 0 : index
    %146 = arith.index_cast %145 : i32 to index
    %c0_117 = arith.constant 0 : index
    %c0_118 = arith.constant 0 : index
    %147 = vector.load %arg2[%c0_116, %146, %c0_117, %c0_118] : memref<1x18x18x1xf32, #tpu.memory_space<vmem>>, vector<1x1x16x1xf32>
    %148 = vector.shape_cast %147 : vector<1x1x16x1xf32> to vector<16x1xf32>
    %149 = arith.truncf %148 : vector<16x1xf32> to vector<16x1xbf16>
    %c6_119 = arith.constant 6 : index
    %c0_120 = arith.constant 0 : index
    %c0_121 = arith.constant 0 : index
    %150 = vector.load %arg3[%c6_119, %c0_120, %c0_121] : memref<9x1x16xbf16, #tpu.memory_space<vmem>>, vector<1x1x16xbf16>
    %151 = vector.shape_cast %150 : vector<1x1x16xbf16> to vector<1x16xbf16>
    %cst_122 = arith.constant dense<0.000000e+00> : vector<16x16xf32>
    %152 = tpu.matmul %149, %151, %cst_122 {dimension_numbers = #tpu.dot_dimension_numbers<[1], [0], [0], [1], [0, 0, 1, 1], [], []>} : vector<16x1xbf16>, vector<1x16xbf16>, vector<16x16xf32> -> vector<16x16xf32>
    %153 = arith.addf %144, %152 : vector<16x16xf32>
    %c2_i32_123 = arith.constant 2 : i32
    %154 = arith.addi %89, %c2_i32_123 : i32
    %c0_124 = arith.constant 0 : index
    %155 = arith.index_cast %154 : i32 to index
    %c1_125 = arith.constant 1 : index
    %c0_126 = arith.constant 0 : index
    %156 = vector.load %arg2[%c0_124, %155, %c1_125, %c0_126] : memref<1x18x18x1xf32, #tpu.memory_space<vmem>>, vector<1x1x16x1xf32>
    %157 = vector.shape_cast %156 : vector<1x1x16x1xf32> to vector<16x1xf32>
    %158 = arith.truncf %157 : vector<16x1xf32> to vector<16x1xbf16>
    %c7_127 = arith.constant 7 : index
    %c0_128 = arith.constant 0 : index
    %c0_129 = arith.constant 0 : index
    %159 = vector.load %arg3[%c7_127, %c0_128, %c0_129] : memref<9x1x16xbf16, #tpu.memory_space<vmem>>, vector<1x1x16xbf16>
    %160 = vector.shape_cast %159 : vector<1x1x16xbf16> to vector<1x16xbf16>
    %cst_130 = arith.constant dense<0.000000e+00> : vector<16x16xf32>
    %161 = tpu.matmul %158, %160, %cst_130 {dimension_numbers = #tpu.dot_dimension_numbers<[1], [0], [0], [1], [0, 0, 1, 1], [], []>} : vector<16x1xbf16>, vector<1x16xbf16>, vector<16x16xf32> -> vector<16x16xf32>
    %162 = arith.addf %153, %161 : vector<16x16xf32>
    %c2_i32_131 = arith.constant 2 : i32
    %163 = arith.addi %89, %c2_i32_131 : i32
    %c0_132 = arith.constant 0 : index
    %164 = arith.index_cast %163 : i32 to index
    %c2_133 = arith.constant 2 : index
    %c0_134 = arith.constant 0 : index
    %165 = vector.load %arg2[%c0_132, %164, %c2_133, %c0_134] : memref<1x18x18x1xf32, #tpu.memory_space<vmem>>, vector<1x1x16x1xf32>
    %166 = vector.shape_cast %165 : vector<1x1x16x1xf32> to vector<16x1xf32>
    %167 = arith.truncf %166 : vector<16x1xf32> to vector<16x1xbf16>
    %c8_135 = arith.constant 8 : index
    %c0_136 = arith.constant 0 : index
    %c0_137 = arith.constant 0 : index
    %168 = vector.load %arg3[%c8_135, %c0_136, %c0_137] : memref<9x1x16xbf16, #tpu.memory_space<vmem>>, vector<1x1x16xbf16>
    %169 = vector.shape_cast %168 : vector<1x1x16xbf16> to vector<1x16xbf16>
    %cst_138 = arith.constant dense<0.000000e+00> : vector<16x16xf32>
    %170 = tpu.matmul %167, %169, %cst_138 {dimension_numbers = #tpu.dot_dimension_numbers<[1], [0], [0], [1], [0, 0, 1, 1], [], []>} : vector<16x1xbf16>, vector<1x16xbf16>, vector<16x16xf32> -> vector<16x16xf32>
    %171 = arith.addf %162, %170 : vector<16x16xf32>
    %172 = vector.broadcast %0 : vector<1x16xf32> to vector<16x16xf32>
    %173 = arith.addf %171, %172 : vector<16x16xf32>
    %cst_139 = arith.constant 0.000000e+00 : f32
    %174 = vector.broadcast %cst_139 : f32 to vector<16x16xf32>
    %175 = arith.maximumf %173, %174 : vector<16x16xf32>
    %176 = arith.maximumf %87, %175 : vector<16x16xf32>
    %c0_140 = arith.constant 0 : index
    %c0_141 = arith.constant 0 : index
    %177 = vector.load %arg6[%c0_140, %c0_141] : memref<16x16xf32, #tpu.memory_space<vmem>>, vector<16x16xf32>
    tpu.vector_store %arg6[%c0_140, %c0_141], %176 {strides = array<i32>} : memref<16x16xf32, #tpu.memory_space<vmem>>, vector<16x16xf32>,
    %c0_142 = arith.constant 0 : index
    %c0_143 = arith.constant 0 : index
    %178 = tpu.strided_load %arg6[%c0_142, %c0_143] {strides = array<i32: 2, 1>} : memref<16x16xf32, #tpu.memory_space<vmem>>, vector<8x16xf32>
    %c1_144 = arith.constant 1 : index
    %c0_145 = arith.constant 0 : index
    %179 = tpu.strided_load %arg6[%c1_144, %c0_145] {strides = array<i32: 2, 1>} : memref<16x16xf32, #tpu.memory_space<vmem>>, vector<8x16xf32>
    %180 = arith.maximumf %178, %179 : vector<8x16xf32>
    %c0_146 = arith.constant 0 : index
    %c0_147 = arith.constant 0 : index
    %c0_148 = arith.constant 0 : index
    %c0_149 = arith.constant 0 : index
    %181 = vector.load %arg5[%c0_146, %c0_147, %c0_148, %c0_149] : memref<1x1x8x16xf32, #tpu.memory_space<vmem>>, vector<1x1x8x16xf32>
    %182 = vector.shape_cast %181 : vector<1x1x8x16xf32> to vector<8x16xf32>
    %183 = vector.shape_cast %180 : vector<8x16xf32> to vector<1x1x8x16xf32>
    tpu.vector_store %arg5[%c0_146, %c0_147, %c0_148, %c0_149], %183 {strides = array<i32>} : memref<1x1x8x16xf32, #tpu.memory_space<vmem>>, vector<1x1x8x16xf32>,
    return
  }
  func.func @transform_0(%arg0: i32, %arg1: i32) -> (i32, i32, i32, i32) {
    %c0_i32 = arith.constant 0 : i32
    %c0_i32_0 = arith.constant 0 : i32
    %c0_i32_1 = arith.constant 0 : i32
    %c0_i32_2 = arith.constant 0 : i32
    return %arg0, %c0_i32, %c0_i32_0, %c0_i32_1 : i32, i32, i32, i32
  }
  func.func @transform_1(%arg0: i32, %arg1: i32) -> (i32, i32, i32) {
    %c0_i32 = arith.constant 0 : i32
    %c0_i32_0 = arith.constant 0 : i32
    %c0_i32_1 = arith.constant 0 : i32
    %c0_i32_2 = arith.constant 0 : i32
    return %c0_i32, %c0_i32_0, %c0_i32_1 : i32, i32, i32
  }
  func.func @transform_2(%arg0: i32, %arg1: i32) -> (i32, i32) {
    %c0_i32 = arith.constant 0 : i32
    %c0_i32_0 = arith.constant 0 : i32
    %c0_i32_1 = arith.constant 0 : i32
    return %c0_i32, %c0_i32_0 : i32, i32
  }
  func.func @transform_3(%arg0: i32, %arg1: i32) -> (i32, i32, i32, i32) {
    %c0_i32 = arith.constant 0 : i32
    %c0_i32_0 = arith.constant 0 : i32
    %c0_i32_1 = arith.constant 0 : i32
    return %arg0, %arg1, %c0_i32, %c0_i32_0 : i32, i32, i32, i32
  }
}

module attributes {stable_mosaic.version = 11 : i64} {
  func.func @_conv_relu_pool_kernel(%arg0: i32, %arg1: i32, %arg2: memref<1x10x10x16xf32, #tpu.memory_space<vmem>>, %arg3: memref<9x16x32xbf16, #tpu.memory_space<vmem>>, %arg4: memref<1x32xf32, #tpu.memory_space<vmem>>, %arg5: memref<1x1x4x32xf32, #tpu.memory_space<vmem>>, %arg6: memref<8x32xf32, #tpu.memory_space<vmem>>) attributes {dimension_semantics = [#tpu.dimension_semantics<parallel>, #tpu.dimension_semantics<parallel>], iteration_bounds = array<i64: 2, 4>, scalar_prefetch = 0 : i64, scratch_operands = 1 : i64, tpu.core_type = #tpu.core_type<tc>, window_params = [{transform_indices = @transform_0, window_bounds = array<i64: 1, 10, 10, 16>}, {pipeline_mode = #tpu.pipeline_mode<synchronous>, transform_indices = @transform_1, window_bounds = array<i64: 9, 16, 32>}, {pipeline_mode = #tpu.pipeline_mode<synchronous>, transform_indices = @transform_2, window_bounds = array<i64: 1, 32>}, {transform_indices = @transform_3, window_bounds = array<i64: 1, 1, 4, 32>}]} {
    %c0 = arith.constant 0 : index
    %c0_0 = arith.constant 0 : index
    %0 = vector.load %arg4[%c0, %c0_0] : memref<1x32xf32, #tpu.memory_space<vmem>>, vector<1x32xf32>
    %c2_i32 = arith.constant 2 : i32
    %1 = arith.muli %c2_i32, %arg1 : i32
    %cst = arith.constant 0.000000e+00 : f32
    %2 = vector.broadcast %cst : f32 to vector<8x32xf32>
    %c0_i32 = arith.constant 0 : i32
    %3 = arith.addi %1, %c0_i32 : i32
    %c0_1 = arith.constant 0 : index
    %4 = arith.index_cast %3 : i32 to index
    %c0_2 = arith.constant 0 : index
    %c0_3 = arith.constant 0 : index
    %5 = vector.load %arg2[%c0_1, %4, %c0_2, %c0_3] : memref<1x10x10x16xf32, #tpu.memory_space<vmem>>, vector<1x1x8x16xf32>
    %6 = vector.shape_cast %5 : vector<1x1x8x16xf32> to vector<8x16xf32>
    %7 = arith.truncf %6 : vector<8x16xf32> to vector<8x16xbf16>
    %c0_4 = arith.constant 0 : index
    %c0_5 = arith.constant 0 : index
    %c0_6 = arith.constant 0 : index
    %8 = vector.load %arg3[%c0_4, %c0_5, %c0_6] : memref<9x16x32xbf16, #tpu.memory_space<vmem>>, vector<1x16x32xbf16>
    %9 = vector.shape_cast %8 : vector<1x16x32xbf16> to vector<16x32xbf16>
    %cst_7 = arith.constant dense<0.000000e+00> : vector<8x32xf32>
    %10 = tpu.matmul %7, %9, %cst_7 {dimension_numbers = #tpu.dot_dimension_numbers<[1], [0], [0], [1], [0, 0, 1, 1], [], []>} : vector<8x16xbf16>, vector<16x32xbf16>, vector<8x32xf32> -> vector<8x32xf32>
    %11 = arith.addf %2, %10 : vector<8x32xf32>
    %c0_i32_8 = arith.constant 0 : i32
    %12 = arith.addi %1, %c0_i32_8 : i32
    %c0_9 = arith.constant 0 : index
    %13 = arith.index_cast %12 : i32 to index
    %c1 = arith.constant 1 : index
    %c0_10 = arith.constant 0 : index
    %14 = vector.load %arg2[%c0_9, %13, %c1, %c0_10] : memref<1x10x10x16xf32, #tpu.memory_space<vmem>>, vector<1x1x8x16xf32>
    %15 = vector.shape_cast %14 : vector<1x1x8x16xf32> to vector<8x16xf32>
    %16 = arith.truncf %15 : vector<8x16xf32> to vector<8x16xbf16>
    %c1_11 = arith.constant 1 : index
    %c0_12 = arith.constant 0 : index
    %c0_13 = arith.constant 0 : index
    %17 = vector.load %arg3[%c1_11, %c0_12, %c0_13] : memref<9x16x32xbf16, #tpu.memory_space<vmem>>, vector<1x16x32xbf16>
    %18 = vector.shape_cast %17 : vector<1x16x32xbf16> to vector<16x32xbf16>
    %cst_14 = arith.constant dense<0.000000e+00> : vector<8x32xf32>
    %19 = tpu.matmul %16, %18, %cst_14 {dimension_numbers = #tpu.dot_dimension_numbers<[1], [0], [0], [1], [0, 0, 1, 1], [], []>} : vector<8x16xbf16>, vector<16x32xbf16>, vector<8x32xf32> -> vector<8x32xf32>
    %20 = arith.addf %11, %19 : vector<8x32xf32>
    %c0_i32_15 = arith.constant 0 : i32
    %21 = arith.addi %1, %c0_i32_15 : i32
    %c0_16 = arith.constant 0 : index
    %22 = arith.index_cast %21 : i32 to index
    %c2 = arith.constant 2 : index
    %c0_17 = arith.constant 0 : index
    %23 = vector.load %arg2[%c0_16, %22, %c2, %c0_17] : memref<1x10x10x16xf32, #tpu.memory_space<vmem>>, vector<1x1x8x16xf32>
    %24 = vector.shape_cast %23 : vector<1x1x8x16xf32> to vector<8x16xf32>
    %25 = arith.truncf %24 : vector<8x16xf32> to vector<8x16xbf16>
    %c2_18 = arith.constant 2 : index
    %c0_19 = arith.constant 0 : index
    %c0_20 = arith.constant 0 : index
    %26 = vector.load %arg3[%c2_18, %c0_19, %c0_20] : memref<9x16x32xbf16, #tpu.memory_space<vmem>>, vector<1x16x32xbf16>
    %27 = vector.shape_cast %26 : vector<1x16x32xbf16> to vector<16x32xbf16>
    %cst_21 = arith.constant dense<0.000000e+00> : vector<8x32xf32>
    %28 = tpu.matmul %25, %27, %cst_21 {dimension_numbers = #tpu.dot_dimension_numbers<[1], [0], [0], [1], [0, 0, 1, 1], [], []>} : vector<8x16xbf16>, vector<16x32xbf16>, vector<8x32xf32> -> vector<8x32xf32>
    %29 = arith.addf %20, %28 : vector<8x32xf32>
    %c1_i32 = arith.constant 1 : i32
    %30 = arith.addi %1, %c1_i32 : i32
    %c0_22 = arith.constant 0 : index
    %31 = arith.index_cast %30 : i32 to index
    %c0_23 = arith.constant 0 : index
    %c0_24 = arith.constant 0 : index
    %32 = vector.load %arg2[%c0_22, %31, %c0_23, %c0_24] : memref<1x10x10x16xf32, #tpu.memory_space<vmem>>, vector<1x1x8x16xf32>
    %33 = vector.shape_cast %32 : vector<1x1x8x16xf32> to vector<8x16xf32>
    %34 = arith.truncf %33 : vector<8x16xf32> to vector<8x16xbf16>
    %c3 = arith.constant 3 : index
    %c0_25 = arith.constant 0 : index
    %c0_26 = arith.constant 0 : index
    %35 = vector.load %arg3[%c3, %c0_25, %c0_26] : memref<9x16x32xbf16, #tpu.memory_space<vmem>>, vector<1x16x32xbf16>
    %36 = vector.shape_cast %35 : vector<1x16x32xbf16> to vector<16x32xbf16>
    %cst_27 = arith.constant dense<0.000000e+00> : vector<8x32xf32>
    %37 = tpu.matmul %34, %36, %cst_27 {dimension_numbers = #tpu.dot_dimension_numbers<[1], [0], [0], [1], [0, 0, 1, 1], [], []>} : vector<8x16xbf16>, vector<16x32xbf16>, vector<8x32xf32> -> vector<8x32xf32>
    %38 = arith.addf %29, %37 : vector<8x32xf32>
    %c1_i32_28 = arith.constant 1 : i32
    %39 = arith.addi %1, %c1_i32_28 : i32
    %c0_29 = arith.constant 0 : index
    %40 = arith.index_cast %39 : i32 to index
    %c1_30 = arith.constant 1 : index
    %c0_31 = arith.constant 0 : index
    %41 = vector.load %arg2[%c0_29, %40, %c1_30, %c0_31] : memref<1x10x10x16xf32, #tpu.memory_space<vmem>>, vector<1x1x8x16xf32>
    %42 = vector.shape_cast %41 : vector<1x1x8x16xf32> to vector<8x16xf32>
    %43 = arith.truncf %42 : vector<8x16xf32> to vector<8x16xbf16>
    %c4 = arith.constant 4 : index
    %c0_32 = arith.constant 0 : index
    %c0_33 = arith.constant 0 : index
    %44 = vector.load %arg3[%c4, %c0_32, %c0_33] : memref<9x16x32xbf16, #tpu.memory_space<vmem>>, vector<1x16x32xbf16>
    %45 = vector.shape_cast %44 : vector<1x16x32xbf16> to vector<16x32xbf16>
    %cst_34 = arith.constant dense<0.000000e+00> : vector<8x32xf32>
    %46 = tpu.matmul %43, %45, %cst_34 {dimension_numbers = #tpu.dot_dimension_numbers<[1], [0], [0], [1], [0, 0, 1, 1], [], []>} : vector<8x16xbf16>, vector<16x32xbf16>, vector<8x32xf32> -> vector<8x32xf32>
    %47 = arith.addf %38, %46 : vector<8x32xf32>
    %c1_i32_35 = arith.constant 1 : i32
    %48 = arith.addi %1, %c1_i32_35 : i32
    %c0_36 = arith.constant 0 : index
    %49 = arith.index_cast %48 : i32 to index
    %c2_37 = arith.constant 2 : index
    %c0_38 = arith.constant 0 : index
    %50 = vector.load %arg2[%c0_36, %49, %c2_37, %c0_38] : memref<1x10x10x16xf32, #tpu.memory_space<vmem>>, vector<1x1x8x16xf32>
    %51 = vector.shape_cast %50 : vector<1x1x8x16xf32> to vector<8x16xf32>
    %52 = arith.truncf %51 : vector<8x16xf32> to vector<8x16xbf16>
    %c5 = arith.constant 5 : index
    %c0_39 = arith.constant 0 : index
    %c0_40 = arith.constant 0 : index
    %53 = vector.load %arg3[%c5, %c0_39, %c0_40] : memref<9x16x32xbf16, #tpu.memory_space<vmem>>, vector<1x16x32xbf16>
    %54 = vector.shape_cast %53 : vector<1x16x32xbf16> to vector<16x32xbf16>
    %cst_41 = arith.constant dense<0.000000e+00> : vector<8x32xf32>
    %55 = tpu.matmul %52, %54, %cst_41 {dimension_numbers = #tpu.dot_dimension_numbers<[1], [0], [0], [1], [0, 0, 1, 1], [], []>} : vector<8x16xbf16>, vector<16x32xbf16>, vector<8x32xf32> -> vector<8x32xf32>
    %56 = arith.addf %47, %55 : vector<8x32xf32>
    %c2_i32_42 = arith.constant 2 : i32
    %57 = arith.addi %1, %c2_i32_42 : i32
    %c0_43 = arith.constant 0 : index
    %58 = arith.index_cast %57 : i32 to index
    %c0_44 = arith.constant 0 : index
    %c0_45 = arith.constant 0 : index
    %59 = vector.load %arg2[%c0_43, %58, %c0_44, %c0_45] : memref<1x10x10x16xf32, #tpu.memory_space<vmem>>, vector<1x1x8x16xf32>
    %60 = vector.shape_cast %59 : vector<1x1x8x16xf32> to vector<8x16xf32>
    %61 = arith.truncf %60 : vector<8x16xf32> to vector<8x16xbf16>
    %c6 = arith.constant 6 : index
    %c0_46 = arith.constant 0 : index
    %c0_47 = arith.constant 0 : index
    %62 = vector.load %arg3[%c6, %c0_46, %c0_47] : memref<9x16x32xbf16, #tpu.memory_space<vmem>>, vector<1x16x32xbf16>
    %63 = vector.shape_cast %62 : vector<1x16x32xbf16> to vector<16x32xbf16>
    %cst_48 = arith.constant dense<0.000000e+00> : vector<8x32xf32>
    %64 = tpu.matmul %61, %63, %cst_48 {dimension_numbers = #tpu.dot_dimension_numbers<[1], [0], [0], [1], [0, 0, 1, 1], [], []>} : vector<8x16xbf16>, vector<16x32xbf16>, vector<8x32xf32> -> vector<8x32xf32>
    %65 = arith.addf %56, %64 : vector<8x32xf32>
    %c2_i32_49 = arith.constant 2 : i32
    %66 = arith.addi %1, %c2_i32_49 : i32
    %c0_50 = arith.constant 0 : index
    %67 = arith.index_cast %66 : i32 to index
    %c1_51 = arith.constant 1 : index
    %c0_52 = arith.constant 0 : index
    %68 = vector.load %arg2[%c0_50, %67, %c1_51, %c0_52] : memref<1x10x10x16xf32, #tpu.memory_space<vmem>>, vector<1x1x8x16xf32>
    %69 = vector.shape_cast %68 : vector<1x1x8x16xf32> to vector<8x16xf32>
    %70 = arith.truncf %69 : vector<8x16xf32> to vector<8x16xbf16>
    %c7 = arith.constant 7 : index
    %c0_53 = arith.constant 0 : index
    %c0_54 = arith.constant 0 : index
    %71 = vector.load %arg3[%c7, %c0_53, %c0_54] : memref<9x16x32xbf16, #tpu.memory_space<vmem>>, vector<1x16x32xbf16>
    %72 = vector.shape_cast %71 : vector<1x16x32xbf16> to vector<16x32xbf16>
    %cst_55 = arith.constant dense<0.000000e+00> : vector<8x32xf32>
    %73 = tpu.matmul %70, %72, %cst_55 {dimension_numbers = #tpu.dot_dimension_numbers<[1], [0], [0], [1], [0, 0, 1, 1], [], []>} : vector<8x16xbf16>, vector<16x32xbf16>, vector<8x32xf32> -> vector<8x32xf32>
    %74 = arith.addf %65, %73 : vector<8x32xf32>
    %c2_i32_56 = arith.constant 2 : i32
    %75 = arith.addi %1, %c2_i32_56 : i32
    %c0_57 = arith.constant 0 : index
    %76 = arith.index_cast %75 : i32 to index
    %c2_58 = arith.constant 2 : index
    %c0_59 = arith.constant 0 : index
    %77 = vector.load %arg2[%c0_57, %76, %c2_58, %c0_59] : memref<1x10x10x16xf32, #tpu.memory_space<vmem>>, vector<1x1x8x16xf32>
    %78 = vector.shape_cast %77 : vector<1x1x8x16xf32> to vector<8x16xf32>
    %79 = arith.truncf %78 : vector<8x16xf32> to vector<8x16xbf16>
    %c8 = arith.constant 8 : index
    %c0_60 = arith.constant 0 : index
    %c0_61 = arith.constant 0 : index
    %80 = vector.load %arg3[%c8, %c0_60, %c0_61] : memref<9x16x32xbf16, #tpu.memory_space<vmem>>, vector<1x16x32xbf16>
    %81 = vector.shape_cast %80 : vector<1x16x32xbf16> to vector<16x32xbf16>
    %cst_62 = arith.constant dense<0.000000e+00> : vector<8x32xf32>
    %82 = tpu.matmul %79, %81, %cst_62 {dimension_numbers = #tpu.dot_dimension_numbers<[1], [0], [0], [1], [0, 0, 1, 1], [], []>} : vector<8x16xbf16>, vector<16x32xbf16>, vector<8x32xf32> -> vector<8x32xf32>
    %83 = arith.addf %74, %82 : vector<8x32xf32>
    %84 = vector.broadcast %0 : vector<1x32xf32> to vector<8x32xf32>
    %85 = arith.addf %83, %84 : vector<8x32xf32>
    %cst_63 = arith.constant 0.000000e+00 : f32
    %86 = vector.broadcast %cst_63 : f32 to vector<8x32xf32>
    %87 = arith.maximumf %85, %86 : vector<8x32xf32>
    %c2_i32_64 = arith.constant 2 : i32
    %88 = arith.muli %c2_i32_64, %arg1 : i32
    %c1_i32_65 = arith.constant 1 : i32
    %89 = arith.addi %88, %c1_i32_65 : i32
    %cst_66 = arith.constant 0.000000e+00 : f32
    %90 = vector.broadcast %cst_66 : f32 to vector<8x32xf32>
    %c0_i32_67 = arith.constant 0 : i32
    %91 = arith.addi %89, %c0_i32_67 : i32
    %c0_68 = arith.constant 0 : index
    %92 = arith.index_cast %91 : i32 to index
    %c0_69 = arith.constant 0 : index
    %c0_70 = arith.constant 0 : index
    %93 = vector.load %arg2[%c0_68, %92, %c0_69, %c0_70] : memref<1x10x10x16xf32, #tpu.memory_space<vmem>>, vector<1x1x8x16xf32>
    %94 = vector.shape_cast %93 : vector<1x1x8x16xf32> to vector<8x16xf32>
    %95 = arith.truncf %94 : vector<8x16xf32> to vector<8x16xbf16>
    %c0_71 = arith.constant 0 : index
    %c0_72 = arith.constant 0 : index
    %c0_73 = arith.constant 0 : index
    %96 = vector.load %arg3[%c0_71, %c0_72, %c0_73] : memref<9x16x32xbf16, #tpu.memory_space<vmem>>, vector<1x16x32xbf16>
    %97 = vector.shape_cast %96 : vector<1x16x32xbf16> to vector<16x32xbf16>
    %cst_74 = arith.constant dense<0.000000e+00> : vector<8x32xf32>
    %98 = tpu.matmul %95, %97, %cst_74 {dimension_numbers = #tpu.dot_dimension_numbers<[1], [0], [0], [1], [0, 0, 1, 1], [], []>} : vector<8x16xbf16>, vector<16x32xbf16>, vector<8x32xf32> -> vector<8x32xf32>
    %99 = arith.addf %90, %98 : vector<8x32xf32>
    %c0_i32_75 = arith.constant 0 : i32
    %100 = arith.addi %89, %c0_i32_75 : i32
    %c0_76 = arith.constant 0 : index
    %101 = arith.index_cast %100 : i32 to index
    %c1_77 = arith.constant 1 : index
    %c0_78 = arith.constant 0 : index
    %102 = vector.load %arg2[%c0_76, %101, %c1_77, %c0_78] : memref<1x10x10x16xf32, #tpu.memory_space<vmem>>, vector<1x1x8x16xf32>
    %103 = vector.shape_cast %102 : vector<1x1x8x16xf32> to vector<8x16xf32>
    %104 = arith.truncf %103 : vector<8x16xf32> to vector<8x16xbf16>
    %c1_79 = arith.constant 1 : index
    %c0_80 = arith.constant 0 : index
    %c0_81 = arith.constant 0 : index
    %105 = vector.load %arg3[%c1_79, %c0_80, %c0_81] : memref<9x16x32xbf16, #tpu.memory_space<vmem>>, vector<1x16x32xbf16>
    %106 = vector.shape_cast %105 : vector<1x16x32xbf16> to vector<16x32xbf16>
    %cst_82 = arith.constant dense<0.000000e+00> : vector<8x32xf32>
    %107 = tpu.matmul %104, %106, %cst_82 {dimension_numbers = #tpu.dot_dimension_numbers<[1], [0], [0], [1], [0, 0, 1, 1], [], []>} : vector<8x16xbf16>, vector<16x32xbf16>, vector<8x32xf32> -> vector<8x32xf32>
    %108 = arith.addf %99, %107 : vector<8x32xf32>
    %c0_i32_83 = arith.constant 0 : i32
    %109 = arith.addi %89, %c0_i32_83 : i32
    %c0_84 = arith.constant 0 : index
    %110 = arith.index_cast %109 : i32 to index
    %c2_85 = arith.constant 2 : index
    %c0_86 = arith.constant 0 : index
    %111 = vector.load %arg2[%c0_84, %110, %c2_85, %c0_86] : memref<1x10x10x16xf32, #tpu.memory_space<vmem>>, vector<1x1x8x16xf32>
    %112 = vector.shape_cast %111 : vector<1x1x8x16xf32> to vector<8x16xf32>
    %113 = arith.truncf %112 : vector<8x16xf32> to vector<8x16xbf16>
    %c2_87 = arith.constant 2 : index
    %c0_88 = arith.constant 0 : index
    %c0_89 = arith.constant 0 : index
    %114 = vector.load %arg3[%c2_87, %c0_88, %c0_89] : memref<9x16x32xbf16, #tpu.memory_space<vmem>>, vector<1x16x32xbf16>
    %115 = vector.shape_cast %114 : vector<1x16x32xbf16> to vector<16x32xbf16>
    %cst_90 = arith.constant dense<0.000000e+00> : vector<8x32xf32>
    %116 = tpu.matmul %113, %115, %cst_90 {dimension_numbers = #tpu.dot_dimension_numbers<[1], [0], [0], [1], [0, 0, 1, 1], [], []>} : vector<8x16xbf16>, vector<16x32xbf16>, vector<8x32xf32> -> vector<8x32xf32>
    %117 = arith.addf %108, %116 : vector<8x32xf32>
    %c1_i32_91 = arith.constant 1 : i32
    %118 = arith.addi %89, %c1_i32_91 : i32
    %c0_92 = arith.constant 0 : index
    %119 = arith.index_cast %118 : i32 to index
    %c0_93 = arith.constant 0 : index
    %c0_94 = arith.constant 0 : index
    %120 = vector.load %arg2[%c0_92, %119, %c0_93, %c0_94] : memref<1x10x10x16xf32, #tpu.memory_space<vmem>>, vector<1x1x8x16xf32>
    %121 = vector.shape_cast %120 : vector<1x1x8x16xf32> to vector<8x16xf32>
    %122 = arith.truncf %121 : vector<8x16xf32> to vector<8x16xbf16>
    %c3_95 = arith.constant 3 : index
    %c0_96 = arith.constant 0 : index
    %c0_97 = arith.constant 0 : index
    %123 = vector.load %arg3[%c3_95, %c0_96, %c0_97] : memref<9x16x32xbf16, #tpu.memory_space<vmem>>, vector<1x16x32xbf16>
    %124 = vector.shape_cast %123 : vector<1x16x32xbf16> to vector<16x32xbf16>
    %cst_98 = arith.constant dense<0.000000e+00> : vector<8x32xf32>
    %125 = tpu.matmul %122, %124, %cst_98 {dimension_numbers = #tpu.dot_dimension_numbers<[1], [0], [0], [1], [0, 0, 1, 1], [], []>} : vector<8x16xbf16>, vector<16x32xbf16>, vector<8x32xf32> -> vector<8x32xf32>
    %126 = arith.addf %117, %125 : vector<8x32xf32>
    %c1_i32_99 = arith.constant 1 : i32
    %127 = arith.addi %89, %c1_i32_99 : i32
    %c0_100 = arith.constant 0 : index
    %128 = arith.index_cast %127 : i32 to index
    %c1_101 = arith.constant 1 : index
    %c0_102 = arith.constant 0 : index
    %129 = vector.load %arg2[%c0_100, %128, %c1_101, %c0_102] : memref<1x10x10x16xf32, #tpu.memory_space<vmem>>, vector<1x1x8x16xf32>
    %130 = vector.shape_cast %129 : vector<1x1x8x16xf32> to vector<8x16xf32>
    %131 = arith.truncf %130 : vector<8x16xf32> to vector<8x16xbf16>
    %c4_103 = arith.constant 4 : index
    %c0_104 = arith.constant 0 : index
    %c0_105 = arith.constant 0 : index
    %132 = vector.load %arg3[%c4_103, %c0_104, %c0_105] : memref<9x16x32xbf16, #tpu.memory_space<vmem>>, vector<1x16x32xbf16>
    %133 = vector.shape_cast %132 : vector<1x16x32xbf16> to vector<16x32xbf16>
    %cst_106 = arith.constant dense<0.000000e+00> : vector<8x32xf32>
    %134 = tpu.matmul %131, %133, %cst_106 {dimension_numbers = #tpu.dot_dimension_numbers<[1], [0], [0], [1], [0, 0, 1, 1], [], []>} : vector<8x16xbf16>, vector<16x32xbf16>, vector<8x32xf32> -> vector<8x32xf32>
    %135 = arith.addf %126, %134 : vector<8x32xf32>
    %c1_i32_107 = arith.constant 1 : i32
    %136 = arith.addi %89, %c1_i32_107 : i32
    %c0_108 = arith.constant 0 : index
    %137 = arith.index_cast %136 : i32 to index
    %c2_109 = arith.constant 2 : index
    %c0_110 = arith.constant 0 : index
    %138 = vector.load %arg2[%c0_108, %137, %c2_109, %c0_110] : memref<1x10x10x16xf32, #tpu.memory_space<vmem>>, vector<1x1x8x16xf32>
    %139 = vector.shape_cast %138 : vector<1x1x8x16xf32> to vector<8x16xf32>
    %140 = arith.truncf %139 : vector<8x16xf32> to vector<8x16xbf16>
    %c5_111 = arith.constant 5 : index
    %c0_112 = arith.constant 0 : index
    %c0_113 = arith.constant 0 : index
    %141 = vector.load %arg3[%c5_111, %c0_112, %c0_113] : memref<9x16x32xbf16, #tpu.memory_space<vmem>>, vector<1x16x32xbf16>
    %142 = vector.shape_cast %141 : vector<1x16x32xbf16> to vector<16x32xbf16>
    %cst_114 = arith.constant dense<0.000000e+00> : vector<8x32xf32>
    %143 = tpu.matmul %140, %142, %cst_114 {dimension_numbers = #tpu.dot_dimension_numbers<[1], [0], [0], [1], [0, 0, 1, 1], [], []>} : vector<8x16xbf16>, vector<16x32xbf16>, vector<8x32xf32> -> vector<8x32xf32>
    %144 = arith.addf %135, %143 : vector<8x32xf32>
    %c2_i32_115 = arith.constant 2 : i32
    %145 = arith.addi %89, %c2_i32_115 : i32
    %c0_116 = arith.constant 0 : index
    %146 = arith.index_cast %145 : i32 to index
    %c0_117 = arith.constant 0 : index
    %c0_118 = arith.constant 0 : index
    %147 = vector.load %arg2[%c0_116, %146, %c0_117, %c0_118] : memref<1x10x10x16xf32, #tpu.memory_space<vmem>>, vector<1x1x8x16xf32>
    %148 = vector.shape_cast %147 : vector<1x1x8x16xf32> to vector<8x16xf32>
    %149 = arith.truncf %148 : vector<8x16xf32> to vector<8x16xbf16>
    %c6_119 = arith.constant 6 : index
    %c0_120 = arith.constant 0 : index
    %c0_121 = arith.constant 0 : index
    %150 = vector.load %arg3[%c6_119, %c0_120, %c0_121] : memref<9x16x32xbf16, #tpu.memory_space<vmem>>, vector<1x16x32xbf16>
    %151 = vector.shape_cast %150 : vector<1x16x32xbf16> to vector<16x32xbf16>
    %cst_122 = arith.constant dense<0.000000e+00> : vector<8x32xf32>
    %152 = tpu.matmul %149, %151, %cst_122 {dimension_numbers = #tpu.dot_dimension_numbers<[1], [0], [0], [1], [0, 0, 1, 1], [], []>} : vector<8x16xbf16>, vector<16x32xbf16>, vector<8x32xf32> -> vector<8x32xf32>
    %153 = arith.addf %144, %152 : vector<8x32xf32>
    %c2_i32_123 = arith.constant 2 : i32
    %154 = arith.addi %89, %c2_i32_123 : i32
    %c0_124 = arith.constant 0 : index
    %155 = arith.index_cast %154 : i32 to index
    %c1_125 = arith.constant 1 : index
    %c0_126 = arith.constant 0 : index
    %156 = vector.load %arg2[%c0_124, %155, %c1_125, %c0_126] : memref<1x10x10x16xf32, #tpu.memory_space<vmem>>, vector<1x1x8x16xf32>
    %157 = vector.shape_cast %156 : vector<1x1x8x16xf32> to vector<8x16xf32>
    %158 = arith.truncf %157 : vector<8x16xf32> to vector<8x16xbf16>
    %c7_127 = arith.constant 7 : index
    %c0_128 = arith.constant 0 : index
    %c0_129 = arith.constant 0 : index
    %159 = vector.load %arg3[%c7_127, %c0_128, %c0_129] : memref<9x16x32xbf16, #tpu.memory_space<vmem>>, vector<1x16x32xbf16>
    %160 = vector.shape_cast %159 : vector<1x16x32xbf16> to vector<16x32xbf16>
    %cst_130 = arith.constant dense<0.000000e+00> : vector<8x32xf32>
    %161 = tpu.matmul %158, %160, %cst_130 {dimension_numbers = #tpu.dot_dimension_numbers<[1], [0], [0], [1], [0, 0, 1, 1], [], []>} : vector<8x16xbf16>, vector<16x32xbf16>, vector<8x32xf32> -> vector<8x32xf32>
    %162 = arith.addf %153, %161 : vector<8x32xf32>
    %c2_i32_131 = arith.constant 2 : i32
    %163 = arith.addi %89, %c2_i32_131 : i32
    %c0_132 = arith.constant 0 : index
    %164 = arith.index_cast %163 : i32 to index
    %c2_133 = arith.constant 2 : index
    %c0_134 = arith.constant 0 : index
    %165 = vector.load %arg2[%c0_132, %164, %c2_133, %c0_134] : memref<1x10x10x16xf32, #tpu.memory_space<vmem>>, vector<1x1x8x16xf32>
    %166 = vector.shape_cast %165 : vector<1x1x8x16xf32> to vector<8x16xf32>
    %167 = arith.truncf %166 : vector<8x16xf32> to vector<8x16xbf16>
    %c8_135 = arith.constant 8 : index
    %c0_136 = arith.constant 0 : index
    %c0_137 = arith.constant 0 : index
    %168 = vector.load %arg3[%c8_135, %c0_136, %c0_137] : memref<9x16x32xbf16, #tpu.memory_space<vmem>>, vector<1x16x32xbf16>
    %169 = vector.shape_cast %168 : vector<1x16x32xbf16> to vector<16x32xbf16>
    %cst_138 = arith.constant dense<0.000000e+00> : vector<8x32xf32>
    %170 = tpu.matmul %167, %169, %cst_138 {dimension_numbers = #tpu.dot_dimension_numbers<[1], [0], [0], [1], [0, 0, 1, 1], [], []>} : vector<8x16xbf16>, vector<16x32xbf16>, vector<8x32xf32> -> vector<8x32xf32>
    %171 = arith.addf %162, %170 : vector<8x32xf32>
    %172 = vector.broadcast %0 : vector<1x32xf32> to vector<8x32xf32>
    %173 = arith.addf %171, %172 : vector<8x32xf32>
    %cst_139 = arith.constant 0.000000e+00 : f32
    %174 = vector.broadcast %cst_139 : f32 to vector<8x32xf32>
    %175 = arith.maximumf %173, %174 : vector<8x32xf32>
    %176 = arith.maximumf %87, %175 : vector<8x32xf32>
    %c0_140 = arith.constant 0 : index
    %c0_141 = arith.constant 0 : index
    %177 = vector.load %arg6[%c0_140, %c0_141] : memref<8x32xf32, #tpu.memory_space<vmem>>, vector<8x32xf32>
    tpu.vector_store %arg6[%c0_140, %c0_141], %176 {strides = array<i32>} : memref<8x32xf32, #tpu.memory_space<vmem>>, vector<8x32xf32>,
    %c0_142 = arith.constant 0 : index
    %c0_143 = arith.constant 0 : index
    %178 = tpu.strided_load %arg6[%c0_142, %c0_143] {strides = array<i32: 2, 1>} : memref<8x32xf32, #tpu.memory_space<vmem>>, vector<4x32xf32>
    %c1_144 = arith.constant 1 : index
    %c0_145 = arith.constant 0 : index
    %179 = tpu.strided_load %arg6[%c1_144, %c0_145] {strides = array<i32: 2, 1>} : memref<8x32xf32, #tpu.memory_space<vmem>>, vector<4x32xf32>
    %180 = arith.maximumf %178, %179 : vector<4x32xf32>
    %c0_146 = arith.constant 0 : index
    %c0_147 = arith.constant 0 : index
    %c0_148 = arith.constant 0 : index
    %c0_149 = arith.constant 0 : index
    %181 = vector.load %arg5[%c0_146, %c0_147, %c0_148, %c0_149] : memref<1x1x4x32xf32, #tpu.memory_space<vmem>>, vector<1x1x4x32xf32>
    %182 = vector.shape_cast %181 : vector<1x1x4x32xf32> to vector<4x32xf32>
    %183 = vector.shape_cast %180 : vector<4x32xf32> to vector<1x1x4x32xf32>
    tpu.vector_store %arg5[%c0_146, %c0_147, %c0_148, %c0_149], %183 {strides = array<i32>} : memref<1x1x4x32xf32, #tpu.memory_space<vmem>>, vector<1x1x4x32xf32>,
    return
  }
  func.func @transform_0(%arg0: i32, %arg1: i32) -> (i32, i32, i32, i32) {
    %c0_i32 = arith.constant 0 : i32
    %c0_i32_0 = arith.constant 0 : i32
    %c0_i32_1 = arith.constant 0 : i32
    %c0_i32_2 = arith.constant 0 : i32
    return %arg0, %c0_i32, %c0_i32_0, %c0_i32_1 : i32, i32, i32, i32
  }
  func.func @transform_1(%arg0: i32, %arg1: i32) -> (i32, i32, i32) {
    %c0_i32 = arith.constant 0 : i32
    %c0_i32_0 = arith.constant 0 : i32
    %c0_i32_1 = arith.constant 0 : i32
    %c0_i32_2 = arith.constant 0 : i32
    return %c0_i32, %c0_i32_0, %c0_i32_1 : i32, i32, i32
  }
  func.func @transform_2(%arg0: i32, %arg1: i32) -> (i32, i32) {
    %c0_i32 = arith.constant 0 : i32
    %c0_i32_0 = arith.constant 0 : i32
    %c0_i32_1 = arith.constant 0 : i32
    return %c0_i32, %c0_i32_0 : i32, i32
  }
  func.func @transform_3(%arg0: i32, %arg1: i32) -> (i32, i32, i32, i32) {
    %c0_i32 = arith.constant 0 : i32
    %c0_i32_0 = arith.constant 0 : i32
    %c0_i32_1 = arith.constant 0 : i32
    return %arg0, %arg1, %c0_i32, %c0_i32_0 : i32, i32, i32, i32
  }
}

module attributes {stable_mosaic.version = 11 : i64} {
  func.func @_conv_relu_pool_kernel(%arg0: i32, %arg1: i32, %arg2: memref<1x6x6x32xf32, #tpu.memory_space<vmem>>, %arg3: memref<9x32x64xbf16, #tpu.memory_space<vmem>>, %arg4: memref<1x64xf32, #tpu.memory_space<vmem>>, %arg5: memref<1x1x2x64xf32, #tpu.memory_space<vmem>>, %arg6: memref<4x64xf32, #tpu.memory_space<vmem>>) attributes {dimension_semantics = [#tpu.dimension_semantics<parallel>, #tpu.dimension_semantics<parallel>], iteration_bounds = array<i64: 2, 2>, scalar_prefetch = 0 : i64, scratch_operands = 1 : i64, tpu.core_type = #tpu.core_type<tc>, window_params = [{transform_indices = @transform_0, window_bounds = array<i64: 1, 6, 6, 32>}, {pipeline_mode = #tpu.pipeline_mode<synchronous>, transform_indices = @transform_1, window_bounds = array<i64: 9, 32, 64>}, {pipeline_mode = #tpu.pipeline_mode<synchronous>, transform_indices = @transform_2, window_bounds = array<i64: 1, 64>}, {transform_indices = @transform_3, window_bounds = array<i64: 1, 1, 2, 64>}]} {
    %c0 = arith.constant 0 : index
    %c0_0 = arith.constant 0 : index
    %0 = vector.load %arg4[%c0, %c0_0] : memref<1x64xf32, #tpu.memory_space<vmem>>, vector<1x64xf32>
    %c2_i32 = arith.constant 2 : i32
    %1 = arith.muli %c2_i32, %arg1 : i32
    %cst = arith.constant 0.000000e+00 : f32
    %2 = vector.broadcast %cst : f32 to vector<4x64xf32>
    %c0_i32 = arith.constant 0 : i32
    %3 = arith.addi %1, %c0_i32 : i32
    %c0_1 = arith.constant 0 : index
    %4 = arith.index_cast %3 : i32 to index
    %c0_2 = arith.constant 0 : index
    %c0_3 = arith.constant 0 : index
    %5 = vector.load %arg2[%c0_1, %4, %c0_2, %c0_3] : memref<1x6x6x32xf32, #tpu.memory_space<vmem>>, vector<1x1x4x32xf32>
    %6 = vector.shape_cast %5 : vector<1x1x4x32xf32> to vector<4x32xf32>
    %7 = arith.truncf %6 : vector<4x32xf32> to vector<4x32xbf16>
    %c0_4 = arith.constant 0 : index
    %c0_5 = arith.constant 0 : index
    %c0_6 = arith.constant 0 : index
    %8 = vector.load %arg3[%c0_4, %c0_5, %c0_6] : memref<9x32x64xbf16, #tpu.memory_space<vmem>>, vector<1x32x64xbf16>
    %9 = vector.shape_cast %8 : vector<1x32x64xbf16> to vector<32x64xbf16>
    %cst_7 = arith.constant dense<0.000000e+00> : vector<4x64xf32>
    %10 = tpu.matmul %7, %9, %cst_7 {dimension_numbers = #tpu.dot_dimension_numbers<[1], [0], [0], [1], [0, 0, 1, 1], [], []>} : vector<4x32xbf16>, vector<32x64xbf16>, vector<4x64xf32> -> vector<4x64xf32>
    %11 = arith.addf %2, %10 : vector<4x64xf32>
    %c0_i32_8 = arith.constant 0 : i32
    %12 = arith.addi %1, %c0_i32_8 : i32
    %c0_9 = arith.constant 0 : index
    %13 = arith.index_cast %12 : i32 to index
    %c1 = arith.constant 1 : index
    %c0_10 = arith.constant 0 : index
    %14 = vector.load %arg2[%c0_9, %13, %c1, %c0_10] : memref<1x6x6x32xf32, #tpu.memory_space<vmem>>, vector<1x1x4x32xf32>
    %15 = vector.shape_cast %14 : vector<1x1x4x32xf32> to vector<4x32xf32>
    %16 = arith.truncf %15 : vector<4x32xf32> to vector<4x32xbf16>
    %c1_11 = arith.constant 1 : index
    %c0_12 = arith.constant 0 : index
    %c0_13 = arith.constant 0 : index
    %17 = vector.load %arg3[%c1_11, %c0_12, %c0_13] : memref<9x32x64xbf16, #tpu.memory_space<vmem>>, vector<1x32x64xbf16>
    %18 = vector.shape_cast %17 : vector<1x32x64xbf16> to vector<32x64xbf16>
    %cst_14 = arith.constant dense<0.000000e+00> : vector<4x64xf32>
    %19 = tpu.matmul %16, %18, %cst_14 {dimension_numbers = #tpu.dot_dimension_numbers<[1], [0], [0], [1], [0, 0, 1, 1], [], []>} : vector<4x32xbf16>, vector<32x64xbf16>, vector<4x64xf32> -> vector<4x64xf32>
    %20 = arith.addf %11, %19 : vector<4x64xf32>
    %c0_i32_15 = arith.constant 0 : i32
    %21 = arith.addi %1, %c0_i32_15 : i32
    %c0_16 = arith.constant 0 : index
    %22 = arith.index_cast %21 : i32 to index
    %c2 = arith.constant 2 : index
    %c0_17 = arith.constant 0 : index
    %23 = vector.load %arg2[%c0_16, %22, %c2, %c0_17] : memref<1x6x6x32xf32, #tpu.memory_space<vmem>>, vector<1x1x4x32xf32>
    %24 = vector.shape_cast %23 : vector<1x1x4x32xf32> to vector<4x32xf32>
    %25 = arith.truncf %24 : vector<4x32xf32> to vector<4x32xbf16>
    %c2_18 = arith.constant 2 : index
    %c0_19 = arith.constant 0 : index
    %c0_20 = arith.constant 0 : index
    %26 = vector.load %arg3[%c2_18, %c0_19, %c0_20] : memref<9x32x64xbf16, #tpu.memory_space<vmem>>, vector<1x32x64xbf16>
    %27 = vector.shape_cast %26 : vector<1x32x64xbf16> to vector<32x64xbf16>
    %cst_21 = arith.constant dense<0.000000e+00> : vector<4x64xf32>
    %28 = tpu.matmul %25, %27, %cst_21 {dimension_numbers = #tpu.dot_dimension_numbers<[1], [0], [0], [1], [0, 0, 1, 1], [], []>} : vector<4x32xbf16>, vector<32x64xbf16>, vector<4x64xf32> -> vector<4x64xf32>
    %29 = arith.addf %20, %28 : vector<4x64xf32>
    %c1_i32 = arith.constant 1 : i32
    %30 = arith.addi %1, %c1_i32 : i32
    %c0_22 = arith.constant 0 : index
    %31 = arith.index_cast %30 : i32 to index
    %c0_23 = arith.constant 0 : index
    %c0_24 = arith.constant 0 : index
    %32 = vector.load %arg2[%c0_22, %31, %c0_23, %c0_24] : memref<1x6x6x32xf32, #tpu.memory_space<vmem>>, vector<1x1x4x32xf32>
    %33 = vector.shape_cast %32 : vector<1x1x4x32xf32> to vector<4x32xf32>
    %34 = arith.truncf %33 : vector<4x32xf32> to vector<4x32xbf16>
    %c3 = arith.constant 3 : index
    %c0_25 = arith.constant 0 : index
    %c0_26 = arith.constant 0 : index
    %35 = vector.load %arg3[%c3, %c0_25, %c0_26] : memref<9x32x64xbf16, #tpu.memory_space<vmem>>, vector<1x32x64xbf16>
    %36 = vector.shape_cast %35 : vector<1x32x64xbf16> to vector<32x64xbf16>
    %cst_27 = arith.constant dense<0.000000e+00> : vector<4x64xf32>
    %37 = tpu.matmul %34, %36, %cst_27 {dimension_numbers = #tpu.dot_dimension_numbers<[1], [0], [0], [1], [0, 0, 1, 1], [], []>} : vector<4x32xbf16>, vector<32x64xbf16>, vector<4x64xf32> -> vector<4x64xf32>
    %38 = arith.addf %29, %37 : vector<4x64xf32>
    %c1_i32_28 = arith.constant 1 : i32
    %39 = arith.addi %1, %c1_i32_28 : i32
    %c0_29 = arith.constant 0 : index
    %40 = arith.index_cast %39 : i32 to index
    %c1_30 = arith.constant 1 : index
    %c0_31 = arith.constant 0 : index
    %41 = vector.load %arg2[%c0_29, %40, %c1_30, %c0_31] : memref<1x6x6x32xf32, #tpu.memory_space<vmem>>, vector<1x1x4x32xf32>
    %42 = vector.shape_cast %41 : vector<1x1x4x32xf32> to vector<4x32xf32>
    %43 = arith.truncf %42 : vector<4x32xf32> to vector<4x32xbf16>
    %c4 = arith.constant 4 : index
    %c0_32 = arith.constant 0 : index
    %c0_33 = arith.constant 0 : index
    %44 = vector.load %arg3[%c4, %c0_32, %c0_33] : memref<9x32x64xbf16, #tpu.memory_space<vmem>>, vector<1x32x64xbf16>
    %45 = vector.shape_cast %44 : vector<1x32x64xbf16> to vector<32x64xbf16>
    %cst_34 = arith.constant dense<0.000000e+00> : vector<4x64xf32>
    %46 = tpu.matmul %43, %45, %cst_34 {dimension_numbers = #tpu.dot_dimension_numbers<[1], [0], [0], [1], [0, 0, 1, 1], [], []>} : vector<4x32xbf16>, vector<32x64xbf16>, vector<4x64xf32> -> vector<4x64xf32>
    %47 = arith.addf %38, %46 : vector<4x64xf32>
    %c1_i32_35 = arith.constant 1 : i32
    %48 = arith.addi %1, %c1_i32_35 : i32
    %c0_36 = arith.constant 0 : index
    %49 = arith.index_cast %48 : i32 to index
    %c2_37 = arith.constant 2 : index
    %c0_38 = arith.constant 0 : index
    %50 = vector.load %arg2[%c0_36, %49, %c2_37, %c0_38] : memref<1x6x6x32xf32, #tpu.memory_space<vmem>>, vector<1x1x4x32xf32>
    %51 = vector.shape_cast %50 : vector<1x1x4x32xf32> to vector<4x32xf32>
    %52 = arith.truncf %51 : vector<4x32xf32> to vector<4x32xbf16>
    %c5 = arith.constant 5 : index
    %c0_39 = arith.constant 0 : index
    %c0_40 = arith.constant 0 : index
    %53 = vector.load %arg3[%c5, %c0_39, %c0_40] : memref<9x32x64xbf16, #tpu.memory_space<vmem>>, vector<1x32x64xbf16>
    %54 = vector.shape_cast %53 : vector<1x32x64xbf16> to vector<32x64xbf16>
    %cst_41 = arith.constant dense<0.000000e+00> : vector<4x64xf32>
    %55 = tpu.matmul %52, %54, %cst_41 {dimension_numbers = #tpu.dot_dimension_numbers<[1], [0], [0], [1], [0, 0, 1, 1], [], []>} : vector<4x32xbf16>, vector<32x64xbf16>, vector<4x64xf32> -> vector<4x64xf32>
    %56 = arith.addf %47, %55 : vector<4x64xf32>
    %c2_i32_42 = arith.constant 2 : i32
    %57 = arith.addi %1, %c2_i32_42 : i32
    %c0_43 = arith.constant 0 : index
    %58 = arith.index_cast %57 : i32 to index
    %c0_44 = arith.constant 0 : index
    %c0_45 = arith.constant 0 : index
    %59 = vector.load %arg2[%c0_43, %58, %c0_44, %c0_45] : memref<1x6x6x32xf32, #tpu.memory_space<vmem>>, vector<1x1x4x32xf32>
    %60 = vector.shape_cast %59 : vector<1x1x4x32xf32> to vector<4x32xf32>
    %61 = arith.truncf %60 : vector<4x32xf32> to vector<4x32xbf16>
    %c6 = arith.constant 6 : index
    %c0_46 = arith.constant 0 : index
    %c0_47 = arith.constant 0 : index
    %62 = vector.load %arg3[%c6, %c0_46, %c0_47] : memref<9x32x64xbf16, #tpu.memory_space<vmem>>, vector<1x32x64xbf16>
    %63 = vector.shape_cast %62 : vector<1x32x64xbf16> to vector<32x64xbf16>
    %cst_48 = arith.constant dense<0.000000e+00> : vector<4x64xf32>
    %64 = tpu.matmul %61, %63, %cst_48 {dimension_numbers = #tpu.dot_dimension_numbers<[1], [0], [0], [1], [0, 0, 1, 1], [], []>} : vector<4x32xbf16>, vector<32x64xbf16>, vector<4x64xf32> -> vector<4x64xf32>
    %65 = arith.addf %56, %64 : vector<4x64xf32>
    %c2_i32_49 = arith.constant 2 : i32
    %66 = arith.addi %1, %c2_i32_49 : i32
    %c0_50 = arith.constant 0 : index
    %67 = arith.index_cast %66 : i32 to index
    %c1_51 = arith.constant 1 : index
    %c0_52 = arith.constant 0 : index
    %68 = vector.load %arg2[%c0_50, %67, %c1_51, %c0_52] : memref<1x6x6x32xf32, #tpu.memory_space<vmem>>, vector<1x1x4x32xf32>
    %69 = vector.shape_cast %68 : vector<1x1x4x32xf32> to vector<4x32xf32>
    %70 = arith.truncf %69 : vector<4x32xf32> to vector<4x32xbf16>
    %c7 = arith.constant 7 : index
    %c0_53 = arith.constant 0 : index
    %c0_54 = arith.constant 0 : index
    %71 = vector.load %arg3[%c7, %c0_53, %c0_54] : memref<9x32x64xbf16, #tpu.memory_space<vmem>>, vector<1x32x64xbf16>
    %72 = vector.shape_cast %71 : vector<1x32x64xbf16> to vector<32x64xbf16>
    %cst_55 = arith.constant dense<0.000000e+00> : vector<4x64xf32>
    %73 = tpu.matmul %70, %72, %cst_55 {dimension_numbers = #tpu.dot_dimension_numbers<[1], [0], [0], [1], [0, 0, 1, 1], [], []>} : vector<4x32xbf16>, vector<32x64xbf16>, vector<4x64xf32> -> vector<4x64xf32>
    %74 = arith.addf %65, %73 : vector<4x64xf32>
    %c2_i32_56 = arith.constant 2 : i32
    %75 = arith.addi %1, %c2_i32_56 : i32
    %c0_57 = arith.constant 0 : index
    %76 = arith.index_cast %75 : i32 to index
    %c2_58 = arith.constant 2 : index
    %c0_59 = arith.constant 0 : index
    %77 = vector.load %arg2[%c0_57, %76, %c2_58, %c0_59] : memref<1x6x6x32xf32, #tpu.memory_space<vmem>>, vector<1x1x4x32xf32>
    %78 = vector.shape_cast %77 : vector<1x1x4x32xf32> to vector<4x32xf32>
    %79 = arith.truncf %78 : vector<4x32xf32> to vector<4x32xbf16>
    %c8 = arith.constant 8 : index
    %c0_60 = arith.constant 0 : index
    %c0_61 = arith.constant 0 : index
    %80 = vector.load %arg3[%c8, %c0_60, %c0_61] : memref<9x32x64xbf16, #tpu.memory_space<vmem>>, vector<1x32x64xbf16>
    %81 = vector.shape_cast %80 : vector<1x32x64xbf16> to vector<32x64xbf16>
    %cst_62 = arith.constant dense<0.000000e+00> : vector<4x64xf32>
    %82 = tpu.matmul %79, %81, %cst_62 {dimension_numbers = #tpu.dot_dimension_numbers<[1], [0], [0], [1], [0, 0, 1, 1], [], []>} : vector<4x32xbf16>, vector<32x64xbf16>, vector<4x64xf32> -> vector<4x64xf32>
    %83 = arith.addf %74, %82 : vector<4x64xf32>
    %84 = vector.broadcast %0 : vector<1x64xf32> to vector<4x64xf32>
    %85 = arith.addf %83, %84 : vector<4x64xf32>
    %cst_63 = arith.constant 0.000000e+00 : f32
    %86 = vector.broadcast %cst_63 : f32 to vector<4x64xf32>
    %87 = arith.maximumf %85, %86 : vector<4x64xf32>
    %c2_i32_64 = arith.constant 2 : i32
    %88 = arith.muli %c2_i32_64, %arg1 : i32
    %c1_i32_65 = arith.constant 1 : i32
    %89 = arith.addi %88, %c1_i32_65 : i32
    %cst_66 = arith.constant 0.000000e+00 : f32
    %90 = vector.broadcast %cst_66 : f32 to vector<4x64xf32>
    %c0_i32_67 = arith.constant 0 : i32
    %91 = arith.addi %89, %c0_i32_67 : i32
    %c0_68 = arith.constant 0 : index
    %92 = arith.index_cast %91 : i32 to index
    %c0_69 = arith.constant 0 : index
    %c0_70 = arith.constant 0 : index
    %93 = vector.load %arg2[%c0_68, %92, %c0_69, %c0_70] : memref<1x6x6x32xf32, #tpu.memory_space<vmem>>, vector<1x1x4x32xf32>
    %94 = vector.shape_cast %93 : vector<1x1x4x32xf32> to vector<4x32xf32>
    %95 = arith.truncf %94 : vector<4x32xf32> to vector<4x32xbf16>
    %c0_71 = arith.constant 0 : index
    %c0_72 = arith.constant 0 : index
    %c0_73 = arith.constant 0 : index
    %96 = vector.load %arg3[%c0_71, %c0_72, %c0_73] : memref<9x32x64xbf16, #tpu.memory_space<vmem>>, vector<1x32x64xbf16>
    %97 = vector.shape_cast %96 : vector<1x32x64xbf16> to vector<32x64xbf16>
    %cst_74 = arith.constant dense<0.000000e+00> : vector<4x64xf32>
    %98 = tpu.matmul %95, %97, %cst_74 {dimension_numbers = #tpu.dot_dimension_numbers<[1], [0], [0], [1], [0, 0, 1, 1], [], []>} : vector<4x32xbf16>, vector<32x64xbf16>, vector<4x64xf32> -> vector<4x64xf32>
    %99 = arith.addf %90, %98 : vector<4x64xf32>
    %c0_i32_75 = arith.constant 0 : i32
    %100 = arith.addi %89, %c0_i32_75 : i32
    %c0_76 = arith.constant 0 : index
    %101 = arith.index_cast %100 : i32 to index
    %c1_77 = arith.constant 1 : index
    %c0_78 = arith.constant 0 : index
    %102 = vector.load %arg2[%c0_76, %101, %c1_77, %c0_78] : memref<1x6x6x32xf32, #tpu.memory_space<vmem>>, vector<1x1x4x32xf32>
    %103 = vector.shape_cast %102 : vector<1x1x4x32xf32> to vector<4x32xf32>
    %104 = arith.truncf %103 : vector<4x32xf32> to vector<4x32xbf16>
    %c1_79 = arith.constant 1 : index
    %c0_80 = arith.constant 0 : index
    %c0_81 = arith.constant 0 : index
    %105 = vector.load %arg3[%c1_79, %c0_80, %c0_81] : memref<9x32x64xbf16, #tpu.memory_space<vmem>>, vector<1x32x64xbf16>
    %106 = vector.shape_cast %105 : vector<1x32x64xbf16> to vector<32x64xbf16>
    %cst_82 = arith.constant dense<0.000000e+00> : vector<4x64xf32>
    %107 = tpu.matmul %104, %106, %cst_82 {dimension_numbers = #tpu.dot_dimension_numbers<[1], [0], [0], [1], [0, 0, 1, 1], [], []>} : vector<4x32xbf16>, vector<32x64xbf16>, vector<4x64xf32> -> vector<4x64xf32>
    %108 = arith.addf %99, %107 : vector<4x64xf32>
    %c0_i32_83 = arith.constant 0 : i32
    %109 = arith.addi %89, %c0_i32_83 : i32
    %c0_84 = arith.constant 0 : index
    %110 = arith.index_cast %109 : i32 to index
    %c2_85 = arith.constant 2 : index
    %c0_86 = arith.constant 0 : index
    %111 = vector.load %arg2[%c0_84, %110, %c2_85, %c0_86] : memref<1x6x6x32xf32, #tpu.memory_space<vmem>>, vector<1x1x4x32xf32>
    %112 = vector.shape_cast %111 : vector<1x1x4x32xf32> to vector<4x32xf32>
    %113 = arith.truncf %112 : vector<4x32xf32> to vector<4x32xbf16>
    %c2_87 = arith.constant 2 : index
    %c0_88 = arith.constant 0 : index
    %c0_89 = arith.constant 0 : index
    %114 = vector.load %arg3[%c2_87, %c0_88, %c0_89] : memref<9x32x64xbf16, #tpu.memory_space<vmem>>, vector<1x32x64xbf16>
    %115 = vector.shape_cast %114 : vector<1x32x64xbf16> to vector<32x64xbf16>
    %cst_90 = arith.constant dense<0.000000e+00> : vector<4x64xf32>
    %116 = tpu.matmul %113, %115, %cst_90 {dimension_numbers = #tpu.dot_dimension_numbers<[1], [0], [0], [1], [0, 0, 1, 1], [], []>} : vector<4x32xbf16>, vector<32x64xbf16>, vector<4x64xf32> -> vector<4x64xf32>
    %117 = arith.addf %108, %116 : vector<4x64xf32>
    %c1_i32_91 = arith.constant 1 : i32
    %118 = arith.addi %89, %c1_i32_91 : i32
    %c0_92 = arith.constant 0 : index
    %119 = arith.index_cast %118 : i32 to index
    %c0_93 = arith.constant 0 : index
    %c0_94 = arith.constant 0 : index
    %120 = vector.load %arg2[%c0_92, %119, %c0_93, %c0_94] : memref<1x6x6x32xf32, #tpu.memory_space<vmem>>, vector<1x1x4x32xf32>
    %121 = vector.shape_cast %120 : vector<1x1x4x32xf32> to vector<4x32xf32>
    %122 = arith.truncf %121 : vector<4x32xf32> to vector<4x32xbf16>
    %c3_95 = arith.constant 3 : index
    %c0_96 = arith.constant 0 : index
    %c0_97 = arith.constant 0 : index
    %123 = vector.load %arg3[%c3_95, %c0_96, %c0_97] : memref<9x32x64xbf16, #tpu.memory_space<vmem>>, vector<1x32x64xbf16>
    %124 = vector.shape_cast %123 : vector<1x32x64xbf16> to vector<32x64xbf16>
    %cst_98 = arith.constant dense<0.000000e+00> : vector<4x64xf32>
    %125 = tpu.matmul %122, %124, %cst_98 {dimension_numbers = #tpu.dot_dimension_numbers<[1], [0], [0], [1], [0, 0, 1, 1], [], []>} : vector<4x32xbf16>, vector<32x64xbf16>, vector<4x64xf32> -> vector<4x64xf32>
    %126 = arith.addf %117, %125 : vector<4x64xf32>
    %c1_i32_99 = arith.constant 1 : i32
    %127 = arith.addi %89, %c1_i32_99 : i32
    %c0_100 = arith.constant 0 : index
    %128 = arith.index_cast %127 : i32 to index
    %c1_101 = arith.constant 1 : index
    %c0_102 = arith.constant 0 : index
    %129 = vector.load %arg2[%c0_100, %128, %c1_101, %c0_102] : memref<1x6x6x32xf32, #tpu.memory_space<vmem>>, vector<1x1x4x32xf32>
    %130 = vector.shape_cast %129 : vector<1x1x4x32xf32> to vector<4x32xf32>
    %131 = arith.truncf %130 : vector<4x32xf32> to vector<4x32xbf16>
    %c4_103 = arith.constant 4 : index
    %c0_104 = arith.constant 0 : index
    %c0_105 = arith.constant 0 : index
    %132 = vector.load %arg3[%c4_103, %c0_104, %c0_105] : memref<9x32x64xbf16, #tpu.memory_space<vmem>>, vector<1x32x64xbf16>
    %133 = vector.shape_cast %132 : vector<1x32x64xbf16> to vector<32x64xbf16>
    %cst_106 = arith.constant dense<0.000000e+00> : vector<4x64xf32>
    %134 = tpu.matmul %131, %133, %cst_106 {dimension_numbers = #tpu.dot_dimension_numbers<[1], [0], [0], [1], [0, 0, 1, 1], [], []>} : vector<4x32xbf16>, vector<32x64xbf16>, vector<4x64xf32> -> vector<4x64xf32>
    %135 = arith.addf %126, %134 : vector<4x64xf32>
    %c1_i32_107 = arith.constant 1 : i32
    %136 = arith.addi %89, %c1_i32_107 : i32
    %c0_108 = arith.constant 0 : index
    %137 = arith.index_cast %136 : i32 to index
    %c2_109 = arith.constant 2 : index
    %c0_110 = arith.constant 0 : index
    %138 = vector.load %arg2[%c0_108, %137, %c2_109, %c0_110] : memref<1x6x6x32xf32, #tpu.memory_space<vmem>>, vector<1x1x4x32xf32>
    %139 = vector.shape_cast %138 : vector<1x1x4x32xf32> to vector<4x32xf32>
    %140 = arith.truncf %139 : vector<4x32xf32> to vector<4x32xbf16>
    %c5_111 = arith.constant 5 : index
    %c0_112 = arith.constant 0 : index
    %c0_113 = arith.constant 0 : index
    %141 = vector.load %arg3[%c5_111, %c0_112, %c0_113] : memref<9x32x64xbf16, #tpu.memory_space<vmem>>, vector<1x32x64xbf16>
    %142 = vector.shape_cast %141 : vector<1x32x64xbf16> to vector<32x64xbf16>
    %cst_114 = arith.constant dense<0.000000e+00> : vector<4x64xf32>
    %143 = tpu.matmul %140, %142, %cst_114 {dimension_numbers = #tpu.dot_dimension_numbers<[1], [0], [0], [1], [0, 0, 1, 1], [], []>} : vector<4x32xbf16>, vector<32x64xbf16>, vector<4x64xf32> -> vector<4x64xf32>
    %144 = arith.addf %135, %143 : vector<4x64xf32>
    %c2_i32_115 = arith.constant 2 : i32
    %145 = arith.addi %89, %c2_i32_115 : i32
    %c0_116 = arith.constant 0 : index
    %146 = arith.index_cast %145 : i32 to index
    %c0_117 = arith.constant 0 : index
    %c0_118 = arith.constant 0 : index
    %147 = vector.load %arg2[%c0_116, %146, %c0_117, %c0_118] : memref<1x6x6x32xf32, #tpu.memory_space<vmem>>, vector<1x1x4x32xf32>
    %148 = vector.shape_cast %147 : vector<1x1x4x32xf32> to vector<4x32xf32>
    %149 = arith.truncf %148 : vector<4x32xf32> to vector<4x32xbf16>
    %c6_119 = arith.constant 6 : index
    %c0_120 = arith.constant 0 : index
    %c0_121 = arith.constant 0 : index
    %150 = vector.load %arg3[%c6_119, %c0_120, %c0_121] : memref<9x32x64xbf16, #tpu.memory_space<vmem>>, vector<1x32x64xbf16>
    %151 = vector.shape_cast %150 : vector<1x32x64xbf16> to vector<32x64xbf16>
    %cst_122 = arith.constant dense<0.000000e+00> : vector<4x64xf32>
    %152 = tpu.matmul %149, %151, %cst_122 {dimension_numbers = #tpu.dot_dimension_numbers<[1], [0], [0], [1], [0, 0, 1, 1], [], []>} : vector<4x32xbf16>, vector<32x64xbf16>, vector<4x64xf32> -> vector<4x64xf32>
    %153 = arith.addf %144, %152 : vector<4x64xf32>
    %c2_i32_123 = arith.constant 2 : i32
    %154 = arith.addi %89, %c2_i32_123 : i32
    %c0_124 = arith.constant 0 : index
    %155 = arith.index_cast %154 : i32 to index
    %c1_125 = arith.constant 1 : index
    %c0_126 = arith.constant 0 : index
    %156 = vector.load %arg2[%c0_124, %155, %c1_125, %c0_126] : memref<1x6x6x32xf32, #tpu.memory_space<vmem>>, vector<1x1x4x32xf32>
    %157 = vector.shape_cast %156 : vector<1x1x4x32xf32> to vector<4x32xf32>
    %158 = arith.truncf %157 : vector<4x32xf32> to vector<4x32xbf16>
    %c7_127 = arith.constant 7 : index
    %c0_128 = arith.constant 0 : index
    %c0_129 = arith.constant 0 : index
    %159 = vector.load %arg3[%c7_127, %c0_128, %c0_129] : memref<9x32x64xbf16, #tpu.memory_space<vmem>>, vector<1x32x64xbf16>
    %160 = vector.shape_cast %159 : vector<1x32x64xbf16> to vector<32x64xbf16>
    %cst_130 = arith.constant dense<0.000000e+00> : vector<4x64xf32>
    %161 = tpu.matmul %158, %160, %cst_130 {dimension_numbers = #tpu.dot_dimension_numbers<[1], [0], [0], [1], [0, 0, 1, 1], [], []>} : vector<4x32xbf16>, vector<32x64xbf16>, vector<4x64xf32> -> vector<4x64xf32>
    %162 = arith.addf %153, %161 : vector<4x64xf32>
    %c2_i32_131 = arith.constant 2 : i32
    %163 = arith.addi %89, %c2_i32_131 : i32
    %c0_132 = arith.constant 0 : index
    %164 = arith.index_cast %163 : i32 to index
    %c2_133 = arith.constant 2 : index
    %c0_134 = arith.constant 0 : index
    %165 = vector.load %arg2[%c0_132, %164, %c2_133, %c0_134] : memref<1x6x6x32xf32, #tpu.memory_space<vmem>>, vector<1x1x4x32xf32>
    %166 = vector.shape_cast %165 : vector<1x1x4x32xf32> to vector<4x32xf32>
    %167 = arith.truncf %166 : vector<4x32xf32> to vector<4x32xbf16>
    %c8_135 = arith.constant 8 : index
    %c0_136 = arith.constant 0 : index
    %c0_137 = arith.constant 0 : index
    %168 = vector.load %arg3[%c8_135, %c0_136, %c0_137] : memref<9x32x64xbf16, #tpu.memory_space<vmem>>, vector<1x32x64xbf16>
    %169 = vector.shape_cast %168 : vector<1x32x64xbf16> to vector<32x64xbf16>
    %cst_138 = arith.constant dense<0.000000e+00> : vector<4x64xf32>
    %170 = tpu.matmul %167, %169, %cst_138 {dimension_numbers = #tpu.dot_dimension_numbers<[1], [0], [0], [1], [0, 0, 1, 1], [], []>} : vector<4x32xbf16>, vector<32x64xbf16>, vector<4x64xf32> -> vector<4x64xf32>
    %171 = arith.addf %162, %170 : vector<4x64xf32>
    %172 = vector.broadcast %0 : vector<1x64xf32> to vector<4x64xf32>
    %173 = arith.addf %171, %172 : vector<4x64xf32>
    %cst_139 = arith.constant 0.000000e+00 : f32
    %174 = vector.broadcast %cst_139 : f32 to vector<4x64xf32>
    %175 = arith.maximumf %173, %174 : vector<4x64xf32>
    %176 = arith.maximumf %87, %175 : vector<4x64xf32>
    %c0_140 = arith.constant 0 : index
    %c0_141 = arith.constant 0 : index
    %177 = vector.load %arg6[%c0_140, %c0_141] : memref<4x64xf32, #tpu.memory_space<vmem>>, vector<4x64xf32>
    tpu.vector_store %arg6[%c0_140, %c0_141], %176 {strides = array<i32>} : memref<4x64xf32, #tpu.memory_space<vmem>>, vector<4x64xf32>,
    %c0_142 = arith.constant 0 : index
    %c0_143 = arith.constant 0 : index
    %178 = tpu.strided_load %arg6[%c0_142, %c0_143] {strides = array<i32: 2, 1>} : memref<4x64xf32, #tpu.memory_space<vmem>>, vector<2x64xf32>
    %c1_144 = arith.constant 1 : index
    %c0_145 = arith.constant 0 : index
    %179 = tpu.strided_load %arg6[%c1_144, %c0_145] {strides = array<i32: 2, 1>} : memref<4x64xf32, #tpu.memory_space<vmem>>, vector<2x64xf32>
    %180 = arith.maximumf %178, %179 : vector<2x64xf32>
    %c0_146 = arith.constant 0 : index
    %c0_147 = arith.constant 0 : index
    %c0_148 = arith.constant 0 : index
    %c0_149 = arith.constant 0 : index
    %181 = vector.load %arg5[%c0_146, %c0_147, %c0_148, %c0_149] : memref<1x1x2x64xf32, #tpu.memory_space<vmem>>, vector<1x1x2x64xf32>
    %182 = vector.shape_cast %181 : vector<1x1x2x64xf32> to vector<2x64xf32>
    %183 = vector.shape_cast %180 : vector<2x64xf32> to vector<1x1x2x64xf32>
    tpu.vector_store %arg5[%c0_146, %c0_147, %c0_148, %c0_149], %183 {strides = array<i32>} : memref<1x1x2x64xf32, #tpu.memory_space<vmem>>, vector<1x1x2x64xf32>,
    return
  }
  func.func @transform_0(%arg0: i32, %arg1: i32) -> (i32, i32, i32, i32) {
    %c0_i32 = arith.constant 0 : i32
    %c0_i32_0 = arith.constant 0 : i32
    %c0_i32_1 = arith.constant 0 : i32
    %c0_i32_2 = arith.constant 0 : i32
    return %arg0, %c0_i32, %c0_i32_0, %c0_i32_1 : i32, i32, i32, i32
  }
  func.func @transform_1(%arg0: i32, %arg1: i32) -> (i32, i32, i32) {
    %c0_i32 = arith.constant 0 : i32
    %c0_i32_0 = arith.constant 0 : i32
    %c0_i32_1 = arith.constant 0 : i32
    %c0_i32_2 = arith.constant 0 : i32
    return %c0_i32, %c0_i32_0, %c0_i32_1 : i32, i32, i32
  }
  func.func @transform_2(%arg0: i32, %arg1: i32) -> (i32, i32) {
    %c0_i32 = arith.constant 0 : i32
    %c0_i32_0 = arith.constant 0 : i32
    %c0_i32_1 = arith.constant 0 : i32
    return %c0_i32, %c0_i32_0 : i32, i32
  }
  func.func @transform_3(%arg0: i32, %arg1: i32) -> (i32, i32, i32, i32) {
    %c0_i32 = arith.constant 0 : i32
    %c0_i32_0 = arith.constant 0 : i32
    %c0_i32_1 = arith.constant 0 : i32
    return %arg0, %arg1, %c0_i32, %c0_i32_0 : i32, i32, i32, i32
  }
}

module attributes {stable_mosaic.version = 11 : i64} {
  func.func @_mlp_kernel(%arg0: i32, %arg1: memref<2x128xbf16, #tpu.memory_space<vmem>>, %arg2: memref<128x512xbf16, #tpu.memory_space<vmem>>, %arg3: memref<1x512xf32, #tpu.memory_space<vmem>>, %arg4: memref<512x128xbf16, #tpu.memory_space<vmem>>, %arg5: memref<1x128xf32, #tpu.memory_space<vmem>>, %arg6: memref<2x128xf32, #tpu.memory_space<vmem>>, %arg7: memref<2x512xf32, #tpu.memory_space<vmem>>) attributes {dimension_semantics = [#tpu.dimension_semantics<arbitrary>], iteration_bounds = array<i64: 2>, scalar_prefetch = 0 : i64, scratch_operands = 1 : i64, tpu.core_type = #tpu.core_type<tc>, window_params = [{transform_indices = @transform_0, window_bounds = array<i64: 2, 128>}, {transform_indices = @transform_1, window_bounds = array<i64: 128, 512>}, {pipeline_mode = #tpu.pipeline_mode<synchronous>, transform_indices = @transform_2, window_bounds = array<i64: 1, 512>}, {pipeline_mode = #tpu.pipeline_mode<synchronous>, transform_indices = @transform_3, window_bounds = array<i64: 512, 128>}, {pipeline_mode = #tpu.pipeline_mode<synchronous>, transform_indices = @transform_4, window_bounds = array<i64: 1, 128>}, {pipeline_mode = #tpu.pipeline_mode<synchronous>, transform_indices = @transform_5, window_bounds = array<i64: 2, 128>}]} {
    %c0_i32 = arith.constant 0 : i32
    %0 = arith.cmpi eq, %arg0, %c0_i32 : i32
    %1 = arith.extui %0 : i1 to i32
    %c0_i32_0 = arith.constant 0 : i32
    %2 = arith.cmpi ne, %1, %c0_i32_0 : i32
    scf.if %2 {
      %cst_9 = arith.constant 0.000000e+00 : f32
      %12 = vector.broadcast %cst_9 : f32 to vector<2x512xf32>
      %c0_10 = arith.constant 0 : index
      %c0_11 = arith.constant 0 : index
      %13 = vector.load %arg7[%c0_10, %c0_11] : memref<2x512xf32, #tpu.memory_space<vmem>>, vector<2x512xf32>
      tpu.vector_store %arg7[%c0_10, %c0_11], %12 {strides = array<i32>} : memref<2x512xf32, #tpu.memory_space<vmem>>, vector<2x512xf32>,
    } else {
    }
    %c0 = arith.constant 0 : index
    %c0_1 = arith.constant 0 : index
    %3 = vector.load %arg7[%c0, %c0_1] : memref<2x512xf32, #tpu.memory_space<vmem>>, vector<2x512xf32>
    %c0_2 = arith.constant 0 : index
    %c0_3 = arith.constant 0 : index
    %4 = vector.load %arg1[%c0_2, %c0_3] : memref<2x128xbf16, #tpu.memory_space<vmem>>, vector<2x128xbf16>
    %c0_4 = arith.constant 0 : index
    %c0_5 = arith.constant 0 : index
    %5 = vector.load %arg2[%c0_4, %c0_5] : memref<128x512xbf16, #tpu.memory_space<vmem>>, vector<128x512xbf16>
    %cst = arith.constant dense<0.000000e+00> : vector<2x512xf32>
    %6 = tpu.matmul %4, %5, %cst {dimension_numbers = #tpu.dot_dimension_numbers<[1], [0], [0], [1], [0, 0, 1, 1], [], []>} : vector<2x128xbf16>, vector<128x512xbf16>, vector<2x512xf32> -> vector<2x512xf32>
    %7 = arith.addf %3, %6 : vector<2x512xf32>
    %c0_6 = arith.constant 0 : index
    %c0_7 = arith.constant 0 : index
    %8 = vector.load %arg7[%c0_6, %c0_7] : memref<2x512xf32, #tpu.memory_space<vmem>>, vector<2x512xf32>
    tpu.vector_store %arg7[%c0_6, %c0_7], %7 {strides = array<i32>} : memref<2x512xf32, #tpu.memory_space<vmem>>, vector<2x512xf32>,
    %c1_i32 = arith.constant 1 : i32
    %9 = arith.cmpi eq, %arg0, %c1_i32 : i32
    %10 = arith.extui %9 : i1 to i32
    %c0_i32_8 = arith.constant 0 : i32
    %11 = arith.cmpi ne, %10, %c0_i32_8 : i32
    scf.if %11 {
      %c0_9 = arith.constant 0 : index
      %c0_10 = arith.constant 0 : index
      %12 = vector.load %arg7[%c0_9, %c0_10] : memref<2x512xf32, #tpu.memory_space<vmem>>, vector<2x512xf32>
      %c0_11 = arith.constant 0 : index
      %c0_12 = arith.constant 0 : index
      %13 = vector.load %arg3[%c0_11, %c0_12] : memref<1x512xf32, #tpu.memory_space<vmem>>, vector<1x512xf32>
      %14 = vector.broadcast %13 : vector<1x512xf32> to vector<2x512xf32>
      %15 = arith.addf %12, %14 : vector<2x512xf32>
      %cst_13 = arith.constant 0.000000e+00 : f32
      %16 = vector.broadcast %cst_13 : f32 to vector<2x512xf32>
      %17 = arith.maximumf %15, %16 : vector<2x512xf32>
      %18 = arith.truncf %17 : vector<2x512xf32> to vector<2x512xbf16>
      %c0_14 = arith.constant 0 : index
      %c0_15 = arith.constant 0 : index
      %19 = vector.load %arg4[%c0_14, %c0_15] : memref<512x128xbf16, #tpu.memory_space<vmem>>, vector<512x128xbf16>
      %cst_16 = arith.constant dense<0.000000e+00> : vector<2x128xf32>
      %20 = tpu.matmul %18, %19, %cst_16 {dimension_numbers = #tpu.dot_dimension_numbers<[1], [0], [0], [1], [0, 0, 1, 1], [], []>} : vector<2x512xbf16>, vector<512x128xbf16>, vector<2x128xf32> -> vector<2x128xf32>
      %c0_17 = arith.constant 0 : index
      %c0_18 = arith.constant 0 : index
      %21 = vector.load %arg5[%c0_17, %c0_18] : memref<1x128xf32, #tpu.memory_space<vmem>>, vector<1x128xf32>
      %22 = vector.broadcast %21 : vector<1x128xf32> to vector<2x128xf32>
      %23 = arith.addf %20, %22 : vector<2x128xf32>
      %c0_19 = arith.constant 0 : index
      %c0_20 = arith.constant 0 : index
      %24 = vector.load %arg6[%c0_19, %c0_20] : memref<2x128xf32, #tpu.memory_space<vmem>>, vector<2x128xf32>
      tpu.vector_store %arg6[%c0_19, %c0_20], %23 {strides = array<i32>} : memref<2x128xf32, #tpu.memory_space<vmem>>, vector<2x128xf32>,
    } else {
    }
    return
  }
  func.func @transform_0(%arg0: i32) -> (i32, i32) {
    %c0_i32 = arith.constant 0 : i32
    %c0_i32_0 = arith.constant 0 : i32
    return %c0_i32, %arg0 : i32, i32
  }
  func.func @transform_1(%arg0: i32) -> (i32, i32) {
    %c0_i32 = arith.constant 0 : i32
    %c0_i32_0 = arith.constant 0 : i32
    return %arg0, %c0_i32 : i32, i32
  }
  func.func @transform_2(%arg0: i32) -> (i32, i32) {
    %c0_i32 = arith.constant 0 : i32
    %c0_i32_0 = arith.constant 0 : i32
    %c0_i32_1 = arith.constant 0 : i32
    return %c0_i32, %c0_i32_0 : i32, i32
  }
  func.func @transform_3(%arg0: i32) -> (i32, i32) {
    %c0_i32 = arith.constant 0 : i32
    %c0_i32_0 = arith.constant 0 : i32
    %c0_i32_1 = arith.constant 0 : i32
    return %c0_i32, %c0_i32_0 : i32, i32
  }
  func.func @transform_4(%arg0: i32) -> (i32, i32) {
    %c0_i32 = arith.constant 0 : i32
    %c0_i32_0 = arith.constant 0 : i32
    %c0_i32_1 = arith.constant 0 : i32
    return %c0_i32, %c0_i32_0 : i32, i32
  }
  func.func @transform_5(%arg0: i32) -> (i32, i32) {
    %c0_i32 = arith.constant 0 : i32
    %c0_i32_0 = arith.constant 0 : i32
    %c0_i32_1 = arith.constant 0 : i32
    return %c0_i32, %c0_i32_0 : i32, i32
  }
}

</mosaic_0001>

<llo_original>
// kernel: better_cnn_forward.5
$region0: #{better_cnn_forward.5}
  #allocation0 [shape = 'u32[]', space=smem, size = 0x4, offset = 0x4, fixed_abs, tag = 'smem constant byte address 0x4 - core index']
  #allocation1 [shape = 'u32[144,128]{1,0:T(1,128)}', space=vmem, size = 0x12000, scoped, tag = 'internal scratch']
  #allocation2 [shape = 'f32[8,32]{1,0:T(8,128)}', space=vmem, size = 0x1000, scoped, tag = 'scratch operand']
  %s0 = inlined_call_operand.vmem [shape: f32[2,10,10,16], index: 0, kind: input, shape index: {}]
  %s1 = inlined_call_operand.vmem [shape: bf16[9,16,32], index: 1, kind: input, shape index: {}]
  %s2 = inlined_call_operand.vmem [shape: f32[1,32], index: 2, kind: input, shape index: {}]
  %s3 = inlined_call_operand.vmem [shape: f32[2,4,4,32], index: 3, kind: output, shape index: {}]
  %s4 = sld [smem:[#allocation0]]
  $region45: #{better_cnn_forward.5} parent=0
    _
  %s6 = ssub.s32 1, %s4
  %s7 = scalar_select 0, %s6, %s4
  loop: start=0, step=1, limit=10
  $region2: #{better_cnn_forward.5} parent=0 // loop_pre_header
    _
  $region3: #{better_cnn_forward.5} parent=0 // loop_header
    %s9 = sphi 0, %s13
    %p10 = scmp.ge.s32.totalorder %s9, 10
    %s16 = sphi 0, %s28
    %s17 = sphi 0, %s24
    %s18 = sphi 0, %s16
    %s19 = sphi 0, %s17
    %s20 = sphi 0, %s18
    %s21 = sphi 0, %s19
    %s31 = sphi 0, %s33
    %s34 = sphi 0, %s31
    %s35 = sphi 0, %s34
    %s51 = sphi 0, %s35
    %s55 = sphi 0, %s55
    %s57 = sphi 0, %s55
    %s58 = sphi 0, %s57
    %s72 = sphi 0, %s58
    %s76 = sphi 0, %s76
    %s78 = sphi 0, %s76
    %s79 = sphi 0, %s78
    %s93 = sphi 0, %s79
    %s101 = sphi 0, %s103
    %s104 = sphi 0, %s101
    %s105 = sphi 0, %s104
    %s121 = sphi 0, %s105
  $region4: #{better_cnn_forward.5} parent=0 // loop_header_branch
    %12 = sbr.rel (%p10) target = $region8
  $region5: #{better_cnn_forward.5} parent=0 // loop_body
    %s14 = ssub.s32 %s9, 1
    %s15 = ssub.s32 %s9, 2
    %s22 = sadd.s32 1, %s17
    %p23 = scmp.ge.s32.totalorder %s22, 4
    %s24 = scalar_select %p23, 0, %s22
    %s25 = sadd.s32 1, %s16
    %s26 = scalar_select %p23, %s25, %s16
    %p27 = scmp.ge.s32.totalorder %s26, 2
    %s28 = scalar_select %p27, 0, %s26
    %s29 = ssub.s32 %s16, %s28
    %p30 = scmp.eq.s32.totalorder %s29, 0
    %s32 = sadd.s32 %s31, 1
    %s33 = scalar_select %p30, %s31, %s32
    %p36 = pneg %p30
    %p37 = scmp.eq.s32.totalorder %s9, 7
    %p38 = por %p36, %p37
    %p39 = scmp.ne.s32.totalorder %s31, %s34
    %p40 = scmp.eq.s32.totalorder %s9, 0
    %p41 = por %p39, %p40
    %p42 = scmp.ne.s32.totalorder %s31, %s34
    %p43 = scmp.eq.s32.totalorder %s14, 7
    %p44 = por %p42, %p43
    %p45 = scmp.ne.s32.totalorder %s34, %s35
    %p46 = scmp.eq.s32.totalorder %s14, 0
    %p47 = por %p45, %p46
    %p48 = scmp.ne.s32.totalorder %s34, %s35
    %p49 = scmp.eq.s32.totalorder %s15, 7
    %p50 = por %p48, %p49
    %p52 = scmp.ne.s32.totalorder %s35, %s51
    %p53 = scmp.eq.s32.totalorder %s15, 0
    %p54 = por %p52, %p53
    %s56 = sadd.s32 %s55, 1
    %p59 = scmp.eq.s32.totalorder %s9, 7
    %p60 = scmp.ne.s32.totalorder %s55, %s57
    %p61 = scmp.eq.s32.totalorder %s9, 0
    %p62 = por %p60, %p61
    %p63 = scmp.ne.s32.totalorder %s55, %s57
    %p64 = scmp.eq.s32.totalorder %s14, 7
    %p65 = por %p63, %p64
    %p66 = scmp.ne.s32.totalorder %s57, %s58
    %p67 = scmp.eq.s32.totalorder %s14, 0
    %p68 = por %p66, %p67
    %p69 = scmp.ne.s32.totalorder %s57, %s58
    %p70 = scmp.eq.s32.totalorder %s15, 7
    %p71 = por %p69, %p70
    %p73 = scmp.ne.s32.totalorder %s58, %s72
    %p74 = scmp.eq.s32.totalorder %s15, 0
    %p75 = por %p73, %p74
    %s77 = sadd.s32 %s76, 1
    %p80 = scmp.eq.s32.totalorder %s9, 7
    %p81 = scmp.ne.s32.totalorder %s76, %s78
    %p82 = scmp.eq.s32.totalorder %s9, 0
    %p83 = por %p81, %p82
    %p84 = scmp.ne.s32.totalorder %s76, %s78
    %p85 = scmp.eq.s32.totalorder %s14, 7
    %p86 = por %p84, %p85
    %p87 = scmp.ne.s32.totalorder %s78, %s79
    %p88 = scmp.eq.s32.totalorder %s14, 0
    %p89 = por %p87, %p88
    %p90 = scmp.ne.s32.totalorder %s78, %s79
    %p91 = scmp.eq.s32.totalorder %s15, 7
    %p92 = por %p90, %p91
    %p94 = scmp.ne.s32.totalorder %s79, %s93
    %p95 = scmp.eq.s32.totalorder %s15, 0
    %p96 = por %p94, %p95
    %s97 = ssub.s32 %s16, %s28
    %s98 = ssub.s32 %s17, %s24
    %s99 = sor.u32 %s97, %s98
    %p100 = scmp.eq.s32.totalorder %s99, 0
    %s102 = sadd.s32 %s101, 1
    %s103 = scalar_select %p100, %s101, %s102
    %p106 = pneg %p100
    %p107 = scmp.eq.s32.totalorder %s9, 7
    %p108 = por %p106, %p107
    %p109 = scmp.ne.s32.totalorder %s101, %s104
    %p110 = scmp.eq.s32.totalorder %s9, 0
    %p111 = por %p109, %p110
    %p112 = scmp.ne.s32.totalorder %s101, %s104
    %p113 = scmp.eq.s32.totalorder %s14, 7
    %p114 = por %p112, %p113
    %p115 = scmp.ne.s32.totalorder %s104, %s105
    %p116 = scmp.eq.s32.totalorder %s14, 0
    %p117 = por %p115, %p116
    %p118 = scmp.ne.s32.totalorder %s104, %s105
    %p119 = scmp.eq.s32.totalorder %s15, 7
    %p120 = por %p118, %p119
    %p122 = scmp.ne.s32.totalorder %s105, %s121
    %p123 = scmp.eq.s32.totalorder %s15, 0
    %p124 = por %p122, %p123
    %p125 = scmp.le.s32.totalorder 1, %s9
    %p126 = scmp.lt.s32.totalorder %s9, 9
    %p127 = pnand %p125, %p126
    %p128 = pneg %p127
    // Predicated region
    $region9: #{better_cnn_forward.5} parent=5 // pred_check
      _
    $region10: #{better_cnn_forward.5} parent=5 // pred_check_branch
      %130 = sbr.rel (%p127) target = $region12
    $region11: #{better_cnn_forward.5} parent=5 // pred_region
      %s131 = ssub.s32 %s9, 1
      // Predicated region
      $region13: #{better_cnn_forward.5} parent=11 // pred_check
        %p132 = pneg %p68
      $region14: #{better_cnn_forward.5} parent=11 // pred_check_branch
        %134 = sbr.rel (%p132) target = $region16
      $region15: #{better_cnn_forward.5} parent=11 // pred_region
        _
      $region16: #{better_cnn_forward.5} parent=11 // pred_fallthru
        _
      // Predicated region
      $region17: #{better_cnn_forward.5} parent=11 // pred_check
        %p135 = pneg %p89
      $region18: #{better_cnn_forward.5} parent=11 // pred_check_branch
        %137 = sbr.rel (%p135) target = $region20
      $region19: #{better_cnn_forward.5} parent=11 // pred_region
        _
      $region20: #{better_cnn_forward.5} parent=11 // pred_fallthru
        _
    $region12: #{better_cnn_forward.5} parent=5 // pred_fallthru
      _
    %p138 = scmp.lt.s32.totalorder %s9, 8
    // Predicated region
    $region21: #{better_cnn_forward.5} parent=5 // pred_check
      %p139 = pneg %p138
    $region22: #{better_cnn_forward.5} parent=5 // pred_check_branch
      %141 = sbr.rel (%p139) target = $region24
    $region23: #{better_cnn_forward.5} parent=5 // pred_region
      // Predicated region
      $region25: #{better_cnn_forward.5} parent=23 // pred_check
        %p142 = pneg %p41
      $region26: #{better_cnn_forward.5} parent=23 // pred_check_branch
        %144 = sbr.rel (%p142) target = $region28
      $region27: #{better_cnn_forward.5} parent=23 // pred_region
        %p145 = scmp.lt.s32.totalorder %s16, 1
        %s146 = scalar_select %p145, %s16, 1
        %s147 = smul.addr %s146, 20
        %s148 = smul.addr %s147, 8
        %s149 = scalar_lea.vmem %s0, %s148
      $region28: #{better_cnn_forward.5} parent=23 // pred_fallthru
        _
    $region24: #{better_cnn_forward.5} parent=5 // pred_fallthru
      _
    %p150 = scmp.le.s32.totalorder 1, %s9
    %p151 = scmp.lt.s32.totalorder %s9, 9
    %p152 = pnand %p150, %p151
    %p153 = pneg %p152
    // Predicated region
    $region29: #{better_cnn_forward.5} parent=5 // pred_check
      _
    $region30: #{better_cnn_forward.5} parent=5 // pred_check_branch
      %155 = sbr.rel (%p152) target = $region32
    $region31: #{better_cnn_forward.5} parent=5 // pred_region
      %s156 = ssub.s32 %s9, 1
      %p157 = scmp.lt.s32.totalorder %s18, 1
      %s158 = scalar_select %p157, %s18, 1
      %s159 = smul.addr %s158, 20
      %s160 = smul.addr %s159, 8
      %s161 = scalar_lea.vmem %s0, %s160
      %p162 = pneg %p47
      %p163 = pneg %p44
      %p164 = pneg %p68
      %p165 = pneg %p65
      %p166 = pneg %p89
      %p167 = pneg %p86
      %p168 = pneg %p117
      %p169 = pneg %p114
      %p170 = scmp.lt.s32.totalorder %s18, 1
      %s171 = scalar_select %p170, %s18, 1
      %p172 = scmp.lt.s32.totalorder %s19, 3
      %s173 = scalar_select %p172, %s19, 3
      %s174 = smul.addr %s171, 4
      %s175 = sadd.s32 %s173, %s174
      %s176 = smul.addr %s175, 4
      %s177 = scalar_lea.vmem %s3, %s176
      %p178 = scmp.lt.s32.totalorder %s18, 1
      %s179 = scalar_select %p178, %s18, 1
      %s180 = smul.addr %s179, 20
      %s181 = smul.addr %s180, 8
      %s182 = scalar_lea.vmem %s0, %s181
      %p183 = scmp.lt.s32.totalorder %s18, 1
      %s184 = scalar_select %p183, %s18, 1
      %p185 = scmp.lt.s32.totalorder %s19, 3
      %s186 = scalar_select %p185, %s19, 3
      %s187 = smul.addr %s184, 4
      %s188 = sadd.s32 %s186, %s187
      %s189 = smul.addr %s188, 4
      %s190 = scalar_lea.vmem %s3, %s189
      %v192 = vld [vmem:[%s2] sm:$0x1]
      %s193 = smul.u32 %s19, 2
      %s194 = smul.u32 %s193, 16
      %s195 = scalar_lea.vmem %s182, %s194
      %v196 = vld [vmem:[%s195] sm:$0xff]
      %v197 = vpack.c.bf16 %v196, %v196
      %v198 = vld [vmem:[%s1] sm:$0xf]
      %v199 = vld [vmem:[%s1 + $0x4] sm:$0xf]
      %v200 = vld [vmem:[%s195 + $0x1] sm:$0xff]
      %v201 = vpack.c.bf16 %v200, %v200
      %s202 = scalar_lea.vmem %s1, 8
      %v203 = vld [vmem:[%s202] sm:$0xf]
      %v204 = vld [vmem:[%s202 + $0x4] sm:$0xf]
      %v207 = vunpack.c.l.b16 %v203
      %v208 = vunpack.c.l.b16 %v204
      %v209 = vpack.c.b16 %v208, %v207
      %vm211 = vcmask 130048
      %v213 = vsel %vm211, %v201, 0
      %215 = vmatprep.subr.bf16.mxu0 0
      %216 = vmatpush1.bf16.msra.mxu0 %v209
      %217 = vmatprep.subr.bf16.mxu0 0
      %218 = vmatpush1.bf16.msra.mxu0 0
      %219 = vmatprep.subr.bf16.mxu0 0
      %220 = vmatpush1.bf16.msra.mxu0 0
      %221 = vmatprep.subr.bf16.mxu0 0
      %222 = vmatpush1.bf16.msra.mxu0 0
      %223 = vmatprep.subr.bf16.mxu0 0
      %224 = vmatpush1.bf16.msra.mxu0 0
      %225 = vmatprep.subr.bf16.mxu0 0
      %226 = vmatpush1.bf16.msra.mxu0 0
      %227 = vmatprep.subr.bf16.mxu0 0
      %228 = vmatpush1.bf16.msra.mxu0 0
      %229 = vmatprep.subr.bf16.mxu0 0
      %230 = vmatpush1.bf16.msra.mxu0 0
      %231 = vmatprep.subr.bf16.mxu0 0
      %232 = vmatpush1.bf16.msra.mxu0 0
      %233 = vmatprep.subr.bf16.mxu0 0
      %234 = vmatpush1.bf16.msra.mxu0 0
      %235 = vmatprep.subr.bf16.mxu0 0
      %236 = vmatpush1.bf16.msra.mxu0 0
      %237 = vmatprep.subr.bf16.mxu0 0
      %238 = vmatpush1.bf16.msra.mxu0 0
      %239 = vmatprep.subr.bf16.mxu0 0
      %240 = vmatpush1.bf16.msra.mxu0 0
      %241 = vmatprep.subr.bf16.mxu0 0
      %242 = vmatpush1.bf16.msra.mxu0 0
      %243 = vmatprep.subr.bf16.mxu0 0
      %244 = vmatpush1.bf16.msra.mxu0 0
      %245 = vmatprep.subr.bf16.mxu0 0
      %246 = vmatpush1.bf16.msra.mxu0 0
      %247 = vmatprep.mubr.bf16.mxu0 0
      %248 = vmatmul.mubr.bf16.gmra.mrb[0].mxu0 %v213
      %v249 = vpop.f32.mrb[0].mxu0
      %v250 = vadd.f32 0.0, %v249
      %v251 = vpop.f32.mrb[0].mxu0
      %v252 = vpop.f32.mrb[0].mxu0
      %v253 = vpop.f32.mrb[0].mxu0
      %254 = vdwg.mxu0
      %v257 = vunpack.c.l.b16 %v198
      %v258 = vunpack.c.l.b16 %v199
      %v259 = vpack.c.b16 %v258, %v257
      %v262 = vsel %vm211, %v197, 0
      %264 = vmatprep.subr.bf16.mxu0 0
      %265 = vmatpush1.bf16.msra.mxu0 %v259
      %266 = vmatprep.subr.bf16.mxu0 0
      %267 = vmatpush1.bf16.msra.mxu0 0
      %268 = vmatprep.subr.bf16.mxu0 0
      %269 = vmatpush1.bf16.msra.mxu0 0
      %270 = vmatprep.subr.bf16.mxu0 0
      %271 = vmatpush1.bf16.msra.mxu0 0
      %272 = vmatprep.subr.bf16.mxu0 0
      %273 = vmatpush1.bf16.msra.mxu0 0
      %274 = vmatprep.subr.bf16.mxu0 0
      %275 = vmatpush1.bf16.msra.mxu0 0
      %276 = vmatprep.subr.bf16.mxu0 0
      %277 = vmatpush1.bf16.msra.mxu0 0
      %278 = vmatprep.subr.bf16.mxu0 0
      %279 = vmatpush1.bf16.msra.mxu0 0
      %280 = vmatprep.subr.bf16.mxu0 0
      %281 = vmatpush1.bf16.msra.mxu0 0
      %282 = vmatprep.subr.bf16.mxu0 0
      %283 = vmatpush1.bf16.msra.mxu0 0
      %284 = vmatprep.subr.bf16.mxu0 0
      %285 = vmatpush1.bf16.msra.mxu0 0
      %286 = vmatprep.subr.bf16.mxu0 0
      %287 = vmatpush1.bf16.msra.mxu0 0
      %288 = vmatprep.subr.bf16.mxu0 0
      %289 = vmatpush1.bf16.msra.mxu0 0
      %290 = vmatprep.subr.bf16.mxu0 0
      %291 = vmatpush1.bf16.msra.mxu0 0
      %292 = vmatprep.subr.bf16.mxu0 0
      %293 = vmatpush1.bf16.msra.mxu0 0
      %294 = vmatprep.subr.bf16.mxu0 0
      %295 = vmatpush1.bf16.msra.mxu0 0
      %296 = vmatprep.mubr.bf16.mxu0 0
      %297 = vmatmul.mubr.bf16.gmra.mrb[0].mxu0 %v262
      %v298 = vpop.f32.mrb[0].mxu0
      %v299 = vadd.f32 %v250, %v298
      %v300 = vpop.f32.mrb[0].mxu0
      %v301 = vpop.f32.mrb[0].mxu0
      %v302 = vpop.f32.mrb[0].mxu0
      %303 = vdwg.mxu0
      %v304 = vld [vmem:[%s195 + $0x2] sm:$0xff]
      %v305 = vpack.c.bf16 %v304, %v304
      %s306 = scalar_lea.vmem %s1, 16
      %v307 = vld [vmem:[%s306] sm:$0xf]
      %v308 = vld [vmem:[%s306 + $0x4] sm:$0xf]
      %v311 = vunpack.c.l.b16 %v307
      %v312 = vunpack.c.l.b16 %v308
      %v313 = vpack.c.b16 %v312, %v311
      %v316 = vsel %vm211, %v305, 0
      %318 = vmatprep.subr.bf16.mxu0 0
      %319 = vmatpush1.bf16.msra.mxu0 %v313
      %320 = vmatprep.subr.bf16.mxu0 0
      %321 = vmatpush1.bf16.msra.mxu0 0
      %322 = vmatprep.subr.bf16.mxu0 0
      %323 = vmatpush1.bf16.msra.mxu0 0
      %324 = vmatprep.subr.bf16.mxu0 0
      %325 = vmatpush1.bf16.msra.mxu0 0
      %326 = vmatprep.subr.bf16.mxu0 0
      %327 = vmatpush1.bf16.msra.mxu0 0
      %328 = vmatprep.subr.bf16.mxu0 0
      %329 = vmatpush1.bf16.msra.mxu0 0
      %330 = vmatprep.subr.bf16.mxu0 0
      %331 = vmatpush1.bf16.msra.mxu0 0
      %332 = vmatprep.subr.bf16.mxu0 0
      %333 = vmatpush1.bf16.msra.mxu0 0
      %334 = vmatprep.subr.bf16.mxu0 0
      %335 = vmatpush1.bf16.msra.mxu0 0
      %336 = vmatprep.subr.bf16.mxu0 0
      %337 = vmatpush1.bf16.msra.mxu0 0
      %338 = vmatprep.subr.bf16.mxu0 0
      %339 = vmatpush1.bf16.msra.mxu0 0
      %340 = vmatprep.subr.bf16.mxu0 0
      %341 = vmatpush1.bf16.msra.mxu0 0
      %342 = vmatprep.subr.bf16.mxu0 0
      %343 = vmatpush1.bf16.msra.mxu0 0
      %344 = vmatprep.subr.bf16.mxu0 0
      %345 = vmatpush1.bf16.msra.mxu0 0
      %346 = vmatprep.subr.bf16.mxu0 0
      %347 = vmatpush1.bf16.msra.mxu0 0
      %348 = vmatprep.subr.bf16.mxu0 0
      %349 = vmatpush1.bf16.msra.mxu0 0
      %350 = vmatprep.mubr.bf16.mxu0 0
      %351 = vmatmul.mubr.bf16.gmra.mrb[0].mxu0 %v316
      %v352 = vpop.f32.mrb[0].mxu0
      %v353 = vadd.f32 0.0, %v352
      %v354 = vpop.f32.mrb[0].mxu0
      %v355 = vpop.f32.mrb[0].mxu0
      %v356 = vpop.f32.mrb[0].mxu0
      %357 = vdwg.mxu0
      %v358 = vadd.f32 %v299, %v353
      %s359 = sadd.s32 %s193, 1
      %s360 = smul.u32 %s359, 16
      %s361 = scalar_lea.vmem %s182, %s360
      %v362 = vld [vmem:[%s361] sm:$0xff]
      %v363 = vpack.c.bf16 %v362, %v362
      %s364 = scalar_lea.vmem %s1, 24
      %v365 = vld [vmem:[%s364] sm:$0xf]
      %v366 = vld [vmem:[%s364 + $0x4] sm:$0xf]
      %v369 = vunpack.c.l.b16 %v365
      %v370 = vunpack.c.l.b16 %v366
      %v371 = vpack.c.b16 %v370, %v369
      %v374 = vsel %vm211, %v363, 0
      %376 = vmatprep.subr.bf16.mxu0 0
      %377 = vmatpush1.bf16.msra.mxu0 %v371
      %378 = vmatprep.subr.bf16.mxu0 0
      %379 = vmatpush1.bf16.msra.mxu0 0
      %380 = vmatprep.subr.bf16.mxu0 0
      %381 = vmatpush1.bf16.msra.mxu0 0
      %382 = vmatprep.subr.bf16.mxu0 0
      %383 = vmatpush1.bf16.msra.mxu0 0
      %384 = vmatprep.subr.bf16.mxu0 0
      %385 = vmatpush1.bf16.msra.mxu0 0
      %386 = vmatprep.subr.bf16.mxu0 0
      %387 = vmatpush1.bf16.msra.mxu0 0
      %388 = vmatprep.subr.bf16.mxu0 0
      %389 = vmatpush1.bf16.msra.mxu0 0
      %390 = vmatprep.subr.bf16.mxu0 0
      %391 = vmatpush1.bf16.msra.mxu0 0
      %392 = vmatprep.subr.bf16.mxu0 0
      %393 = vmatpush1.bf16.msra.mxu0 0
      %394 = vmatprep.subr.bf16.mxu0 0
      %395 = vmatpush1.bf16.msra.mxu0 0
      %396 = vmatprep.subr.bf16.mxu0 0
      %397 = vmatpush1.bf16.msra.mxu0 0
      %398 = vmatprep.subr.bf16.mxu0 0
      %399 = vmatpush1.bf16.msra.mxu0 0
      %400 = vmatprep.subr.bf16.mxu0 0
      %401 = vmatpush1.bf16.msra.mxu0 0
      %402 = vmatprep.subr.bf16.mxu0 0
      %403 = vmatpush1.bf16.msra.mxu0 0
      %404 = vmatprep.subr.bf16.mxu0 0
      %405 = vmatpush1.bf16.msra.mxu0 0
      %406 = vmatprep.subr.bf16.mxu0 0
      %407 = vmatpush1.bf16.msra.mxu0 0
      %408 = vmatprep.mubr.bf16.mxu0 0
      %409 = vmatmul.mubr.bf16.gmra.mrb[0].mxu0 %v374
      %v410 = vpop.f32.mrb[0].mxu0
      %v411 = vadd.f32 0.0, %v410
      %v412 = vpop.f32.mrb[0].mxu0
      %v413 = vpop.f32.mrb[0].mxu0
      %v414 = vpop.f32.mrb[0].mxu0
      %415 = vdwg.mxu0
      %v416 = vadd.f32 %v358, %v411
      %v417 = vld [vmem:[%s361 + $0x1] sm:$0xff]
      %v418 = vpack.c.bf16 %v417, %v417
      %s419 = scalar_lea.vmem %s1, 32
      %v420 = vld [vmem:[%s419] sm:$0xf]
      %v421 = vld [vmem:[%s419 + $0x4] sm:$0xf]
      %v424 = vunpack.c.l.b16 %v420
      %v425 = vunpack.c.l.b16 %v421
      %v426 = vpack.c.b16 %v425, %v424
      %v429 = vsel %vm211, %v418, 0
      %431 = vmatprep.subr.bf16.mxu0 0
      %432 = vmatpush1.bf16.msra.mxu0 %v426
      %433 = vmatprep.subr.bf16.mxu0 0
      %434 = vmatpush1.bf16.msra.mxu0 0
      %435 = vmatprep.subr.bf16.mxu0 0
      %436 = vmatpush1.bf16.msra.mxu0 0
      %437 = vmatprep.subr.bf16.mxu0 0
      %438 = vmatpush1.bf16.msra.mxu0 0
      %439 = vmatprep.subr.bf16.mxu0 0
      %440 = vmatpush1.bf16.msra.mxu0 0
      %441 = vmatprep.subr.bf16.mxu0 0
      %442 = vmatpush1.bf16.msra.mxu0 0
      %443 = vmatprep.subr.bf16.mxu0 0
      %444 = vmatpush1.bf16.msra.mxu0 0
      %445 = vmatprep.subr.bf16.mxu0 0
      %446 = vmatpush1.bf16.msra.mxu0 0
      %447 = vmatprep.subr.bf16.mxu0 0
      %448 = vmatpush1.bf16.msra.mxu0 0
      %449 = vmatprep.subr.bf16.mxu0 0
      %450 = vmatpush1.bf16.msra.mxu0 0
      %451 = vmatprep.subr.bf16.mxu0 0
      %452 = vmatpush1.bf16.msra.mxu0 0
      %453 = vmatprep.subr.bf16.mxu0 0
      %454 = vmatpush1.bf16.msra.mxu0 0
      %455 = vmatprep.subr.bf16.mxu0 0
      %456 = vmatpush1.bf16.msra.mxu0 0
      %457 = vmatprep.subr.bf16.mxu0 0
      %458 = vmatpush1.bf16.msra.mxu0 0
      %459 = vmatprep.subr.bf16.mxu0 0
      %460 = vmatpush1.bf16.msra.mxu0 0
      %461 = vmatprep.subr.bf16.mxu0 0
      %462 = vmatpush1.bf16.msra.mxu0 0
      %463 = vmatprep.mubr.bf16.mxu0 0
      %464 = vmatmul.mubr.bf16.gmra.mrb[0].mxu0 %v429
      %v465 = vpop.f32.mrb[0].mxu0
      %v466 = vadd.f32 0.0, %v465
      %v467 = vpop.f32.mrb[0].mxu0
      %v468 = vpop.f32.mrb[0].mxu0
      %v469 = vpop.f32.mrb[0].mxu0
      %470 = vdwg.mxu0
      %v471 = vadd.f32 %v416, %v466
      %v472 = vld [vmem:[%s361 + $0x2] sm:$0xff]
      %v473 = vpack.c.bf16 %v472, %v472
      %s474 = scalar_lea.vmem %s1, 40
      %v475 = vld [vmem:[%s474] sm:$0xf]
      %v476 = vld [vmem:[%s474 + $0x4] sm:$0xf]
      %v479 = vunpack.c.l.b16 %v475
      %v480 = vunpack.c.l.b16 %v476
      %v481 = vpack.c.b16 %v480, %v479
      %v484 = vsel %vm211, %v473, 0
      %486 = vmatprep.subr.bf16.mxu0 0
      %487 = vmatpush1.bf16.msra.mxu0 %v481
      %488 = vmatprep.subr.bf16.mxu0 0
      %489 = vmatpush1.bf16.msra.mxu0 0
      %490 = vmatprep.subr.bf16.mxu0 0
      %491 = vmatpush1.bf16.msra.mxu0 0
      %492 = vmatprep.subr.bf16.mxu0 0
      %493 = vmatpush1.bf16.msra.mxu0 0
      %494 = vmatprep.subr.bf16.mxu0 0
      %495 = vmatpush1.bf16.msra.mxu0 0
      %496 = vmatprep.subr.bf16.mxu0 0
      %497 = vmatpush1.bf16.msra.mxu0 0
      %498 = vmatprep.subr.bf16.mxu0 0
      %499 = vmatpush1.bf16.msra.mxu0 0
      %500 = vmatprep.subr.bf16.mxu0 0
      %501 = vmatpush1.bf16.msra.mxu0 0
      %502 = vmatprep.subr.bf16.mxu0 0
      %503 = vmatpush1.bf16.msra.mxu0 0
      %504 = vmatprep.subr.bf16.mxu0 0
      %505 = vmatpush1.bf16.msra.mxu0 0
      %506 = vmatprep.subr.bf16.mxu0 0
      %507 = vmatpush1.bf16.msra.mxu0 0
      %508 = vmatprep.subr.bf16.mxu0 0
      %509 = vmatpush1.bf16.msra.mxu0 0
      %510 = vmatprep.subr.bf16.mxu0 0
      %511 = vmatpush1.bf16.msra.mxu0 0
      %512 = vmatprep.subr.bf16.mxu0 0
      %513 = vmatpush1.bf16.msra.mxu0 0
      %514 = vmatprep.subr.bf16.mxu0 0
      %515 = vmatpush1.bf16.msra.mxu0 0
      %516 = vmatprep.subr.bf16.mxu0 0
      %517 = vmatpush1.bf16.msra.mxu0 0
      %518 = vmatprep.mubr.bf16.mxu0 0
      %519 = vmatmul.mubr.bf16.gmra.mrb[0].mxu0 %v484
      %v520 = vpop.f32.mrb[0].mxu0
      %v521 = vadd.f32 0.0, %v520
      %v522 = vpop.f32.mrb[0].mxu0
      %v523 = vpop.f32.mrb[0].mxu0
      %v524 = vpop.f32.mrb[0].mxu0
      %525 = vdwg.mxu0
      %v526 = vadd.f32 %v471, %v521
      %s527 = sadd.s32 %s193, 2
      %s528 = smul.u32 %s527, 16
      %s529 = scalar_lea.vmem %s182, %s528
      %v530 = vld [vmem:[%s529] sm:$0xff]
      %v531 = vpack.c.bf16 %v530, %v530
      %s532 = scalar_lea.vmem %s1, 48
      %v533 = vld [vmem:[%s532] sm:$0xf]
      %v534 = vld [vmem:[%s532 + $0x4] sm:$0xf]
      %v537 = vunpack.c.l.b16 %v533
      %v538 = vunpack.c.l.b16 %v534
      %v539 = vpack.c.b16 %v538, %v537
      %v542 = vsel %vm211, %v531, 0
      %544 = vmatprep.subr.bf16.mxu0 0
      %545 = vmatpush1.bf16.msra.mxu0 %v539
      %546 = vmatprep.subr.bf16.mxu0 0
      %547 = vmatpush1.bf16.msra.mxu0 0
      %548 = vmatprep.subr.bf16.mxu0 0
      %549 = vmatpush1.bf16.msra.mxu0 0
      %550 = vmatprep.subr.bf16.mxu0 0
      %551 = vmatpush1.bf16.msra.mxu0 0
      %552 = vmatprep.subr.bf16.mxu0 0
      %553 = vmatpush1.bf16.msra.mxu0 0
      %554 = vmatprep.subr.bf16.mxu0 0
      %555 = vmatpush1.bf16.msra.mxu0 0
      %556 = vmatprep.subr.bf16.mxu0 0
      %557 = vmatpush1.bf16.msra.mxu0 0
      %558 = vmatprep.subr.bf16.mxu0 0
      %559 = vmatpush1.bf16.msra.mxu0 0
      %560 = vmatprep.subr.bf16.mxu0 0
      %561 = vmatpush1.bf16.msra.mxu0 0
      %562 = vmatprep.subr.bf16.mxu0 0
      %563 = vmatpush1.bf16.msra.mxu0 0
      %564 = vmatprep.subr.bf16.mxu0 0
      %565 = vmatpush1.bf16.msra.mxu0 0
      %566 = vmatprep.subr.bf16.mxu0 0
      %567 = vmatpush1.bf16.msra.mxu0 0
      %568 = vmatprep.subr.bf16.mxu0 0
      %569 = vmatpush1.bf16.msra.mxu0 0
      %570 = vmatprep.subr.bf16.mxu0 0
      %571 = vmatpush1.bf16.msra.mxu0 0
      %572 = vmatprep.subr.bf16.mxu0 0
      %573 = vmatpush1.bf16.msra.mxu0 0
      %574 = vmatprep.subr.bf16.mxu0 0
      %575 = vmatpush1.bf16.msra.mxu0 0
      %576 = vmatprep.mubr.bf16.mxu0 0
      %577 = vmatmul.mubr.bf16.gmra.mrb[0].mxu0 %v542
      %v578 = vpop.f32.mrb[0].mxu0
      %v579 = vadd.f32 0.0, %v578
      %v580 = vpop.f32.mrb[0].mxu0
      %v581 = vpop.f32.mrb[0].mxu0
      %v582 = vpop.f32.mrb[0].mxu0
      %583 = vdwg.mxu0
      %v584 = vadd.f32 %v526, %v579
      %v585 = vld [vmem:[%s529 + $0x1] sm:$0xff]
      %v586 = vpack.c.bf16 %v585, %v585
      %s587 = scalar_lea.vmem %s1, 56
      %v588 = vld [vmem:[%s587] sm:$0xf]
      %v589 = vld [vmem:[%s587 + $0x4] sm:$0xf]
      %v592 = vunpack.c.l.b16 %v588
      %v593 = vunpack.c.l.b16 %v589
      %v594 = vpack.c.b16 %v593, %v592
      %v597 = vsel %vm211, %v586, 0
      %599 = vmatprep.subr.bf16.mxu0 0
      %600 = vmatpush1.bf16.msra.mxu0 %v594
      %601 = vmatprep.subr.bf16.mxu0 0
      %602 = vmatpush1.bf16.msra.mxu0 0
      %603 = vmatprep.subr.bf16.mxu0 0
      %604 = vmatpush1.bf16.msra.mxu0 0
      %605 = vmatprep.subr.bf16.mxu0 0
      %606 = vmatpush1.bf16.msra.mxu0 0
      %607 = vmatprep.subr.bf16.mxu0 0
      %608 = vmatpush1.bf16.msra.mxu0 0
      %609 = vmatprep.subr.bf16.mxu0 0
      %610 = vmatpush1.bf16.msra.mxu0 0
      %611 = vmatprep.subr.bf16.mxu0 0
      %612 = vmatpush1.bf16.msra.mxu0 0
      %613 = vmatprep.subr.bf16.mxu0 0
      %614 = vmatpush1.bf16.msra.mxu0 0
      %615 = vmatprep.subr.bf16.mxu0 0
      %616 = vmatpush1.bf16.msra.mxu0 0
      %617 = vmatprep.subr.bf16.mxu0 0
      %618 = vmatpush1.bf16.msra.mxu0 0
      %619 = vmatprep.subr.bf16.mxu0 0
      %620 = vmatpush1.bf16.msra.mxu0 0
      %621 = vmatprep.subr.bf16.mxu0 0
      %622 = vmatpush1.bf16.msra.mxu0 0
      %623 = vmatprep.subr.bf16.mxu0 0
      %624 = vmatpush1.bf16.msra.mxu0 0
      %625 = vmatprep.subr.bf16.mxu0 0
      %626 = vmatpush1.bf16.msra.mxu0 0
      %627 = vmatprep.subr.bf16.mxu0 0
      %628 = vmatpush1.bf16.msra.mxu0 0
      %629 = vmatprep.subr.bf16.mxu0 0
      %630 = vmatpush1.bf16.msra.mxu0 0
      %631 = vmatprep.mubr.bf16.mxu0 0
      %632 = vmatmul.mubr.bf16.gmra.mrb[0].mxu0 %v597
      %v633 = vpop.f32.mrb[0].mxu0
      %v634 = vadd.f32 0.0, %v633
      %v635 = vpop.f32.mrb[0].mxu0
      %v636 = vpop.f32.mrb[0].mxu0
      %v637 = vpop.f32.mrb[0].mxu0
      %638 = vdwg.mxu0
      %v639 = vadd.f32 %v584, %v634
      %v640 = vld [vmem:[%s529 + $0x2] sm:$0xff]
      %v641 = vpack.c.bf16 %v640, %v640
      %s642 = scalar_lea.vmem %s1, 64
      %v643 = vld [vmem:[%s642] sm:$0xf]
      %v644 = vld [vmem:[%s642 + $0x4] sm:$0xf]
      %v647 = vunpack.c.l.b16 %v643
      %v648 = vunpack.c.l.b16 %v644
      %v649 = vpack.c.b16 %v648, %v647
      %v652 = vsel %vm211, %v641, 0
      %654 = vmatprep.subr.bf16.mxu0 0
      %655 = vmatpush1.bf16.msra.mxu0 %v649
      %656 = vmatprep.subr.bf16.mxu0 0
      %657 = vmatpush1.bf16.msra.mxu0 0
      %658 = vmatprep.subr.bf16.mxu0 0
      %659 = vmatpush1.bf16.msra.mxu0 0
      %660 = vmatprep.subr.bf16.mxu0 0
      %661 = vmatpush1.bf16.msra.mxu0 0
      %662 = vmatprep.subr.bf16.mxu0 0
      %663 = vmatpush1.bf16.msra.mxu0 0
      %664 = vmatprep.subr.bf16.mxu0 0
      %665 = vmatpush1.bf16.msra.mxu0 0
      %666 = vmatprep.subr.bf16.mxu0 0
      %667 = vmatpush1.bf16.msra.mxu0 0
      %668 = vmatprep.subr.bf16.mxu0 0
      %669 = vmatpush1.bf16.msra.mxu0 0
      %670 = vmatprep.subr.bf16.mxu0 0
      %671 = vmatpush1.bf16.msra.mxu0 0
      %672 = vmatprep.subr.bf16.mxu0 0
      %673 = vmatpush1.bf16.msra.mxu0 0
      %674 = vmatprep.subr.bf16.mxu0 0
      %675 = vmatpush1.bf16.msra.mxu0 0
      %676 = vmatprep.subr.bf16.mxu0 0
      %677 = vmatpush1.bf16.msra.mxu0 0
      %678 = vmatprep.subr.bf16.mxu0 0
      %679 = vmatpush1.bf16.msra.mxu0 0
      %680 = vmatprep.subr.bf16.mxu0 0
      %681 = vmatpush1.bf16.msra.mxu0 0
      %682 = vmatprep.subr.bf16.mxu0 0
      %683 = vmatpush1.bf16.msra.mxu0 0
      %684 = vmatprep.subr.bf16.mxu0 0
      %685 = vmatpush1.bf16.msra.mxu0 0
      %686 = vmatprep.mubr.bf16.mxu0 0
      %687 = vmatmul.mubr.bf16.gmra.mrb[0].mxu0 %v652
      %v688 = vpop.f32.mrb[0].mxu0
      %v689 = vadd.f32 0.0, %v688
      %v690 = vpop.f32.mrb[0].mxu0
      %v691 = vpop.f32.mrb[0].mxu0
      %v692 = vpop.f32.mrb[0].mxu0
      %693 = vdwg.mxu0
      %v694 = vadd.f32 %v639, %v689
      %v696 = vlaneseq
      %v697 = vshrl.u32 %v696, 7
      %v698 = vsub.s32 0, %v697
      %v699 = vrot.slane %v192, %v698
      %v701 = vadd.f32 %v694, %v699
      %v702 = vmax.f32 %v701, 0.0
      %703 = vmatprep.subr.bf16.mxu0 0
      %704 = vmatpush1.bf16.msra.mxu0 %v209
      %705 = vmatprep.subr.bf16.mxu0 0
      %706 = vmatpush1.bf16.msra.mxu0 0
      %707 = vmatprep.subr.bf16.mxu0 0
      %708 = vmatpush1.bf16.msra.mxu0 0
      %709 = vmatprep.subr.bf16.mxu0 0
      %710 = vmatpush1.bf16.msra.mxu0 0
      %711 = vmatprep.subr.bf16.mxu0 0
      %712 = vmatpush1.bf16.msra.mxu0 0
      %713 = vmatprep.subr.bf16.mxu0 0
      %714 = vmatpush1.bf16.msra.mxu0 0
      %715 = vmatprep.subr.bf16.mxu0 0
      %716 = vmatpush1.bf16.msra.mxu0 0
      %717 = vmatprep.subr.bf16.mxu0 0
      %718 = vmatpush1.bf16.msra.mxu0 0
      %719 = vmatprep.subr.bf16.mxu0 0
      %720 = vmatpush1.bf16.msra.mxu0 0
      %721 = vmatprep.subr.bf16.mxu0 0
      %722 = vmatpush1.bf16.msra.mxu0 0
      %723 = vmatprep.subr.bf16.mxu0 0
      %724 = vmatpush1.bf16.msra.mxu0 0
      %725 = vmatprep.subr.bf16.mxu0 0
      %726 = vmatpush1.bf16.msra.mxu0 0
      %727 = vmatprep.subr.bf16.mxu0 0
      %728 = vmatpush1.bf16.msra.mxu0 0
      %729 = vmatprep.subr.bf16.mxu0 0
      %730 = vmatpush1.bf16.msra.mxu0 0
      %731 = vmatprep.subr.bf16.mxu0 0
      %732 = vmatpush1.bf16.msra.mxu0 0
      %733 = vmatprep.subr.bf16.mxu0 0
      %734 = vmatpush1.bf16.msra.mxu0 0
      %735 = vmatprep.mubr.bf16.mxu0 0
      %736 = vmatmul.mubr.bf16.gmra.mrb[0].mxu0 %v429
      %v737 = vpop.f32.mrb[0].mxu0
      %v738 = vadd.f32 0.0, %v737
      %v739 = vpop.f32.mrb[0].mxu0
      %v740 = vpop.f32.mrb[0].mxu0
      %v741 = vpop.f32.mrb[0].mxu0
      %742 = vdwg.mxu0
      %743 = vmatprep.subr.bf16.mxu0 0
      %744 = vmatpush1.bf16.msra.mxu0 %v259
      %745 = vmatprep.subr.bf16.mxu0 0
      %746 = vmatpush1.bf16.msra.mxu0 0
      %747 = vmatprep.subr.bf16.mxu0 0
      %748 = vmatpush1.bf16.msra.mxu0 0
      %749 = vmatprep.subr.bf16.mxu0 0
      %750 = vmatpush1.bf16.msra.mxu0 0
      %751 = vmatprep.subr.bf16.mxu0 0
      %752 = vmatpush1.bf16.msra.mxu0 0
      %753 = vmatprep.subr.bf16.mxu0 0
      %754 = vmatpush1.bf16.msra.mxu0 0
      %755 = vmatprep.subr.bf16.mxu0 0
      %756 = vmatpush1.bf16.msra.mxu0 0
      %757 = vmatprep.subr.bf16.mxu0 0
      %758 = vmatpush1.bf16.msra.mxu0 0
      %759 = vmatprep.subr.bf16.mxu0 0
      %760 = vmatpush1.bf16.msra.mxu0 0
      %761 = vmatprep.subr.bf16.mxu0 0
      %762 = vmatpush1.bf16.msra.mxu0 0
      %763 = vmatprep.subr.bf16.mxu0 0
      %764 = vmatpush1.bf16.msra.mxu0 0
      %765 = vmatprep.subr.bf16.mxu0 0
      %766 = vmatpush1.bf16.msra.mxu0 0
      %767 = vmatprep.subr.bf16.mxu0 0
      %768 = vmatpush1.bf16.msra.mxu0 0
      %769 = vmatprep.subr.bf16.mxu0 0
      %770 = vmatpush1.bf16.msra.mxu0 0
      %771 = vmatprep.subr.bf16.mxu0 0
      %772 = vmatpush1.bf16.msra.mxu0 0
      %773 = vmatprep.subr.bf16.mxu0 0
      %774 = vmatpush1.bf16.msra.mxu0 0
      %775 = vmatprep.mubr.bf16.mxu0 0
      %776 = vmatmul.mubr.bf16.gmra.mrb[0].mxu0 %v374
      %v777 = vpop.f32.mrb[0].mxu0
      %v778 = vadd.f32 %v738, %v777
      %v779 = vpop.f32.mrb[0].mxu0
      %v780 = vpop.f32.mrb[0].mxu0
      %v781 = vpop.f32.mrb[0].mxu0
      %782 = vdwg.mxu0
      %783 = vmatprep.subr.bf16.mxu0 0
      %784 = vmatpush1.bf16.msra.mxu0 %v313
      %785 = vmatprep.subr.bf16.mxu0 0
      %786 = vmatpush1.bf16.msra.mxu0 0
      %787 = vmatprep.subr.bf16.mxu0 0
      %788 = vmatpush1.bf16.msra.mxu0 0
      %789 = vmatprep.subr.bf16.mxu0 0
      %790 = vmatpush1.bf16.msra.mxu0 0
      %791 = vmatprep.subr.bf16.mxu0 0
      %792 = vmatpush1.bf16.msra.mxu0 0
      %793 = vmatprep.subr.bf16.mxu0 0
      %794 = vmatpush1.bf16.msra.mxu0 0
      %795 = vmatprep.subr.bf16.mxu0 0
      %796 = vmatpush1.bf16.msra.mxu0 0
      %797 = vmatprep.subr.bf16.mxu0 0
      %798 = vmatpush1.bf16.msra.mxu0 0
      %799 = vmatprep.subr.bf16.mxu0 0
      %800 = vmatpush1.bf16.msra.mxu0 0
      %801 = vmatprep.subr.bf16.mxu0 0
      %802 = vmatpush1.bf16.msra.mxu0 0
      %803 = vmatprep.subr.bf16.mxu0 0
      %804 = vmatpush1.bf16.msra.mxu0 0
      %805 = vmatprep.subr.bf16.mxu0 0
      %806 = vmatpush1.bf16.msra.mxu0 0
      %807 = vmatprep.subr.bf16.mxu0 0
      %808 = vmatpush1.bf16.msra.mxu0 0
      %809 = vmatprep.subr.bf16.mxu0 0
      %810 = vmatpush1.bf16.msra.mxu0 0
      %811 = vmatprep.subr.bf16.mxu0 0
      %812 = vmatpush1.bf16.msra.mxu0 0
      %813 = vmatprep.subr.bf16.mxu0 0
      %814 = vmatpush1.bf16.msra.mxu0 0
      %815 = vmatprep.mubr.bf16.mxu0 0
      %816 = vmatmul.mubr.bf16.gmra.mrb[0].mxu0 %v484
      %v817 = vpop.f32.mrb[0].mxu0
      %v818 = vadd.f32 0.0, %v817
      %v819 = vpop.f32.mrb[0].mxu0
      %v820 = vpop.f32.mrb[0].mxu0
      %v821 = vpop.f32.mrb[0].mxu0
      %822 = vdwg.mxu0
      %v823 = vadd.f32 %v778, %v818
      %824 = vmatprep.subr.bf16.mxu0 0
      %825 = vmatpush1.bf16.msra.mxu0 %v371
      %826 = vmatprep.subr.bf16.mxu0 0
      %827 = vmatpush1.bf16.msra.mxu0 0
      %828 = vmatprep.subr.bf16.mxu0 0
      %829 = vmatpush1.bf16.msra.mxu0 0
      %830 = vmatprep.subr.bf16.mxu0 0
      %831 = vmatpush1.bf16.msra.mxu0 0
      %832 = vmatprep.subr.bf16.mxu0 0
      %833 = vmatpush1.bf16.msra.mxu0 0
      %834 = vmatprep.subr.bf16.mxu0 0
      %835 = vmatpush1.bf16.msra.mxu0 0
      %836 = vmatprep.subr.bf16.mxu0 0
      %837 = vmatpush1.bf16.msra.mxu0 0
      %838 = vmatprep.subr.bf16.mxu0 0
      %839 = vmatpush1.bf16.msra.mxu0 0
      %840 = vmatprep.subr.bf16.mxu0 0
      %841 = vmatpush1.bf16.msra.mxu0 0
      %842 = vmatprep.subr.bf16.mxu0 0
      %843 = vmatpush1.bf16.msra.mxu0 0
      %844 = vmatprep.subr.bf16.mxu0 0
      %845 = vmatpush1.bf16.msra.mxu0 0
      %846 = vmatprep.subr.bf16.mxu0 0
      %847 = vmatpush1.bf16.msra.mxu0 0
      %848 = vmatprep.subr.bf16.mxu0 0
      %849 = vmatpush1.bf16.msra.mxu0 0
      %850 = vmatprep.subr.bf16.mxu0 0
      %851 = vmatpush1.bf16.msra.mxu0 0
      %852 = vmatprep.subr.bf16.mxu0 0
      %853 = vmatpush1.bf16.msra.mxu0 0
      %854 = vmatprep.subr.bf16.mxu0 0
      %855 = vmatpush1.bf16.msra.mxu0 0
      %856 = vmatprep.mubr.bf16.mxu0 0
      %857 = vmatmul.mubr.bf16.gmra.mrb[0].mxu0 %v542
      %v858 = vpop.f32.mrb[0].mxu0
      %v859 = vadd.f32 0.0, %v858
      %v860 = vpop.f32.mrb[0].mxu0
      %v861 = vpop.f32.mrb[0].mxu0
      %v862 = vpop.f32.mrb[0].mxu0
      %863 = vdwg.mxu0
      %v864 = vadd.f32 %v823, %v859
      %865 = vmatprep.subr.bf16.mxu0 0
      %866 = vmatpush1.bf16.msra.mxu0 %v426
      %867 = vmatprep.subr.bf16.mxu0 0
      %868 = vmatpush1.bf16.msra.mxu0 0
      %869 = vmatprep.subr.bf16.mxu0 0
      %870 = vmatpush1.bf16.msra.mxu0 0
      %871 = vmatprep.subr.bf16.mxu0 0
      %872 = vmatpush1.bf16.msra.mxu0 0
      %873 = vmatprep.subr.bf16.mxu0 0
      %874 = vmatpush1.bf16.msra.mxu0 0
      %875 = vmatprep.subr.bf16.mxu0 0
      %876 = vmatpush1.bf16.msra.mxu0 0
      %877 = vmatprep.subr.bf16.mxu0 0
      %878 = vmatpush1.bf16.msra.mxu0 0
      %879 = vmatprep.subr.bf16.mxu0 0
      %880 = vmatpush1.bf16.msra.mxu0 0
      %881 = vmatprep.subr.bf16.mxu0 0
      %882 = vmatpush1.bf16.msra.mxu0 0
      %883 = vmatprep.subr.bf16.mxu0 0
      %884 = vmatpush1.bf16.msra.mxu0 0
      %885 = vmatprep.subr.bf16.mxu0 0
      %886 = vmatpush1.bf16.msra.mxu0 0
      %887 = vmatprep.subr.bf16.mxu0 0
      %888 = vmatpush1.bf16.msra.mxu0 0
      %889 = vmatprep.subr.bf16.mxu0 0
      %890 = vmatpush1.bf16.msra.mxu0 0
      %891 = vmatprep.subr.bf16.mxu0 0
      %892 = vmatpush1.bf16.msra.mxu0 0
      %893 = vmatprep.subr.bf16.mxu0 0
      %894 = vmatpush1.bf16.msra.mxu0 0
      %895 = vmatprep.subr.bf16.mxu0 0
      %896 = vmatpush1.bf16.msra.mxu0 0
      %897 = vmatprep.mubr.bf16.mxu0 0
      %898 = vmatmul.mubr.bf16.gmra.mrb[0].mxu0 %v597
      %v899 = vpop.f32.mrb[0].mxu0
      %v900 = vadd.f32 0.0, %v899
      %v901 = vpop.f32.mrb[0].mxu0
      %v902 = vpop.f32.mrb[0].mxu0
      %v903 = vpop.f32.mrb[0].mxu0
      %904 = vdwg.mxu0
      %v905 = vadd.f32 %v864, %v900
      %906 = vmatprep.subr.bf16.mxu0 0
      %907 = vmatpush1.bf16.msra.mxu0 %v481
      %908 = vmatprep.subr.bf16.mxu0 0
      %909 = vmatpush1.bf16.msra.mxu0 0
      %910 = vmatprep.subr.bf16.mxu0 0
      %911 = vmatpush1.bf16.msra.mxu0 0
      %912 = vmatprep.subr.bf16.mxu0 0
      %913 = vmatpush1.bf16.msra.mxu0 0
      %914 = vmatprep.subr.bf16.mxu0 0
      %915 = vmatpush1.bf16.msra.mxu0 0
      %916 = vmatprep.subr.bf16.mxu0 0
      %917 = vmatpush1.bf16.msra.mxu0 0
      %918 = vmatprep.subr.bf16.mxu0 0
      %919 = vmatpush1.bf16.msra.mxu0 0
      %920 = vmatprep.subr.bf16.mxu0 0
      %921 = vmatpush1.bf16.msra.mxu0 0
      %922 = vmatprep.subr.bf16.mxu0 0
      %923 = vmatpush1.bf16.msra.mxu0 0
      %924 = vmatprep.subr.bf16.mxu0 0
      %925 = vmatpush1.bf16.msra.mxu0 0
      %926 = vmatprep.subr.bf16.mxu0 0
      %927 = vmatpush1.bf16.msra.mxu0 0
      %928 = vmatprep.subr.bf16.mxu0 0
      %929 = vmatpush1.bf16.msra.mxu0 0
      %930 = vmatprep.subr.bf16.mxu0 0
      %931 = vmatpush1.bf16.msra.mxu0 0
      %932 = vmatprep.subr.bf16.mxu0 0
      %933 = vmatpush1.bf16.msra.mxu0 0
      %934 = vmatprep.subr.bf16.mxu0 0
      %935 = vmatpush1.bf16.msra.mxu0 0
      %936 = vmatprep.subr.bf16.mxu0 0
      %937 = vmatpush1.bf16.msra.mxu0 0
      %938 = vmatprep.mubr.bf16.mxu0 0
      %939 = vmatmul.mubr.bf16.gmra.mrb[0].mxu0 %v652
      %v940 = vpop.f32.mrb[0].mxu0
      %v941 = vadd.f32 0.0, %v940
      %v942 = vpop.f32.mrb[0].mxu0
      %v943 = vpop.f32.mrb[0].mxu0
      %v944 = vpop.f32.mrb[0].mxu0
      %945 = vdwg.mxu0
      %v946 = vadd.f32 %v905, %v941
      %s947 = sadd.s32 %s193, 3
      %s948 = smul.u32 %s947, 16
      %s949 = scalar_lea.vmem %s182, %s948
      %v950 = vld [vmem:[%s949] sm:$0xff]
      %v951 = vpack.c.bf16 %v950, %v950
      %v953 = vsel %vm211, %v951, 0
      %955 = vmatprep.subr.bf16.mxu0 0
      %956 = vmatpush1.bf16.msra.mxu0 %v539
      %957 = vmatprep.subr.bf16.mxu0 0
      %958 = vmatpush1.bf16.msra.mxu0 0
      %959 = vmatprep.subr.bf16.mxu0 0
      %960 = vmatpush1.bf16.msra.mxu0 0
      %961 = vmatprep.subr.bf16.mxu0 0
      %962 = vmatpush1.bf16.msra.mxu0 0
      %963 = vmatprep.subr.bf16.mxu0 0
      %964 = vmatpush1.bf16.msra.mxu0 0
      %965 = vmatprep.subr.bf16.mxu0 0
      %966 = vmatpush1.bf16.msra.mxu0 0
      %967 = vmatprep.subr.bf16.mxu0 0
      %968 = vmatpush1.bf16.msra.mxu0 0
      %969 = vmatprep.subr.bf16.mxu0 0
      %970 = vmatpush1.bf16.msra.mxu0 0
      %971 = vmatprep.subr.bf16.mxu0 0
      %972 = vmatpush1.bf16.msra.mxu0 0
      %973 = vmatprep.subr.bf16.mxu0 0
      %974 = vmatpush1.bf16.msra.mxu0 0
      %975 = vmatprep.subr.bf16.mxu0 0
      %976 = vmatpush1.bf16.msra.mxu0 0
      %977 = vmatprep.subr.bf16.mxu0 0
      %978 = vmatpush1.bf16.msra.mxu0 0
      %979 = vmatprep.subr.bf16.mxu0 0
      %980 = vmatpush1.bf16.msra.mxu0 0
      %981 = vmatprep.subr.bf16.mxu0 0
      %982 = vmatpush1.bf16.msra.mxu0 0
      %983 = vmatprep.subr.bf16.mxu0 0
      %984 = vmatpush1.bf16.msra.mxu0 0
      %985 = vmatprep.subr.bf16.mxu0 0
      %986 = vmatpush1.bf16.msra.mxu0 0
      %987 = vmatprep.mubr.bf16.mxu0 0
      %988 = vmatmul.mubr.bf16.gmra.mrb[0].mxu0 %v953
      %v989 = vpop.f32.mrb[0].mxu0
      %v990 = vadd.f32 0.0, %v989
      %v991 = vpop.f32.mrb[0].mxu0
      %v992 = vpop.f32.mrb[0].mxu0
      %v993 = vpop.f32.mrb[0].mxu0
      %994 = vdwg.mxu0
      %v995 = vadd.f32 %v946, %v990
      %v996 = vld [vmem:[%s949 + $0x1] sm:$0xff]
      %v997 = vpack.c.bf16 %v996, %v996
      %v999 = vsel %vm211, %v997, 0
      %1001 = vmatprep.subr.bf16.mxu0 0
      %1002 = vmatpush1.bf16.msra.mxu0 %v594
      %1003 = vmatprep.subr.bf16.mxu0 0
      %1004 = vmatpush1.bf16.msra.mxu0 0
      %1005 = vmatprep.subr.bf16.mxu0 0
      %1006 = vmatpush1.bf16.msra.mxu0 0
      %1007 = vmatprep.subr.bf16.mxu0 0
      %1008 = vmatpush1.bf16.msra.mxu0 0
      %1009 = vmatprep.subr.bf16.mxu0 0
      %1010 = vmatpush1.bf16.msra.mxu0 0
      %1011 = vmatprep.subr.bf16.mxu0 0
      %1012 = vmatpush1.bf16.msra.mxu0 0
      %1013 = vmatprep.subr.bf16.mxu0 0
      %1014 = vmatpush1.bf16.msra.mxu0 0
      %1015 = vmatprep.subr.bf16.mxu0 0
      %1016 = vmatpush1.bf16.msra.mxu0 0
      %1017 = vmatprep.subr.bf16.mxu0 0
      %1018 = vmatpush1.bf16.msra.mxu0 0
      %1019 = vmatprep.subr.bf16.mxu0 0
      %1020 = vmatpush1.bf16.msra.mxu0 0
      %1021 = vmatprep.subr.bf16.mxu0 0
      %1022 = vmatpush1.bf16.msra.mxu0 0
      %1023 = vmatprep.subr.bf16.mxu0 0
      %1024 = vmatpush1.bf16.msra.mxu0 0
      %1025 = vmatprep.subr.bf16.mxu0 0
      %1026 = vmatpush1.bf16.msra.mxu0 0
      %1027 = vmatprep.subr.bf16.mxu0 0
      %1028 = vmatpush1.bf16.msra.mxu0 0
      %1029 = vmatprep.subr.bf16.mxu0 0
      %1030 = vmatpush1.bf16.msra.mxu0 0
      %1031 = vmatprep.subr.bf16.mxu0 0
      %1032 = vmatpush1.bf16.msra.mxu0 0
      %1033 = vmatprep.mubr.bf16.mxu0 0
      %1034 = vmatmul.mubr.bf16.gmra.mrb[0].mxu0 %v999
      %v1035 = vpop.f32.mrb[0].mxu0
      %v1036 = vadd.f32 0.0, %v1035
      %v1037 = vpop.f32.mrb[0].mxu0
      %v1038 = vpop.f32.mrb[0].mxu0
      %v1039 = vpop.f32.mrb[0].mxu0
      %1040 = vdwg.mxu0
      %v1041 = vadd.f32 %v995, %v1036
      %v1042 = vld [vmem:[%s949 + $0x2] sm:$0xff]
      %v1043 = vpack.c.bf16 %v1042, %v1042
      %v1045 = vsel %vm211, %v1043, 0
      %1047 = vmatprep.subr.bf16.mxu0 0
      %1048 = vmatpush1.bf16.msra.mxu0 %v649
      %1049 = vmatprep.subr.bf16.mxu0 0
      %1050 = vmatpush1.bf16.msra.mxu0 0
      %1051 = vmatprep.subr.bf16.mxu0 0
      %1052 = vmatpush1.bf16.msra.mxu0 0
      %1053 = vmatprep.subr.bf16.mxu0 0
      %1054 = vmatpush1.bf16.msra.mxu0 0
      %1055 = vmatprep.subr.bf16.mxu0 0
      %1056 = vmatpush1.bf16.msra.mxu0 0
      %1057 = vmatprep.subr.bf16.mxu0 0
      %1058 = vmatpush1.bf16.msra.mxu0 0
      %1059 = vmatprep.subr.bf16.mxu0 0
      %1060 = vmatpush1.bf16.msra.mxu0 0
      %1061 = vmatprep.subr.bf16.mxu0 0
      %1062 = vmatpush1.bf16.msra.mxu0 0
      %1063 = vmatprep.subr.bf16.mxu0 0
      %1064 = vmatpush1.bf16.msra.mxu0 0
      %1065 = vmatprep.subr.bf16.mxu0 0
      %1066 = vmatpush1.bf16.msra.mxu0 0
      %1067 = vmatprep.subr.bf16.mxu0 0
      %1068 = vmatpush1.bf16.msra.mxu0 0
      %1069 = vmatprep.subr.bf16.mxu0 0
      %1070 = vmatpush1.bf16.msra.mxu0 0
      %1071 = vmatprep.subr.bf16.mxu0 0
      %1072 = vmatpush1.bf16.msra.mxu0 0
      %1073 = vmatprep.subr.bf16.mxu0 0
      %1074 = vmatpush1.bf16.msra.mxu0 0
      %1075 = vmatprep.subr.bf16.mxu0 0
      %1076 = vmatpush1.bf16.msra.mxu0 0
      %1077 = vmatprep.subr.bf16.mxu0 0
      %1078 = vmatpush1.bf16.msra.mxu0 0
      %1079 = vmatprep.mubr.bf16.mxu0 0
      %1080 = vmatmul.mubr.bf16.gmra.mrb[0].mxu0 %v1045
      %v1081 = vpop.f32.mrb[0].mxu0
      %v1082 = vadd.f32 0.0, %v1081
      %v1083 = vpop.f32.mrb[0].mxu0
      %v1084 = vpop.f32.mrb[0].mxu0
      %v1085 = vpop.f32.mrb[0].mxu0
      %1086 = vdwg.mxu0
      %v1087 = vadd.f32 %v1041, %v1082
      %v1088 = vadd.f32 %v1087, %v699
      %v1089 = vmax.f32 %v1088, 0.0
      %v1090 = vmax.f32 %v702, %v1089
      %vm1091 = vcmask 261120
      %1092 = vst.msk [vmem:[#allocation2] sm:$0xff] %vm1091, %v1090
      %v1093 = vld [vmem:[#allocation2] ss:$2 sm:$0xf]
      %s1094 = scalar_lea.vmem [#allocation2], 1
      %v1095 = vld [vmem:[%s1094] ss:$2 sm:$0xf]
      %v1096 = vmax.f32 %v1093, %v1095
      %vm1097 = vcmask 257024
      %1098 = vst.msk [vmem:[%s190] sm:$0xf] %vm1097, %v1096
      %p1099 = scmp.lt.s32.totalorder %s18, 1
      %s1100 = scalar_select %p1099, %s18, 1
      %p1101 = scmp.lt.s32.totalorder %s19, 3
      %s1102 = scalar_select %p1101, %s19, 3
      %s1103 = smul.addr %s1100, 4
      %s1104 = sadd.s32 %s1102, %s1103
      %s1105 = smul.addr %s1104, 4
      %s1106 = scalar_lea.vmem %s3, %s1105
      // Predicated region
      $region33: #{better_cnn_forward.5} parent=31 // pred_check
        %p1107 = pneg %p114
      $region34: #{better_cnn_forward.5} parent=31 // pred_check_branch
        %1109 = sbr.rel (%p1107) target = $region36
      $region35: #{better_cnn_forward.5} parent=31 // pred_region
        _
      $region36: #{better_cnn_forward.5} parent=31 // pred_fallthru
        _
    $region32: #{better_cnn_forward.5} parent=5 // pred_fallthru
      _
    %p1110 = scmp.le.s32.totalorder 2, %s9
    // Predicated region
    $region37: #{better_cnn_forward.5} parent=5 // pred_check
      %p1111 = pneg %p1110
    $region38: #{better_cnn_forward.5} parent=5 // pred_check_branch
      %1113 = sbr.rel (%p1111) target = $region40
    $region39: #{better_cnn_forward.5} parent=5 // pred_region
      %s1114 = ssub.s32 %s9, 2
      // Predicated region
      $region41: #{better_cnn_forward.5} parent=39 // pred_check
        %p1115 = pneg %p120
      $region42: #{better_cnn_forward.5} parent=39 // pred_check_branch
        %1117 = sbr.rel (%p1115) target = $region44
      $region43: #{better_cnn_forward.5} parent=39 // pred_region
        %p1118 = scmp.lt.s32.totalorder %s20, 1
        %s1119 = scalar_select %p1118, %s20, 1
        %p1120 = scmp.lt.s32.totalorder %s21, 3
        %s1121 = scalar_select %p1120, %s21, 3
        %s1122 = smul.addr %s1119, 4
        %s1123 = sadd.s32 %s1121, %s1122
        %s1124 = smul.addr %s1123, 4
        %s1125 = scalar_lea.vmem %s3, %s1124
      $region44: #{better_cnn_forward.5} parent=39 // pred_fallthru
        _
    $region40: #{better_cnn_forward.5} parent=5 // pred_fallthru
      _
  $region6: #{better_cnn_forward.5} parent=0 // loop_footer
    %s13 = sadd.s32 1, %s9
  $region7: #{better_cnn_forward.5} parent=0 // loop_footer_branch
    %8 = sbr.rel target = $region3
  $region8: #{better_cnn_forward.5} parent=0 // loop_exit
    _

// kernel: better_cnn_forward.4
$region0: #{better_cnn_forward.4}
  #allocation0 [shape = 'u32[]', space=smem, size = 0x4, offset = 0x4, fixed_abs, tag = 'smem constant byte address 0x4 - core index']
  #allocation1 [shape = 'u32[144,128]{1,0:T(1,128)}', space=vmem, size = 0x12000, scoped, tag = 'internal scratch']
  #allocation2 [shape = 'f32[16,16]{1,0:T(8,128)}', space=vmem, size = 0x2000, scoped, tag = 'scratch operand']
  %s0 = inlined_call_operand.vmem [shape: f32[2,18,18,1], index: 0, kind: input, shape index: {}]
  %s1 = inlined_call_operand.vmem [shape: bf16[9,1,16], index: 1, kind: input, shape index: {}]
  %s2 = inlined_call_operand.vmem [shape: f32[1,16], index: 2, kind: input, shape index: {}]
  %s3 = inlined_call_operand.vmem [shape: f32[2,8,8,16], index: 3, kind: output, shape index: {}]
  %s4 = sld [smem:[#allocation0]]
  $region45: #{better_cnn_forward.4} parent=0
    _
  %s6 = ssub.s32 1, %s4
  %s7 = scalar_select 0, %s6, %s4
  loop: start=0, step=1, limit=18
  $region2: #{better_cnn_forward.4} parent=0 // loop_pre_header
    _
  $region3: #{better_cnn_forward.4} parent=0 // loop_header
    %s9 = sphi 0, %s13
    %p10 = scmp.ge.s32.totalorder %s9, 18
    %s16 = sphi 0, %s28
    %s17 = sphi 0, %s24
    %s18 = sphi 0, %s16
    %s19 = sphi 0, %s17
    %s20 = sphi 0, %s18
    %s21 = sphi 0, %s19
    %s31 = sphi 0, %s33
    %s34 = sphi 0, %s31
    %s35 = sphi 0, %s34
    %s51 = sphi 0, %s35
    %s55 = sphi 0, %s55
    %s57 = sphi 0, %s55
    %s58 = sphi 0, %s57
    %s72 = sphi 0, %s58
    %s76 = sphi 0, %s76
    %s78 = sphi 0, %s76
    %s79 = sphi 0, %s78
    %s93 = sphi 0, %s79
    %s101 = sphi 0, %s103
    %s104 = sphi 0, %s101
    %s105 = sphi 0, %s104
    %s121 = sphi 0, %s105
  $region4: #{better_cnn_forward.4} parent=0 // loop_header_branch
    %12 = sbr.rel (%p10) target = $region8
  $region5: #{better_cnn_forward.4} parent=0 // loop_body
    %s14 = ssub.s32 %s9, 1
    %s15 = ssub.s32 %s9, 2
    %s22 = sadd.s32 1, %s17
    %p23 = scmp.ge.s32.totalorder %s22, 8
    %s24 = scalar_select %p23, 0, %s22
    %s25 = sadd.s32 1, %s16
    %s26 = scalar_select %p23, %s25, %s16
    %p27 = scmp.ge.s32.totalorder %s26, 2
    %s28 = scalar_select %p27, 0, %s26
    %s29 = ssub.s32 %s16, %s28
    %p30 = scmp.eq.s32.totalorder %s29, 0
    %s32 = sadd.s32 %s31, 1
    %s33 = scalar_select %p30, %s31, %s32
    %p36 = pneg %p30
    %p37 = scmp.eq.s32.totalorder %s9, 15
    %p38 = por %p36, %p37
    %p39 = scmp.ne.s32.totalorder %s31, %s34
    %p40 = scmp.eq.s32.totalorder %s9, 0
    %p41 = por %p39, %p40
    %p42 = scmp.ne.s32.totalorder %s31, %s34
    %p43 = scmp.eq.s32.totalorder %s14, 15
    %p44 = por %p42, %p43
    %p45 = scmp.ne.s32.totalorder %s34, %s35
    %p46 = scmp.eq.s32.totalorder %s14, 0
    %p47 = por %p45, %p46
    %p48 = scmp.ne.s32.totalorder %s34, %s35
    %p49 = scmp.eq.s32.totalorder %s15, 15
    %p50 = por %p48, %p49
    %p52 = scmp.ne.s32.totalorder %s35, %s51
    %p53 = scmp.eq.s32.totalorder %s15, 0
    %p54 = por %p52, %p53
    %s56 = sadd.s32 %s55, 1
    %p59 = scmp.eq.s32.totalorder %s9, 15
    %p60 = scmp.ne.s32.totalorder %s55, %s57
    %p61 = scmp.eq.s32.totalorder %s9, 0
    %p62 = por %p60, %p61
    %p63 = scmp.ne.s32.totalorder %s55, %s57
    %p64 = scmp.eq.s32.totalorder %s14, 15
    %p65 = por %p63, %p64
    %p66 = scmp.ne.s32.totalorder %s57, %s58
    %p67 = scmp.eq.s32.totalorder %s14, 0
    %p68 = por %p66, %p67
    %p69 = scmp.ne.s32.totalorder %s57, %s58
    %p70 = scmp.eq.s32.totalorder %s15, 15
    %p71 = por %p69, %p70
    %p73 = scmp.ne.s32.totalorder %s58, %s72
    %p74 = scmp.eq.s32.totalorder %s15, 0
    %p75 = por %p73, %p74
    %s77 = sadd.s32 %s76, 1
    %p80 = scmp.eq.s32.totalorder %s9, 15
    %p81 = scmp.ne.s32.totalorder %s76, %s78
    %p82 = scmp.eq.s32.totalorder %s9, 0
    %p83 = por %p81, %p82
    %p84 = scmp.ne.s32.totalorder %s76, %s78
    %p85 = scmp.eq.s32.totalorder %s14, 15
    %p86 = por %p84, %p85
    %p87 = scmp.ne.s32.totalorder %s78, %s79
    %p88 = scmp.eq.s32.totalorder %s14, 0
    %p89 = por %p87, %p88
    %p90 = scmp.ne.s32.totalorder %s78, %s79
    %p91 = scmp.eq.s32.totalorder %s15, 15
    %p92 = por %p90, %p91
    %p94 = scmp.ne.s32.totalorder %s79, %s93
    %p95 = scmp.eq.s32.totalorder %s15, 0
    %p96 = por %p94, %p95
    %s97 = ssub.s32 %s16, %s28
    %s98 = ssub.s32 %s17, %s24
    %s99 = sor.u32 %s97, %s98
    %p100 = scmp.eq.s32.totalorder %s99, 0
    %s102 = sadd.s32 %s101, 1
    %s103 = scalar_select %p100, %s101, %s102
    %p106 = pneg %p100
    %p107 = scmp.eq.s32.totalorder %s9, 15
    %p108 = por %p106, %p107
    %p109 = scmp.ne.s32.totalorder %s101, %s104
    %p110 = scmp.eq.s32.totalorder %s9, 0
    %p111 = por %p109, %p110
    %p112 = scmp.ne.s32.totalorder %s101, %s104
    %p113 = scmp.eq.s32.totalorder %s14, 15
    %p114 = por %p112, %p113
    %p115 = scmp.ne.s32.totalorder %s104, %s105
    %p116 = scmp.eq.s32.totalorder %s14, 0
    %p117 = por %p115, %p116
    %p118 = scmp.ne.s32.totalorder %s104, %s105
    %p119 = scmp.eq.s32.totalorder %s15, 15
    %p120 = por %p118, %p119
    %p122 = scmp.ne.s32.totalorder %s105, %s121
    %p123 = scmp.eq.s32.totalorder %s15, 0
    %p124 = por %p122, %p123
    %p125 = scmp.le.s32.totalorder 1, %s9
    %p126 = scmp.lt.s32.totalorder %s9, 17
    %p127 = pnand %p125, %p126
    %p128 = pneg %p127
    // Predicated region
    $region9: #{better_cnn_forward.4} parent=5 // pred_check
      _
    $region10: #{better_cnn_forward.4} parent=5 // pred_check_branch
      %130 = sbr.rel (%p127) target = $region12
    $region11: #{better_cnn_forward.4} parent=5 // pred_region
      %s131 = ssub.s32 %s9, 1
      // Predicated region
      $region13: #{better_cnn_forward.4} parent=11 // pred_check
        %p132 = pneg %p68
      $region14: #{better_cnn_forward.4} parent=11 // pred_check_branch
        %134 = sbr.rel (%p132) target = $region16
      $region15: #{better_cnn_forward.4} parent=11 // pred_region
        _
      $region16: #{better_cnn_forward.4} parent=11 // pred_fallthru
        _
      // Predicated region
      $region17: #{better_cnn_forward.4} parent=11 // pred_check
        %p135 = pneg %p89
      $region18: #{better_cnn_forward.4} parent=11 // pred_check_branch
        %137 = sbr.rel (%p135) target = $region20
      $region19: #{better_cnn_forward.4} parent=11 // pred_region
        _
      $region20: #{better_cnn_forward.4} parent=11 // pred_fallthru
        _
    $region12: #{better_cnn_forward.4} parent=5 // pred_fallthru
      _
    %p138 = scmp.lt.s32.totalorder %s9, 16
    // Predicated region
    $region21: #{better_cnn_forward.4} parent=5 // pred_check
      %p139 = pneg %p138
    $region22: #{better_cnn_forward.4} parent=5 // pred_check_branch
      %141 = sbr.rel (%p139) target = $region24
    $region23: #{better_cnn_forward.4} parent=5 // pred_region
      // Predicated region
      $region25: #{better_cnn_forward.4} parent=23 // pred_check
        %p142 = pneg %p41
      $region26: #{better_cnn_forward.4} parent=23 // pred_check_branch
        %144 = sbr.rel (%p142) target = $region28
      $region27: #{better_cnn_forward.4} parent=23 // pred_region
        %p145 = scmp.lt.s32.totalorder %s16, 1
        %s146 = scalar_select %p145, %s16, 1
        %s147 = smul.addr %s146, 54
        %s148 = smul.addr %s147, 8
        %s149 = scalar_lea.vmem %s0, %s148
      $region28: #{better_cnn_forward.4} parent=23 // pred_fallthru
        _
    $region24: #{better_cnn_forward.4} parent=5 // pred_fallthru
      _
    %p150 = scmp.le.s32.totalorder 1, %s9
    %p151 = scmp.lt.s32.totalorder %s9, 17
    %p152 = pnand %p150, %p151
    %p153 = pneg %p152
    // Predicated region
    $region29: #{better_cnn_forward.4} parent=5 // pred_check
      _
    $region30: #{better_cnn_forward.4} parent=5 // pred_check_branch
      %155 = sbr.rel (%p152) target = $region32
    $region31: #{better_cnn_forward.4} parent=5 // pred_region
      %s156 = ssub.s32 %s9, 1
      %p157 = scmp.lt.s32.totalorder %s18, 1
      %s158 = scalar_select %p157, %s18, 1
      %s159 = smul.addr %s158, 54
      %s160 = smul.addr %s159, 8
      %s161 = scalar_lea.vmem %s0, %s160
      %p162 = pneg %p47
      %p163 = pneg %p44
      %p164 = pneg %p68
      %p165 = pneg %p65
      %p166 = pneg %p89
      %p167 = pneg %p86
      %p168 = pneg %p117
      %p169 = pneg %p114
      %p170 = scmp.lt.s32.totalorder %s18, 1
      %s171 = scalar_select %p170, %s18, 1
      %p172 = scmp.lt.s32.totalorder %s19, 7
      %s173 = scalar_select %p172, %s19, 7
      %s174 = smul.addr %s171, 8
      %s175 = sadd.s32 %s173, %s174
      %s176 = smul.addr %s175, 8
      %s177 = scalar_lea.vmem %s3, %s176
      %p178 = scmp.lt.s32.totalorder %s18, 1
      %s179 = scalar_select %p178, %s18, 1
      %s180 = smul.addr %s179, 54
      %s181 = smul.addr %s180, 8
      %s182 = scalar_lea.vmem %s0, %s181
      %p183 = scmp.lt.s32.totalorder %s18, 1
      %s184 = scalar_select %p183, %s18, 1
      %p185 = scmp.lt.s32.totalorder %s19, 7
      %s186 = scalar_select %p185, %s19, 7
      %s187 = smul.addr %s184, 8
      %s188 = sadd.s32 %s186, %s187
      %s189 = smul.addr %s188, 8
      %s190 = scalar_lea.vmem %s3, %s189
      %v192 = vld [vmem:[%s2] sm:$0x1]
      %s193 = smul.u32 %s19, 2
      %s194 = smul.u32 %s193, 24
      %s195 = scalar_lea.vmem %s182, %s194
      %v196 = vld [vmem:[%s195] sm:$0xff]
      %v197 = vld [vmem:[%s195 + $0x8] sm:$0xff]
      %v198 = vpack.c.bf16 %v197, %v196
      %v199 = vld [vmem:[%s1] sm:$0x1]
      %v200 = vld [vmem:[%s195 + $0x1] sm:$0xff]
      %v201 = vld [vmem:[%s195 + $0x9] sm:$0xff]
      %v202 = vpack.c.bf16 %v201, %v200
      %s203 = scalar_lea.vmem %s1, 1
      %v204 = vld [vmem:[%s203] sm:$0x1]
      %vm205 = vcmask 7168
      %v207 = vsel %vm205, %v202, 0
      %vm209 = vcmask 1040384
      %v210 = vsel 0, 4294967295, 65535
      %v211 = vsel %vm209, %v210, 0
      %v213 = vand.u32 %v204, %v211
      %215 = vmatprep.subr.bf16.mxu0 0
      %216 = vmatpush1.bf16.msra.mxu0 %v213
      %217 = vmatprep.subr.bf16.mxu0 0
      %218 = vmatpush1.bf16.msra.mxu0 0
      %219 = vmatprep.subr.bf16.mxu0 0
      %220 = vmatpush1.bf16.msra.mxu0 0
      %221 = vmatprep.subr.bf16.mxu0 0
      %222 = vmatpush1.bf16.msra.mxu0 0
      %223 = vmatprep.subr.bf16.mxu0 0
      %224 = vmatpush1.bf16.msra.mxu0 0
      %225 = vmatprep.subr.bf16.mxu0 0
      %226 = vmatpush1.bf16.msra.mxu0 0
      %227 = vmatprep.subr.bf16.mxu0 0
      %228 = vmatpush1.bf16.msra.mxu0 0
      %229 = vmatprep.subr.bf16.mxu0 0
      %230 = vmatpush1.bf16.msra.mxu0 0
      %231 = vmatprep.subr.bf16.mxu0 0
      %232 = vmatpush1.bf16.msra.mxu0 0
      %233 = vmatprep.subr.bf16.mxu0 0
      %234 = vmatpush1.bf16.msra.mxu0 0
      %235 = vmatprep.subr.bf16.mxu0 0
      %236 = vmatpush1.bf16.msra.mxu0 0
      %237 = vmatprep.subr.bf16.mxu0 0
      %238 = vmatpush1.bf16.msra.mxu0 0
      %239 = vmatprep.subr.bf16.mxu0 0
      %240 = vmatpush1.bf16.msra.mxu0 0
      %241 = vmatprep.subr.bf16.mxu0 0
      %242 = vmatpush1.bf16.msra.mxu0 0
      %243 = vmatprep.subr.bf16.mxu0 0
      %244 = vmatpush1.bf16.msra.mxu0 0
      %245 = vmatprep.subr.bf16.mxu0 0
      %246 = vmatpush1.bf16.msra.mxu0 0
      %247 = vmatprep.mubr.bf16.mxu0 0
      %248 = vmatmul.mubr.bf16.gmra.mrb[0].mxu0 %v207
      %v249 = vpop.f32.mrb[0].mxu0
      %v250 = vadd.f32 0.0, %v249
      %v251 = vpop.f32.mrb[0].mxu0
      %v252 = vpop.f32.mrb[0].mxu0
      %v253 = vadd.f32 0.0, %v252
      %v254 = vpop.f32.mrb[0].mxu0
      %255 = vdwg.mxu0
      %v257 = vsel %vm205, %v198, 0
      %v260 = vand.u32 %v199, %v211
      %262 = vmatprep.subr.bf16.mxu0 0
      %263 = vmatpush1.bf16.msra.mxu0 %v260
      %264 = vmatprep.subr.bf16.mxu0 0
      %265 = vmatpush1.bf16.msra.mxu0 0
      %266 = vmatprep.subr.bf16.mxu0 0
      %267 = vmatpush1.bf16.msra.mxu0 0
      %268 = vmatprep.subr.bf16.mxu0 0
      %269 = vmatpush1.bf16.msra.mxu0 0
      %270 = vmatprep.subr.bf16.mxu0 0
      %271 = vmatpush1.bf16.msra.mxu0 0
      %272 = vmatprep.subr.bf16.mxu0 0
      %273 = vmatpush1.bf16.msra.mxu0 0
      %274 = vmatprep.subr.bf16.mxu0 0
      %275 = vmatpush1.bf16.msra.mxu0 0
      %276 = vmatprep.subr.bf16.mxu0 0
      %277 = vmatpush1.bf16.msra.mxu0 0
      %278 = vmatprep.subr.bf16.mxu0 0
      %279 = vmatpush1.bf16.msra.mxu0 0
      %280 = vmatprep.subr.bf16.mxu0 0
      %281 = vmatpush1.bf16.msra.mxu0 0
      %282 = vmatprep.subr.bf16.mxu0 0
      %283 = vmatpush1.bf16.msra.mxu0 0
      %284 = vmatprep.subr.bf16.mxu0 0
      %285 = vmatpush1.bf16.msra.mxu0 0
      %286 = vmatprep.subr.bf16.mxu0 0
      %287 = vmatpush1.bf16.msra.mxu0 0
      %288 = vmatprep.subr.bf16.mxu0 0
      %289 = vmatpush1.bf16.msra.mxu0 0
      %290 = vmatprep.subr.bf16.mxu0 0
      %291 = vmatpush1.bf16.msra.mxu0 0
      %292 = vmatprep.subr.bf16.mxu0 0
      %293 = vmatpush1.bf16.msra.mxu0 0
      %294 = vmatprep.mubr.bf16.mxu0 0
      %295 = vmatmul.mubr.bf16.gmra.mrb[0].mxu0 %v257
      %v296 = vpop.f32.mrb[0].mxu0
      %v297 = vadd.f32 %v250, %v296
      %v298 = vpop.f32.mrb[0].mxu0
      %v299 = vpop.f32.mrb[0].mxu0
      %v300 = vadd.f32 %v253, %v299
      %v301 = vpop.f32.mrb[0].mxu0
      %302 = vdwg.mxu0
      %v303 = vld [vmem:[%s195 + $0x2] sm:$0xff]
      %v304 = vld [vmem:[%s195 + $0xa] sm:$0xff]
      %v305 = vpack.c.bf16 %v304, %v303
      %s306 = scalar_lea.vmem %s1, 2
      %v307 = vld [vmem:[%s306] sm:$0x1]
      %v309 = vsel %vm205, %v305, 0
      %v312 = vand.u32 %v307, %v211
      %314 = vmatprep.subr.bf16.mxu0 0
      %315 = vmatpush1.bf16.msra.mxu0 %v312
      %316 = vmatprep.subr.bf16.mxu0 0
      %317 = vmatpush1.bf16.msra.mxu0 0
      %318 = vmatprep.subr.bf16.mxu0 0
      %319 = vmatpush1.bf16.msra.mxu0 0
      %320 = vmatprep.subr.bf16.mxu0 0
      %321 = vmatpush1.bf16.msra.mxu0 0
      %322 = vmatprep.subr.bf16.mxu0 0
      %323 = vmatpush1.bf16.msra.mxu0 0
      %324 = vmatprep.subr.bf16.mxu0 0
      %325 = vmatpush1.bf16.msra.mxu0 0
      %326 = vmatprep.subr.bf16.mxu0 0
      %327 = vmatpush1.bf16.msra.mxu0 0
      %328 = vmatprep.subr.bf16.mxu0 0
      %329 = vmatpush1.bf16.msra.mxu0 0
      %330 = vmatprep.subr.bf16.mxu0 0
      %331 = vmatpush1.bf16.msra.mxu0 0
      %332 = vmatprep.subr.bf16.mxu0 0
      %333 = vmatpush1.bf16.msra.mxu0 0
      %334 = vmatprep.subr.bf16.mxu0 0
      %335 = vmatpush1.bf16.msra.mxu0 0
      %336 = vmatprep.subr.bf16.mxu0 0
      %337 = vmatpush1.bf16.msra.mxu0 0
      %338 = vmatprep.subr.bf16.mxu0 0
      %339 = vmatpush1.bf16.msra.mxu0 0
      %340 = vmatprep.subr.bf16.mxu0 0
      %341 = vmatpush1.bf16.msra.mxu0 0
      %342 = vmatprep.subr.bf16.mxu0 0
      %343 = vmatpush1.bf16.msra.mxu0 0
      %344 = vmatprep.subr.bf16.mxu0 0
      %345 = vmatpush1.bf16.msra.mxu0 0
      %346 = vmatprep.mubr.bf16.mxu0 0
      %347 = vmatmul.mubr.bf16.gmra.mrb[0].mxu0 %v309
      %v348 = vpop.f32.mrb[0].mxu0
      %v349 = vadd.f32 0.0, %v348
      %v350 = vpop.f32.mrb[0].mxu0
      %v351 = vpop.f32.mrb[0].mxu0
      %v352 = vadd.f32 0.0, %v351
      %v353 = vpop.f32.mrb[0].mxu0
      %354 = vdwg.mxu0
      %v355 = vadd.f32 %v297, %v349
      %v356 = vadd.f32 %v300, %v352
      %s357 = sadd.s32 %s193, 1
      %s358 = smul.u32 %s357, 24
      %s359 = scalar_lea.vmem %s182, %s358
      %v360 = vld [vmem:[%s359] sm:$0xff]
      %v361 = vld [vmem:[%s359 + $0x8] sm:$0xff]
      %v362 = vpack.c.bf16 %v361, %v360
      %s363 = scalar_lea.vmem %s1, 3
      %v364 = vld [vmem:[%s363] sm:$0x1]
      %v366 = vsel %vm205, %v362, 0
      %v369 = vand.u32 %v364, %v211
      %371 = vmatprep.subr.bf16.mxu0 0
      %372 = vmatpush1.bf16.msra.mxu0 %v369
      %373 = vmatprep.subr.bf16.mxu0 0
      %374 = vmatpush1.bf16.msra.mxu0 0
      %375 = vmatprep.subr.bf16.mxu0 0
      %376 = vmatpush1.bf16.msra.mxu0 0
      %377 = vmatprep.subr.bf16.mxu0 0
      %378 = vmatpush1.bf16.msra.mxu0 0
      %379 = vmatprep.subr.bf16.mxu0 0
      %380 = vmatpush1.bf16.msra.mxu0 0
      %381 = vmatprep.subr.bf16.mxu0 0
      %382 = vmatpush1.bf16.msra.mxu0 0
      %383 = vmatprep.subr.bf16.mxu0 0
      %384 = vmatpush1.bf16.msra.mxu0 0
      %385 = vmatprep.subr.bf16.mxu0 0
      %386 = vmatpush1.bf16.msra.mxu0 0
      %387 = vmatprep.subr.bf16.mxu0 0
      %388 = vmatpush1.bf16.msra.mxu0 0
      %389 = vmatprep.subr.bf16.mxu0 0
      %390 = vmatpush1.bf16.msra.mxu0 0
      %391 = vmatprep.subr.bf16.mxu0 0
      %392 = vmatpush1.bf16.msra.mxu0 0
      %393 = vmatprep.subr.bf16.mxu0 0
      %394 = vmatpush1.bf16.msra.mxu0 0
      %395 = vmatprep.subr.bf16.mxu0 0
      %396 = vmatpush1.bf16.msra.mxu0 0
      %397 = vmatprep.subr.bf16.mxu0 0
      %398 = vmatpush1.bf16.msra.mxu0 0
      %399 = vmatprep.subr.bf16.mxu0 0
      %400 = vmatpush1.bf16.msra.mxu0 0
      %401 = vmatprep.subr.bf16.mxu0 0
      %402 = vmatpush1.bf16.msra.mxu0 0
      %403 = vmatprep.mubr.bf16.mxu0 0
      %404 = vmatmul.mubr.bf16.gmra.mrb[0].mxu0 %v366
      %v405 = vpop.f32.mrb[0].mxu0
      %v406 = vadd.f32 0.0, %v405
      %v407 = vpop.f32.mrb[0].mxu0
      %v408 = vpop.f32.mrb[0].mxu0
      %v409 = vadd.f32 0.0, %v408
      %v410 = vpop.f32.mrb[0].mxu0
      %411 = vdwg.mxu0
      %v412 = vadd.f32 %v355, %v406
      %v413 = vadd.f32 %v356, %v409
      %v414 = vld [vmem:[%s359 + $0x1] sm:$0xff]
      %v415 = vld [vmem:[%s359 + $0x9] sm:$0xff]
      %v416 = vpack.c.bf16 %v415, %v414
      %s417 = scalar_lea.vmem %s1, 4
      %v418 = vld [vmem:[%s417] sm:$0x1]
      %v420 = vsel %vm205, %v416, 0
      %v423 = vand.u32 %v418, %v211
      %425 = vmatprep.subr.bf16.mxu0 0
      %426 = vmatpush1.bf16.msra.mxu0 %v423
      %427 = vmatprep.subr.bf16.mxu0 0
      %428 = vmatpush1.bf16.msra.mxu0 0
      %429 = vmatprep.subr.bf16.mxu0 0
      %430 = vmatpush1.bf16.msra.mxu0 0
      %431 = vmatprep.subr.bf16.mxu0 0
      %432 = vmatpush1.bf16.msra.mxu0 0
      %433 = vmatprep.subr.bf16.mxu0 0
      %434 = vmatpush1.bf16.msra.mxu0 0
      %435 = vmatprep.subr.bf16.mxu0 0
      %436 = vmatpush1.bf16.msra.mxu0 0
      %437 = vmatprep.subr.bf16.mxu0 0
      %438 = vmatpush1.bf16.msra.mxu0 0
      %439 = vmatprep.subr.bf16.mxu0 0
      %440 = vmatpush1.bf16.msra.mxu0 0
      %441 = vmatprep.subr.bf16.mxu0 0
      %442 = vmatpush1.bf16.msra.mxu0 0
      %443 = vmatprep.subr.bf16.mxu0 0
      %444 = vmatpush1.bf16.msra.mxu0 0
      %445 = vmatprep.subr.bf16.mxu0 0
      %446 = vmatpush1.bf16.msra.mxu0 0
      %447 = vmatprep.subr.bf16.mxu0 0
      %448 = vmatpush1.bf16.msra.mxu0 0
      %449 = vmatprep.subr.bf16.mxu0 0
      %450 = vmatpush1.bf16.msra.mxu0 0
      %451 = vmatprep.subr.bf16.mxu0 0
      %452 = vmatpush1.bf16.msra.mxu0 0
      %453 = vmatprep.subr.bf16.mxu0 0
      %454 = vmatpush1.bf16.msra.mxu0 0
      %455 = vmatprep.subr.bf16.mxu0 0
      %456 = vmatpush1.bf16.msra.mxu0 0
      %457 = vmatprep.mubr.bf16.mxu0 0
      %458 = vmatmul.mubr.bf16.gmra.mrb[0].mxu0 %v420
      %v459 = vpop.f32.mrb[0].mxu0
      %v460 = vadd.f32 0.0, %v459
      %v461 = vpop.f32.mrb[0].mxu0
      %v462 = vpop.f32.mrb[0].mxu0
      %v463 = vadd.f32 0.0, %v462
      %v464 = vpop.f32.mrb[0].mxu0
      %465 = vdwg.mxu0
      %v466 = vadd.f32 %v412, %v460
      %v467 = vadd.f32 %v413, %v463
      %v468 = vld [vmem:[%s359 + $0x2] sm:$0xff]
      %v469 = vld [vmem:[%s359 + $0xa] sm:$0xff]
      %v470 = vpack.c.bf16 %v469, %v468
      %s471 = scalar_lea.vmem %s1, 5
      %v472 = vld [vmem:[%s471] sm:$0x1]
      %v474 = vsel %vm205, %v470, 0
      %v477 = vand.u32 %v472, %v211
      %479 = vmatprep.subr.bf16.mxu0 0
      %480 = vmatpush1.bf16.msra.mxu0 %v477
      %481 = vmatprep.subr.bf16.mxu0 0
      %482 = vmatpush1.bf16.msra.mxu0 0
      %483 = vmatprep.subr.bf16.mxu0 0
      %484 = vmatpush1.bf16.msra.mxu0 0
      %485 = vmatprep.subr.bf16.mxu0 0
      %486 = vmatpush1.bf16.msra.mxu0 0
      %487 = vmatprep.subr.bf16.mxu0 0
      %488 = vmatpush1.bf16.msra.mxu0 0
      %489 = vmatprep.subr.bf16.mxu0 0
      %490 = vmatpush1.bf16.msra.mxu0 0
      %491 = vmatprep.subr.bf16.mxu0 0
      %492 = vmatpush1.bf16.msra.mxu0 0
      %493 = vmatprep.subr.bf16.mxu0 0
      %494 = vmatpush1.bf16.msra.mxu0 0
      %495 = vmatprep.subr.bf16.mxu0 0
      %496 = vmatpush1.bf16.msra.mxu0 0
      %497 = vmatprep.subr.bf16.mxu0 0
      %498 = vmatpush1.bf16.msra.mxu0 0
      %499 = vmatprep.subr.bf16.mxu0 0
      %500 = vmatpush1.bf16.msra.mxu0 0
      %501 = vmatprep.subr.bf16.mxu0 0
      %502 = vmatpush1.bf16.msra.mxu0 0
      %503 = vmatprep.subr.bf16.mxu0 0
      %504 = vmatpush1.bf16.msra.mxu0 0
      %505 = vmatprep.subr.bf16.mxu0 0
      %506 = vmatpush1.bf16.msra.mxu0 0
      %507 = vmatprep.subr.bf16.mxu0 0
      %508 = vmatpush1.bf16.msra.mxu0 0
      %509 = vmatprep.subr.bf16.mxu0 0
      %510 = vmatpush1.bf16.msra.mxu0 0
      %511 = vmatprep.mubr.bf16.mxu0 0
      %512 = vmatmul.mubr.bf16.gmra.mrb[0].mxu0 %v474
      %v513 = vpop.f32.mrb[0].mxu0
      %v514 = vadd.f32 0.0, %v513
      %v515 = vpop.f32.mrb[0].mxu0
      %v516 = vpop.f32.mrb[0].mxu0
      %v517 = vadd.f32 0.0, %v516
      %v518 = vpop.f32.mrb[0].mxu0
      %519 = vdwg.mxu0
      %v520 = vadd.f32 %v466, %v514
      %v521 = vadd.f32 %v467, %v517
      %s522 = sadd.s32 %s193, 2
      %s523 = smul.u32 %s522, 24
      %s524 = scalar_lea.vmem %s182, %s523
      %v525 = vld [vmem:[%s524] sm:$0xff]
      %v526 = vld [vmem:[%s524 + $0x8] sm:$0xff]
      %v527 = vpack.c.bf16 %v526, %v525
      %s528 = scalar_lea.vmem %s1, 6
      %v529 = vld [vmem:[%s528] sm:$0x1]
      %v531 = vsel %vm205, %v527, 0
      %v534 = vand.u32 %v529, %v211
      %536 = vmatprep.subr.bf16.mxu0 0
      %537 = vmatpush1.bf16.msra.mxu0 %v534
      %538 = vmatprep.subr.bf16.mxu0 0
      %539 = vmatpush1.bf16.msra.mxu0 0
      %540 = vmatprep.subr.bf16.mxu0 0
      %541 = vmatpush1.bf16.msra.mxu0 0
      %542 = vmatprep.subr.bf16.mxu0 0
      %543 = vmatpush1.bf16.msra.mxu0 0
      %544 = vmatprep.subr.bf16.mxu0 0
      %545 = vmatpush1.bf16.msra.mxu0 0
      %546 = vmatprep.subr.bf16.mxu0 0
      %547 = vmatpush1.bf16.msra.mxu0 0
      %548 = vmatprep.subr.bf16.mxu0 0
      %549 = vmatpush1.bf16.msra.mxu0 0
      %550 = vmatprep.subr.bf16.mxu0 0
      %551 = vmatpush1.bf16.msra.mxu0 0
      %552 = vmatprep.subr.bf16.mxu0 0
      %553 = vmatpush1.bf16.msra.mxu0 0
      %554 = vmatprep.subr.bf16.mxu0 0
      %555 = vmatpush1.bf16.msra.mxu0 0
      %556 = vmatprep.subr.bf16.mxu0 0
      %557 = vmatpush1.bf16.msra.mxu0 0
      %558 = vmatprep.subr.bf16.mxu0 0
      %559 = vmatpush1.bf16.msra.mxu0 0
      %560 = vmatprep.subr.bf16.mxu0 0
      %561 = vmatpush1.bf16.msra.mxu0 0
      %562 = vmatprep.subr.bf16.mxu0 0
      %563 = vmatpush1.bf16.msra.mxu0 0
      %564 = vmatprep.subr.bf16.mxu0 0
      %565 = vmatpush1.bf16.msra.mxu0 0
      %566 = vmatprep.subr.bf16.mxu0 0
      %567 = vmatpush1.bf16.msra.mxu0 0
      %568 = vmatprep.mubr.bf16.mxu0 0
      %569 = vmatmul.mubr.bf16.gmra.mrb[0].mxu0 %v531
      %v570 = vpop.f32.mrb[0].mxu0
      %v571 = vadd.f32 0.0, %v570
      %v572 = vpop.f32.mrb[0].mxu0
      %v573 = vpop.f32.mrb[0].mxu0
      %v574 = vadd.f32 0.0, %v573
      %v575 = vpop.f32.mrb[0].mxu0
      %576 = vdwg.mxu0
      %v577 = vadd.f32 %v520, %v571
      %v578 = vadd.f32 %v521, %v574
      %v579 = vld [vmem:[%s524 + $0x1] sm:$0xff]
      %v580 = vld [vmem:[%s524 + $0x9] sm:$0xff]
      %v581 = vpack.c.bf16 %v580, %v579
      %s582 = scalar_lea.vmem %s1, 7
      %v583 = vld [vmem:[%s582] sm:$0x1]
      %v585 = vsel %vm205, %v581, 0
      %v588 = vand.u32 %v583, %v211
      %590 = vmatprep.subr.bf16.mxu0 0
      %591 = vmatpush1.bf16.msra.mxu0 %v588
      %592 = vmatprep.subr.bf16.mxu0 0
      %593 = vmatpush1.bf16.msra.mxu0 0
      %594 = vmatprep.subr.bf16.mxu0 0
      %595 = vmatpush1.bf16.msra.mxu0 0
      %596 = vmatprep.subr.bf16.mxu0 0
      %597 = vmatpush1.bf16.msra.mxu0 0
      %598 = vmatprep.subr.bf16.mxu0 0
      %599 = vmatpush1.bf16.msra.mxu0 0
      %600 = vmatprep.subr.bf16.mxu0 0
      %601 = vmatpush1.bf16.msra.mxu0 0
      %602 = vmatprep.subr.bf16.mxu0 0
      %603 = vmatpush1.bf16.msra.mxu0 0
      %604 = vmatprep.subr.bf16.mxu0 0
      %605 = vmatpush1.bf16.msra.mxu0 0
      %606 = vmatprep.subr.bf16.mxu0 0
      %607 = vmatpush1.bf16.msra.mxu0 0
      %608 = vmatprep.subr.bf16.mxu0 0
      %609 = vmatpush1.bf16.msra.mxu0 0
      %610 = vmatprep.subr.bf16.mxu0 0
      %611 = vmatpush1.bf16.msra.mxu0 0
      %612 = vmatprep.subr.bf16.mxu0 0
      %613 = vmatpush1.bf16.msra.mxu0 0
      %614 = vmatprep.subr.bf16.mxu0 0
      %615 = vmatpush1.bf16.msra.mxu0 0
      %616 = vmatprep.subr.bf16.mxu0 0
      %617 = vmatpush1.bf16.msra.mxu0 0
      %618 = vmatprep.subr.bf16.mxu0 0
      %619 = vmatpush1.bf16.msra.mxu0 0
      %620 = vmatprep.subr.bf16.mxu0 0
      %621 = vmatpush1.bf16.msra.mxu0 0
      %622 = vmatprep.mubr.bf16.mxu0 0
      %623 = vmatmul.mubr.bf16.gmra.mrb[0].mxu0 %v585
      %v624 = vpop.f32.mrb[0].mxu0
      %v625 = vadd.f32 0.0, %v624
      %v626 = vpop.f32.mrb[0].mxu0
      %v627 = vpop.f32.mrb[0].mxu0
      %v628 = vadd.f32 0.0, %v627
      %v629 = vpop.f32.mrb[0].mxu0
      %630 = vdwg.mxu0
      %v631 = vadd.f32 %v577, %v625
      %v632 = vadd.f32 %v578, %v628
      %v633 = vld [vmem:[%s524 + $0x2] sm:$0xff]
      %v634 = vld [vmem:[%s524 + $0xa] sm:$0xff]
      %v635 = vpack.c.bf16 %v634, %v633
      %s636 = scalar_lea.vmem %s1, 8
      %v637 = vld [vmem:[%s636] sm:$0x1]
      %v639 = vsel %vm205, %v635, 0
      %v642 = vand.u32 %v637, %v211
      %644 = vmatprep.subr.bf16.mxu0 0
      %645 = vmatpush1.bf16.msra.mxu0 %v642
      %646 = vmatprep.subr.bf16.mxu0 0
      %647 = vmatpush1.bf16.msra.mxu0 0
      %648 = vmatprep.subr.bf16.mxu0 0
      %649 = vmatpush1.bf16.msra.mxu0 0
      %650 = vmatprep.subr.bf16.mxu0 0
      %651 = vmatpush1.bf16.msra.mxu0 0
      %652 = vmatprep.subr.bf16.mxu0 0
      %653 = vmatpush1.bf16.msra.mxu0 0
      %654 = vmatprep.subr.bf16.mxu0 0
      %655 = vmatpush1.bf16.msra.mxu0 0
      %656 = vmatprep.subr.bf16.mxu0 0
      %657 = vmatpush1.bf16.msra.mxu0 0
      %658 = vmatprep.subr.bf16.mxu0 0
      %659 = vmatpush1.bf16.msra.mxu0 0
      %660 = vmatprep.subr.bf16.mxu0 0
      %661 = vmatpush1.bf16.msra.mxu0 0
      %662 = vmatprep.subr.bf16.mxu0 0
      %663 = vmatpush1.bf16.msra.mxu0 0
      %664 = vmatprep.subr.bf16.mxu0 0
      %665 = vmatpush1.bf16.msra.mxu0 0
      %666 = vmatprep.subr.bf16.mxu0 0
      %667 = vmatpush1.bf16.msra.mxu0 0
      %668 = vmatprep.subr.bf16.mxu0 0
      %669 = vmatpush1.bf16.msra.mxu0 0
      %670 = vmatprep.subr.bf16.mxu0 0
      %671 = vmatpush1.bf16.msra.mxu0 0
      %672 = vmatprep.subr.bf16.mxu0 0
      %673 = vmatpush1.bf16.msra.mxu0 0
      %674 = vmatprep.subr.bf16.mxu0 0
      %675 = vmatpush1.bf16.msra.mxu0 0
      %676 = vmatprep.mubr.bf16.mxu0 0
      %677 = vmatmul.mubr.bf16.gmra.mrb[0].mxu0 %v639
      %v678 = vpop.f32.mrb[0].mxu0
      %v679 = vadd.f32 0.0, %v678
      %v680 = vpop.f32.mrb[0].mxu0
      %v681 = vpop.f32.mrb[0].mxu0
      %v682 = vadd.f32 0.0, %v681
      %v683 = vpop.f32.mrb[0].mxu0
      %684 = vdwg.mxu0
      %v685 = vadd.f32 %v631, %v679
      %v686 = vadd.f32 %v632, %v682
      %v688 = vlaneseq
      %v689 = vshrl.u32 %v688, 7
      %v690 = vsub.s32 0, %v689
      %v691 = vrot.slane %v192, %v690
      %v693 = vadd.f32 %v685, %v691
      %v694 = vadd.f32 %v686, %v691
      %v695 = vmax.f32 %v693, 0.0
      %v696 = vmax.f32 %v694, 0.0
      %697 = vmatprep.subr.bf16.mxu0 0
      %698 = vmatpush1.bf16.msra.mxu0 %v213
      %699 = vmatprep.subr.bf16.mxu0 0
      %700 = vmatpush1.bf16.msra.mxu0 0
      %701 = vmatprep.subr.bf16.mxu0 0
      %702 = vmatpush1.bf16.msra.mxu0 0
      %703 = vmatprep.subr.bf16.mxu0 0
      %704 = vmatpush1.bf16.msra.mxu0 0
      %705 = vmatprep.subr.bf16.mxu0 0
      %706 = vmatpush1.bf16.msra.mxu0 0
      %707 = vmatprep.subr.bf16.mxu0 0
      %708 = vmatpush1.bf16.msra.mxu0 0
      %709 = vmatprep.subr.bf16.mxu0 0
      %710 = vmatpush1.bf16.msra.mxu0 0
      %711 = vmatprep.subr.bf16.mxu0 0
      %712 = vmatpush1.bf16.msra.mxu0 0
      %713 = vmatprep.subr.bf16.mxu0 0
      %714 = vmatpush1.bf16.msra.mxu0 0
      %715 = vmatprep.subr.bf16.mxu0 0
      %716 = vmatpush1.bf16.msra.mxu0 0
      %717 = vmatprep.subr.bf16.mxu0 0
      %718 = vmatpush1.bf16.msra.mxu0 0
      %719 = vmatprep.subr.bf16.mxu0 0
      %720 = vmatpush1.bf16.msra.mxu0 0
      %721 = vmatprep.subr.bf16.mxu0 0
      %722 = vmatpush1.bf16.msra.mxu0 0
      %723 = vmatprep.subr.bf16.mxu0 0
      %724 = vmatpush1.bf16.msra.mxu0 0
      %725 = vmatprep.subr.bf16.mxu0 0
      %726 = vmatpush1.bf16.msra.mxu0 0
      %727 = vmatprep.subr.bf16.mxu0 0
      %728 = vmatpush1.bf16.msra.mxu0 0
      %729 = vmatprep.mubr.bf16.mxu0 0
      %730 = vmatmul.mubr.bf16.gmra.mrb[0].mxu0 %v420
      %v731 = vpop.f32.mrb[0].mxu0
      %v732 = vadd.f32 0.0, %v731
      %v733 = vpop.f32.mrb[0].mxu0
      %v734 = vpop.f32.mrb[0].mxu0
      %v735 = vadd.f32 0.0, %v734
      %v736 = vpop.f32.mrb[0].mxu0
      %737 = vdwg.mxu0
      %738 = vmatprep.subr.bf16.mxu0 0
      %739 = vmatpush1.bf16.msra.mxu0 %v260
      %740 = vmatprep.subr.bf16.mxu0 0
      %741 = vmatpush1.bf16.msra.mxu0 0
      %742 = vmatprep.subr.bf16.mxu0 0
      %743 = vmatpush1.bf16.msra.mxu0 0
      %744 = vmatprep.subr.bf16.mxu0 0
      %745 = vmatpush1.bf16.msra.mxu0 0
      %746 = vmatprep.subr.bf16.mxu0 0
      %747 = vmatpush1.bf16.msra.mxu0 0
      %748 = vmatprep.subr.bf16.mxu0 0
      %749 = vmatpush1.bf16.msra.mxu0 0
      %750 = vmatprep.subr.bf16.mxu0 0
      %751 = vmatpush1.bf16.msra.mxu0 0
      %752 = vmatprep.subr.bf16.mxu0 0
      %753 = vmatpush1.bf16.msra.mxu0 0
      %754 = vmatprep.subr.bf16.mxu0 0
      %755 = vmatpush1.bf16.msra.mxu0 0
      %756 = vmatprep.subr.bf16.mxu0 0
      %757 = vmatpush1.bf16.msra.mxu0 0
      %758 = vmatprep.subr.bf16.mxu0 0
      %759 = vmatpush1.bf16.msra.mxu0 0
      %760 = vmatprep.subr.bf16.mxu0 0
      %761 = vmatpush1.bf16.msra.mxu0 0
      %762 = vmatprep.subr.bf16.mxu0 0
      %763 = vmatpush1.bf16.msra.mxu0 0
      %764 = vmatprep.subr.bf16.mxu0 0
      %765 = vmatpush1.bf16.msra.mxu0 0
      %766 = vmatprep.subr.bf16.mxu0 0
      %767 = vmatpush1.bf16.msra.mxu0 0
      %768 = vmatprep.subr.bf16.mxu0 0
      %769 = vmatpush1.bf16.msra.mxu0 0
      %770 = vmatprep.mubr.bf16.mxu0 0
      %771 = vmatmul.mubr.bf16.gmra.mrb[0].mxu0 %v366
      %v772 = vpop.f32.mrb[0].mxu0
      %v773 = vadd.f32 %v732, %v772
      %v774 = vpop.f32.mrb[0].mxu0
      %v775 = vpop.f32.mrb[0].mxu0
      %v776 = vadd.f32 %v735, %v775
      %v777 = vpop.f32.mrb[0].mxu0
      %778 = vdwg.mxu0
      %779 = vmatprep.subr.bf16.mxu0 0
      %780 = vmatpush1.bf16.msra.mxu0 %v312
      %781 = vmatprep.subr.bf16.mxu0 0
      %782 = vmatpush1.bf16.msra.mxu0 0
      %783 = vmatprep.subr.bf16.mxu0 0
      %784 = vmatpush1.bf16.msra.mxu0 0
      %785 = vmatprep.subr.bf16.mxu0 0
      %786 = vmatpush1.bf16.msra.mxu0 0
      %787 = vmatprep.subr.bf16.mxu0 0
      %788 = vmatpush1.bf16.msra.mxu0 0
      %789 = vmatprep.subr.bf16.mxu0 0
      %790 = vmatpush1.bf16.msra.mxu0 0
      %791 = vmatprep.subr.bf16.mxu0 0
      %792 = vmatpush1.bf16.msra.mxu0 0
      %793 = vmatprep.subr.bf16.mxu0 0
      %794 = vmatpush1.bf16.msra.mxu0 0
      %795 = vmatprep.subr.bf16.mxu0 0
      %796 = vmatpush1.bf16.msra.mxu0 0
      %797 = vmatprep.subr.bf16.mxu0 0
      %798 = vmatpush1.bf16.msra.mxu0 0
      %799 = vmatprep.subr.bf16.mxu0 0
      %800 = vmatpush1.bf16.msra.mxu0 0
      %801 = vmatprep.subr.bf16.mxu0 0
      %802 = vmatpush1.bf16.msra.mxu0 0
      %803 = vmatprep.subr.bf16.mxu0 0
      %804 = vmatpush1.bf16.msra.mxu0 0
      %805 = vmatprep.subr.bf16.mxu0 0
      %806 = vmatpush1.bf16.msra.mxu0 0
      %807 = vmatprep.subr.bf16.mxu0 0
      %808 = vmatpush1.bf16.msra.mxu0 0
      %809 = vmatprep.subr.bf16.mxu0 0
      %810 = vmatpush1.bf16.msra.mxu0 0
      %811 = vmatprep.mubr.bf16.mxu0 0
      %812 = vmatmul.mubr.bf16.gmra.mrb[0].mxu0 %v474
      %v813 = vpop.f32.mrb[0].mxu0
      %v814 = vadd.f32 0.0, %v813
      %v815 = vpop.f32.mrb[0].mxu0
      %v816 = vpop.f32.mrb[0].mxu0
      %v817 = vadd.f32 0.0, %v816
      %v818 = vpop.f32.mrb[0].mxu0
      %819 = vdwg.mxu0
      %v820 = vadd.f32 %v773, %v814
      %v821 = vadd.f32 %v776, %v817
      %822 = vmatprep.subr.bf16.mxu0 0
      %823 = vmatpush1.bf16.msra.mxu0 %v369
      %824 = vmatprep.subr.bf16.mxu0 0
      %825 = vmatpush1.bf16.msra.mxu0 0
      %826 = vmatprep.subr.bf16.mxu0 0
      %827 = vmatpush1.bf16.msra.mxu0 0
      %828 = vmatprep.subr.bf16.mxu0 0
      %829 = vmatpush1.bf16.msra.mxu0 0
      %830 = vmatprep.subr.bf16.mxu0 0
      %831 = vmatpush1.bf16.msra.mxu0 0
      %832 = vmatprep.subr.bf16.mxu0 0
      %833 = vmatpush1.bf16.msra.mxu0 0
      %834 = vmatprep.subr.bf16.mxu0 0
      %835 = vmatpush1.bf16.msra.mxu0 0
      %836 = vmatprep.subr.bf16.mxu0 0
      %837 = vmatpush1.bf16.msra.mxu0 0
      %838 = vmatprep.subr.bf16.mxu0 0
      %839 = vmatpush1.bf16.msra.mxu0 0
      %840 = vmatprep.subr.bf16.mxu0 0
      %841 = vmatpush1.bf16.msra.mxu0 0
      %842 = vmatprep.subr.bf16.mxu0 0
      %843 = vmatpush1.bf16.msra.mxu0 0
      %844 = vmatprep.subr.bf16.mxu0 0
      %845 = vmatpush1.bf16.msra.mxu0 0
      %846 = vmatprep.subr.bf16.mxu0 0
      %847 = vmatpush1.bf16.msra.mxu0 0
      %848 = vmatprep.subr.bf16.mxu0 0
      %849 = vmatpush1.bf16.msra.mxu0 0
      %850 = vmatprep.subr.bf16.mxu0 0
      %851 = vmatpush1.bf16.msra.mxu0 0
      %852 = vmatprep.subr.bf16.mxu0 0
      %853 = vmatpush1.bf16.msra.mxu0 0
      %854 = vmatprep.mubr.bf16.mxu0 0
      %855 = vmatmul.mubr.bf16.gmra.mrb[0].mxu0 %v531
      %v856 = vpop.f32.mrb[0].mxu0
      %v857 = vadd.f32 0.0, %v856
      %v858 = vpop.f32.mrb[0].mxu0
      %v859 = vpop.f32.mrb[0].mxu0
      %v860 = vadd.f32 0.0, %v859
      %v861 = vpop.f32.mrb[0].mxu0
      %862 = vdwg.mxu0
      %v863 = vadd.f32 %v820, %v857
      %v864 = vadd.f32 %v821, %v860
      %865 = vmatprep.subr.bf16.mxu0 0
      %866 = vmatpush1.bf16.msra.mxu0 %v423
      %867 = vmatprep.subr.bf16.mxu0 0
      %868 = vmatpush1.bf16.msra.mxu0 0
      %869 = vmatprep.subr.bf16.mxu0 0
      %870 = vmatpush1.bf16.msra.mxu0 0
      %871 = vmatprep.subr.bf16.mxu0 0
      %872 = vmatpush1.bf16.msra.mxu0 0
      %873 = vmatprep.subr.bf16.mxu0 0
      %874 = vmatpush1.bf16.msra.mxu0 0
      %875 = vmatprep.subr.bf16.mxu0 0
      %876 = vmatpush1.bf16.msra.mxu0 0
      %877 = vmatprep.subr.bf16.mxu0 0
      %878 = vmatpush1.bf16.msra.mxu0 0
      %879 = vmatprep.subr.bf16.mxu0 0
      %880 = vmatpush1.bf16.msra.mxu0 0
      %881 = vmatprep.subr.bf16.mxu0 0
      %882 = vmatpush1.bf16.msra.mxu0 0
      %883 = vmatprep.subr.bf16.mxu0 0
      %884 = vmatpush1.bf16.msra.mxu0 0
      %885 = vmatprep.subr.bf16.mxu0 0
      %886 = vmatpush1.bf16.msra.mxu0 0
      %887 = vmatprep.subr.bf16.mxu0 0
      %888 = vmatpush1.bf16.msra.mxu0 0
      %889 = vmatprep.subr.bf16.mxu0 0
      %890 = vmatpush1.bf16.msra.mxu0 0
      %891 = vmatprep.subr.bf16.mxu0 0
      %892 = vmatpush1.bf16.msra.mxu0 0
      %893 = vmatprep.subr.bf16.mxu0 0
      %894 = vmatpush1.bf16.msra.mxu0 0
      %895 = vmatprep.subr.bf16.mxu0 0
      %896 = vmatpush1.bf16.msra.mxu0 0
      %897 = vmatprep.mubr.bf16.mxu0 0
      %898 = vmatmul.mubr.bf16.gmra.mrb[0].mxu0 %v585
      %v899 = vpop.f32.mrb[0].mxu0
      %v900 = vadd.f32 0.0, %v899
      %v901 = vpop.f32.mrb[0].mxu0
      %v902 = vpop.f32.mrb[0].mxu0
      %v903 = vadd.f32 0.0, %v902
      %v904 = vpop.f32.mrb[0].mxu0
      %905 = vdwg.mxu0
      %v906 = vadd.f32 %v863, %v900
      %v907 = vadd.f32 %v864, %v903
      %908 = vmatprep.subr.bf16.mxu0 0
      %909 = vmatpush1.bf16.msra.mxu0 %v477
      %910 = vmatprep.subr.bf16.mxu0 0
      %911 = vmatpush1.bf16.msra.mxu0 0
      %912 = vmatprep.subr.bf16.mxu0 0
      %913 = vmatpush1.bf16.msra.mxu0 0
      %914 = vmatprep.subr.bf16.mxu0 0
      %915 = vmatpush1.bf16.msra.mxu0 0
      %916 = vmatprep.subr.bf16.mxu0 0
      %917 = vmatpush1.bf16.msra.mxu0 0
      %918 = vmatprep.subr.bf16.mxu0 0
      %919 = vmatpush1.bf16.msra.mxu0 0
      %920 = vmatprep.subr.bf16.mxu0 0
      %921 = vmatpush1.bf16.msra.mxu0 0
      %922 = vmatprep.subr.bf16.mxu0 0
      %923 = vmatpush1.bf16.msra.mxu0 0
      %924 = vmatprep.subr.bf16.mxu0 0
      %925 = vmatpush1.bf16.msra.mxu0 0
      %926 = vmatprep.subr.bf16.mxu0 0
      %927 = vmatpush1.bf16.msra.mxu0 0
      %928 = vmatprep.subr.bf16.mxu0 0
      %929 = vmatpush1.bf16.msra.mxu0 0
      %930 = vmatprep.subr.bf16.mxu0 0
      %931 = vmatpush1.bf16.msra.mxu0 0
      %932 = vmatprep.subr.bf16.mxu0 0
      %933 = vmatpush1.bf16.msra.mxu0 0
      %934 = vmatprep.subr.bf16.mxu0 0
      %935 = vmatpush1.bf16.msra.mxu0 0
      %936 = vmatprep.subr.bf16.mxu0 0
      %937 = vmatpush1.bf16.msra.mxu0 0
      %938 = vmatprep.subr.bf16.mxu0 0
      %939 = vmatpush1.bf16.msra.mxu0 0
      %940 = vmatprep.mubr.bf16.mxu0 0
      %941 = vmatmul.mubr.bf16.gmra.mrb[0].mxu0 %v639
      %v942 = vpop.f32.mrb[0].mxu0
      %v943 = vadd.f32 0.0, %v942
      %v944 = vpop.f32.mrb[0].mxu0
      %v945 = vpop.f32.mrb[0].mxu0
      %v946 = vadd.f32 0.0, %v945
      %v947 = vpop.f32.mrb[0].mxu0
      %948 = vdwg.mxu0
      %v949 = vadd.f32 %v906, %v943
      %v950 = vadd.f32 %v907, %v946
      %s951 = sadd.s32 %s193, 3
      %s952 = smul.u32 %s951, 24
      %s953 = scalar_lea.vmem %s182, %s952
      %v954 = vld [vmem:[%s953] sm:$0xff]
      %v955 = vld [vmem:[%s953 + $0x8] sm:$0xff]
      %v956 = vpack.c.bf16 %v955, %v954
      %v958 = vsel %vm205, %v956, 0
      %960 = vmatprep.subr.bf16.mxu0 0
      %961 = vmatpush1.bf16.msra.mxu0 %v534
      %962 = vmatprep.subr.bf16.mxu0 0
      %963 = vmatpush1.bf16.msra.mxu0 0
      %964 = vmatprep.subr.bf16.mxu0 0
      %965 = vmatpush1.bf16.msra.mxu0 0
      %966 = vmatprep.subr.bf16.mxu0 0
      %967 = vmatpush1.bf16.msra.mxu0 0
      %968 = vmatprep.subr.bf16.mxu0 0
      %969 = vmatpush1.bf16.msra.mxu0 0
      %970 = vmatprep.subr.bf16.mxu0 0
      %971 = vmatpush1.bf16.msra.mxu0 0
      %972 = vmatprep.subr.bf16.mxu0 0
      %973 = vmatpush1.bf16.msra.mxu0 0
      %974 = vmatprep.subr.bf16.mxu0 0
      %975 = vmatpush1.bf16.msra.mxu0 0
      %976 = vmatprep.subr.bf16.mxu0 0
      %977 = vmatpush1.bf16.msra.mxu0 0
      %978 = vmatprep.subr.bf16.mxu0 0
      %979 = vmatpush1.bf16.msra.mxu0 0
      %980 = vmatprep.subr.bf16.mxu0 0
      %981 = vmatpush1.bf16.msra.mxu0 0
      %982 = vmatprep.subr.bf16.mxu0 0
      %983 = vmatpush1.bf16.msra.mxu0 0
      %984 = vmatprep.subr.bf16.mxu0 0
      %985 = vmatpush1.bf16.msra.mxu0 0
      %986 = vmatprep.subr.bf16.mxu0 0
      %987 = vmatpush1.bf16.msra.mxu0 0
      %988 = vmatprep.subr.bf16.mxu0 0
      %989 = vmatpush1.bf16.msra.mxu0 0
      %990 = vmatprep.subr.bf16.mxu0 0
      %991 = vmatpush1.bf16.msra.mxu0 0
      %992 = vmatprep.mubr.bf16.mxu0 0
      %993 = vmatmul.mubr.bf16.gmra.mrb[0].mxu0 %v958
      %v994 = vpop.f32.mrb[0].mxu0
      %v995 = vadd.f32 0.0, %v994
      %v996 = vpop.f32.mrb[0].mxu0
      %v997 = vpop.f32.mrb[0].mxu0
      %v998 = vadd.f32 0.0, %v997
      %v999 = vpop.f32.mrb[0].mxu0
      %1000 = vdwg.mxu0
      %v1001 = vadd.f32 %v949, %v995
      %v1002 = vadd.f32 %v950, %v998
      %v1003 = vld [vmem:[%s953 + $0x1] sm:$0xff]
      %v1004 = vld [vmem:[%s953 + $0x9] sm:$0xff]
      %v1005 = vpack.c.bf16 %v1004, %v1003
      %v1007 = vsel %vm205, %v1005, 0
      %1009 = vmatprep.subr.bf16.mxu0 0
      %1010 = vmatpush1.bf16.msra.mxu0 %v588
      %1011 = vmatprep.subr.bf16.mxu0 0
      %1012 = vmatpush1.bf16.msra.mxu0 0
      %1013 = vmatprep.subr.bf16.mxu0 0
      %1014 = vmatpush1.bf16.msra.mxu0 0
      %1015 = vmatprep.subr.bf16.mxu0 0
      %1016 = vmatpush1.bf16.msra.mxu0 0
      %1017 = vmatprep.subr.bf16.mxu0 0
      %1018 = vmatpush1.bf16.msra.mxu0 0
      %1019 = vmatprep.subr.bf16.mxu0 0
      %1020 = vmatpush1.bf16.msra.mxu0 0
      %1021 = vmatprep.subr.bf16.mxu0 0
      %1022 = vmatpush1.bf16.msra.mxu0 0
      %1023 = vmatprep.subr.bf16.mxu0 0
      %1024 = vmatpush1.bf16.msra.mxu0 0
      %1025 = vmatprep.subr.bf16.mxu0 0
      %1026 = vmatpush1.bf16.msra.mxu0 0
      %1027 = vmatprep.subr.bf16.mxu0 0
      %1028 = vmatpush1.bf16.msra.mxu0 0
      %1029 = vmatprep.subr.bf16.mxu0 0
      %1030 = vmatpush1.bf16.msra.mxu0 0
      %1031 = vmatprep.subr.bf16.mxu0 0
      %1032 = vmatpush1.bf16.msra.mxu0 0
      %1033 = vmatprep.subr.bf16.mxu0 0
      %1034 = vmatpush1.bf16.msra.mxu0 0
      %1035 = vmatprep.subr.bf16.mxu0 0
      %1036 = vmatpush1.bf16.msra.mxu0 0
      %1037 = vmatprep.subr.bf16.mxu0 0
      %1038 = vmatpush1.bf16.msra.mxu0 0
      %1039 = vmatprep.subr.bf16.mxu0 0
      %1040 = vmatpush1.bf16.msra.mxu0 0
      %1041 = vmatprep.mubr.bf16.mxu0 0
      %1042 = vmatmul.mubr.bf16.gmra.mrb[0].mxu0 %v1007
      %v1043 = vpop.f32.mrb[0].mxu0
      %v1044 = vadd.f32 0.0, %v1043
      %v1045 = vpop.f32.mrb[0].mxu0
      %v1046 = vpop.f32.mrb[0].mxu0
      %v1047 = vadd.f32 0.0, %v1046
      %v1048 = vpop.f32.mrb[0].mxu0
      %1049 = vdwg.mxu0
      %v1050 = vadd.f32 %v1001, %v1044
      %v1051 = vadd.f32 %v1002, %v1047
      %v1052 = vld [vmem:[%s953 + $0x2] sm:$0xff]
      %v1053 = vld [vmem:[%s953 + $0xa] sm:$0xff]
      %v1054 = vpack.c.bf16 %v1053, %v1052
      %v1056 = vsel %vm205, %v1054, 0
      %1058 = vmatprep.subr.bf16.mxu0 0
      %1059 = vmatpush1.bf16.msra.mxu0 %v642
      %1060 = vmatprep.subr.bf16.mxu0 0
      %1061 = vmatpush1.bf16.msra.mxu0 0
      %1062 = vmatprep.subr.bf16.mxu0 0
      %1063 = vmatpush1.bf16.msra.mxu0 0
      %1064 = vmatprep.subr.bf16.mxu0 0
      %1065 = vmatpush1.bf16.msra.mxu0 0
      %1066 = vmatprep.subr.bf16.mxu0 0
      %1067 = vmatpush1.bf16.msra.mxu0 0
      %1068 = vmatprep.subr.bf16.mxu0 0
      %1069 = vmatpush1.bf16.msra.mxu0 0
      %1070 = vmatprep.subr.bf16.mxu0 0
      %1071 = vmatpush1.bf16.msra.mxu0 0
      %1072 = vmatprep.subr.bf16.mxu0 0
      %1073 = vmatpush1.bf16.msra.mxu0 0
      %1074 = vmatprep.subr.bf16.mxu0 0
      %1075 = vmatpush1.bf16.msra.mxu0 0
      %1076 = vmatprep.subr.bf16.mxu0 0
      %1077 = vmatpush1.bf16.msra.mxu0 0
      %1078 = vmatprep.subr.bf16.mxu0 0
      %1079 = vmatpush1.bf16.msra.mxu0 0
      %1080 = vmatprep.subr.bf16.mxu0 0
      %1081 = vmatpush1.bf16.msra.mxu0 0
      %1082 = vmatprep.subr.bf16.mxu0 0
      %1083 = vmatpush1.bf16.msra.mxu0 0
      %1084 = vmatprep.subr.bf16.mxu0 0
      %1085 = vmatpush1.bf16.msra.mxu0 0
      %1086 = vmatprep.subr.bf16.mxu0 0
      %1087 = vmatpush1.bf16.msra.mxu0 0
      %1088 = vmatprep.subr.bf16.mxu0 0
      %1089 = vmatpush1.bf16.msra.mxu0 0
      %1090 = vmatprep.mubr.bf16.mxu0 0
      %1091 = vmatmul.mubr.bf16.gmra.mrb[0].mxu0 %v1056
      %v1092 = vpop.f32.mrb[0].mxu0
      %v1093 = vadd.f32 0.0, %v1092
      %v1094 = vpop.f32.mrb[0].mxu0
      %v1095 = vpop.f32.mrb[0].mxu0
      %v1096 = vadd.f32 0.0, %v1095
      %v1097 = vpop.f32.mrb[0].mxu0
      %1098 = vdwg.mxu0
      %v1099 = vadd.f32 %v1050, %v1093
      %v1100 = vadd.f32 %v1051, %v1096
      %v1101 = vadd.f32 %v1099, %v691
      %v1102 = vadd.f32 %v1100, %v691
      %v1103 = vmax.f32 %v1101, 0.0
      %v1104 = vmax.f32 %v1102, 0.0
      %v1105 = vmax.f32 %v695, %v1103
      %v1106 = vmax.f32 %v696, %v1104
      %vm1107 = vcmask 130048
      %1108 = vst.msk [vmem:[#allocation2] sm:$0xff] %vm1107, %v1105
      %1109 = vst.msk [vmem:[#allocation2 + $0x8] sm:$0xff] %vm1107, %v1106
      %v1110 = vld [vmem:[#allocation2] ss:$2 sm:$0xff]
      %s1111 = scalar_lea.vmem [#allocation2], 1
      %v1112 = vld [vmem:[%s1111] ss:$2 sm:$0xff]
      %v1113 = vmax.f32 %v1110, %v1112
      %1114 = vst.msk [vmem:[%s190] sm:$0xff] %vm1107, %v1113
      %p1115 = scmp.lt.s32.totalorder %s18, 1
      %s1116 = scalar_select %p1115, %s18, 1
      %p1117 = scmp.lt.s32.totalorder %s19, 7
      %s1118 = scalar_select %p1117, %s19, 7
      %s1119 = smul.addr %s1116, 8
      %s1120 = sadd.s32 %s1118, %s1119
      %s1121 = smul.addr %s1120, 8
      %s1122 = scalar_lea.vmem %s3, %s1121
      // Predicated region
      $region33: #{better_cnn_forward.4} parent=31 // pred_check
        %p1123 = pneg %p114
      $region34: #{better_cnn_forward.4} parent=31 // pred_check_branch
        %1125 = sbr.rel (%p1123) target = $region36
      $region35: #{better_cnn_forward.4} parent=31 // pred_region
        _
      $region36: #{better_cnn_forward.4} parent=31 // pred_fallthru
        _
    $region32: #{better_cnn_forward.4} parent=5 // pred_fallthru
      _
    %p1126 = scmp.le.s32.totalorder 2, %s9
    // Predicated region
    $region37: #{better_cnn_forward.4} parent=5 // pred_check
      %p1127 = pneg %p1126
    $region38: #{better_cnn_forward.4} parent=5 // pred_check_branch
      %1129 = sbr.rel (%p1127) target = $region40
    $region39: #{better_cnn_forward.4} parent=5 // pred_region
      %s1130 = ssub.s32 %s9, 2
      // Predicated region
      $region41: #{better_cnn_forward.4} parent=39 // pred_check
        %p1131 = pneg %p120
      $region42: #{better_cnn_forward.4} parent=39 // pred_check_branch
        %1133 = sbr.rel (%p1131) target = $region44
      $region43: #{better_cnn_forward.4} parent=39 // pred_region
        %p1134 = scmp.lt.s32.totalorder %s20, 1
        %s1135 = scalar_select %p1134, %s20, 1
        %p1136 = scmp.lt.s32.totalorder %s21, 7
        %s1137 = scalar_select %p1136, %s21, 7
        %s1138 = smul.addr %s1135, 8
        %s1139 = sadd.s32 %s1137, %s1138
        %s1140 = smul.addr %s1139, 8
        %s1141 = scalar_lea.vmem %s3, %s1140
      $region44: #{better_cnn_forward.4} parent=39 // pred_fallthru
        _
    $region40: #{better_cnn_forward.4} parent=5 // pred_fallthru
      _
  $region6: #{better_cnn_forward.4} parent=0 // loop_footer
    %s13 = sadd.s32 1, %s9
  $region7: #{better_cnn_forward.4} parent=0 // loop_footer_branch
    %8 = sbr.rel target = $region3
  $region8: #{better_cnn_forward.4} parent=0 // loop_exit
    _

// kernel: better_cnn_forward.6
$region0: #{better_cnn_forward.6}
  #allocation0 [shape = 'u32[]', space=smem, size = 0x4, offset = 0x4, fixed_abs, tag = 'smem constant byte address 0x4 - core index']
  #allocation1 [shape = 'u32[144,128]{1,0:T(1,128)}', space=vmem, size = 0x12000, scoped, tag = 'internal scratch']
  #allocation2 [shape = 'f32[4,64]{1,0:T(4,128)}', space=vmem, size = 0x800, scoped, tag = 'scratch operand']
  %s0 = inlined_call_operand.vmem [shape: f32[2,6,6,32], index: 0, kind: input, shape index: {}]
  %s1 = inlined_call_operand.vmem [shape: bf16[9,32,64], index: 1, kind: input, shape index: {}]
  %s2 = inlined_call_operand.vmem [shape: f32[1,64], index: 2, kind: input, shape index: {}]
  %s3 = inlined_call_operand.vmem [shape: f32[2,2,2,64], index: 3, kind: output, shape index: {}]
  %s4 = sld [smem:[#allocation0]]
  $region45: #{better_cnn_forward.6} parent=0
    _
  %s6 = ssub.s32 1, %s4
  %s7 = scalar_select 0, %s6, %s4
  loop: start=0, step=1, limit=6
  $region2: #{better_cnn_forward.6} parent=0 // loop_pre_header
    _
  $region3: #{better_cnn_forward.6} parent=0 // loop_header
    %s9 = sphi 0, %s13
    %p10 = scmp.ge.s32.totalorder %s9, 6
    %s16 = sphi 0, %s28
    %s17 = sphi 0, %s24
    %s18 = sphi 0, %s16
    %s19 = sphi 0, %s17
    %s20 = sphi 0, %s18
    %s21 = sphi 0, %s19
    %s31 = sphi 0, %s33
    %s34 = sphi 0, %s31
    %s35 = sphi 0, %s34
    %s51 = sphi 0, %s35
    %s55 = sphi 0, %s55
    %s57 = sphi 0, %s55
    %s58 = sphi 0, %s57
    %s72 = sphi 0, %s58
    %s76 = sphi 0, %s76
    %s78 = sphi 0, %s76
    %s79 = sphi 0, %s78
    %s93 = sphi 0, %s79
    %s101 = sphi 0, %s103
    %s104 = sphi 0, %s101
    %s105 = sphi 0, %s104
    %s121 = sphi 0, %s105
  $region4: #{better_cnn_forward.6} parent=0 // loop_header_branch
    %12 = sbr.rel (%p10) target = $region8
  $region5: #{better_cnn_forward.6} parent=0 // loop_body
    %s14 = ssub.s32 %s9, 1
    %s15 = ssub.s32 %s9, 2
    %s22 = sadd.s32 1, %s17
    %p23 = scmp.ge.s32.totalorder %s22, 2
    %s24 = scalar_select %p23, 0, %s22
    %s25 = sadd.s32 1, %s16
    %s26 = scalar_select %p23, %s25, %s16
    %p27 = scmp.ge.s32.totalorder %s26, 2
    %s28 = scalar_select %p27, 0, %s26
    %s29 = ssub.s32 %s16, %s28
    %p30 = scmp.eq.s32.totalorder %s29, 0
    %s32 = sadd.s32 %s31, 1
    %s33 = scalar_select %p30, %s31, %s32
    %p36 = pneg %p30
    %p37 = scmp.eq.s32.totalorder %s9, 3
    %p38 = por %p36, %p37
    %p39 = scmp.ne.s32.totalorder %s31, %s34
    %p40 = scmp.eq.s32.totalorder %s9, 0
    %p41 = por %p39, %p40
    %p42 = scmp.ne.s32.totalorder %s31, %s34
    %p43 = scmp.eq.s32.totalorder %s14, 3
    %p44 = por %p42, %p43
    %p45 = scmp.ne.s32.totalorder %s34, %s35
    %p46 = scmp.eq.s32.totalorder %s14, 0
    %p47 = por %p45, %p46
    %p48 = scmp.ne.s32.totalorder %s34, %s35
    %p49 = scmp.eq.s32.totalorder %s15, 3
    %p50 = por %p48, %p49
    %p52 = scmp.ne.s32.totalorder %s35, %s51
    %p53 = scmp.eq.s32.totalorder %s15, 0
    %p54 = por %p52, %p53
    %s56 = sadd.s32 %s55, 1
    %p59 = scmp.eq.s32.totalorder %s9, 3
    %p60 = scmp.ne.s32.totalorder %s55, %s57
    %p61 = scmp.eq.s32.totalorder %s9, 0
    %p62 = por %p60, %p61
    %p63 = scmp.ne.s32.totalorder %s55, %s57
    %p64 = scmp.eq.s32.totalorder %s14, 3
    %p65 = por %p63, %p64
    %p66 = scmp.ne.s32.totalorder %s57, %s58
    %p67 = scmp.eq.s32.totalorder %s14, 0
    %p68 = por %p66, %p67
    %p69 = scmp.ne.s32.totalorder %s57, %s58
    %p70 = scmp.eq.s32.totalorder %s15, 3
    %p71 = por %p69, %p70
    %p73 = scmp.ne.s32.totalorder %s58, %s72
    %p74 = scmp.eq.s32.totalorder %s15, 0
    %p75 = por %p73, %p74
    %s77 = sadd.s32 %s76, 1
    %p80 = scmp.eq.s32.totalorder %s9, 3
    %p81 = scmp.ne.s32.totalorder %s76, %s78
    %p82 = scmp.eq.s32.totalorder %s9, 0
    %p83 = por %p81, %p82
    %p84 = scmp.ne.s32.totalorder %s76, %s78
    %p85 = scmp.eq.s32.totalorder %s14, 3
    %p86 = por %p84, %p85
    %p87 = scmp.ne.s32.totalorder %s78, %s79
    %p88 = scmp.eq.s32.totalorder %s14, 0
    %p89 = por %p87, %p88
    %p90 = scmp.ne.s32.totalorder %s78, %s79
    %p91 = scmp.eq.s32.totalorder %s15, 3
    %p92 = por %p90, %p91
    %p94 = scmp.ne.s32.totalorder %s79, %s93
    %p95 = scmp.eq.s32.totalorder %s15, 0
    %p96 = por %p94, %p95
    %s97 = ssub.s32 %s16, %s28
    %s98 = ssub.s32 %s17, %s24
    %s99 = sor.u32 %s97, %s98
    %p100 = scmp.eq.s32.totalorder %s99, 0
    %s102 = sadd.s32 %s101, 1
    %s103 = scalar_select %p100, %s101, %s102
    %p106 = pneg %p100
    %p107 = scmp.eq.s32.totalorder %s9, 3
    %p108 = por %p106, %p107
    %p109 = scmp.ne.s32.totalorder %s101, %s104
    %p110 = scmp.eq.s32.totalorder %s9, 0
    %p111 = por %p109, %p110
    %p112 = scmp.ne.s32.totalorder %s101, %s104
    %p113 = scmp.eq.s32.totalorder %s14, 3
    %p114 = por %p112, %p113
    %p115 = scmp.ne.s32.totalorder %s104, %s105
    %p116 = scmp.eq.s32.totalorder %s14, 0
    %p117 = por %p115, %p116
    %p118 = scmp.ne.s32.totalorder %s104, %s105
    %p119 = scmp.eq.s32.totalorder %s15, 3
    %p120 = por %p118, %p119
    %p122 = scmp.ne.s32.totalorder %s105, %s121
    %p123 = scmp.eq.s32.totalorder %s15, 0
    %p124 = por %p122, %p123
    %p125 = scmp.le.s32.totalorder 1, %s9
    %p126 = scmp.lt.s32.totalorder %s9, 5
    %p127 = pnand %p125, %p126
    %p128 = pneg %p127
    // Predicated region
    $region9: #{better_cnn_forward.6} parent=5 // pred_check
      _
    $region10: #{better_cnn_forward.6} parent=5 // pred_check_branch
      %130 = sbr.rel (%p127) target = $region12
    $region11: #{better_cnn_forward.6} parent=5 // pred_region
      %s131 = ssub.s32 %s9, 1
      // Predicated region
      $region13: #{better_cnn_forward.6} parent=11 // pred_check
        %p132 = pneg %p68
      $region14: #{better_cnn_forward.6} parent=11 // pred_check_branch
        %134 = sbr.rel (%p132) target = $region16
      $region15: #{better_cnn_forward.6} parent=11 // pred_region
        _
      $region16: #{better_cnn_forward.6} parent=11 // pred_fallthru
        _
      // Predicated region
      $region17: #{better_cnn_forward.6} parent=11 // pred_check
        %p135 = pneg %p89
      $region18: #{better_cnn_forward.6} parent=11 // pred_check_branch
        %137 = sbr.rel (%p135) target = $region20
      $region19: #{better_cnn_forward.6} parent=11 // pred_region
        _
      $region20: #{better_cnn_forward.6} parent=11 // pred_fallthru
        _
    $region12: #{better_cnn_forward.6} parent=5 // pred_fallthru
      _
    %p138 = scmp.lt.s32.totalorder %s9, 4
    // Predicated region
    $region21: #{better_cnn_forward.6} parent=5 // pred_check
      %p139 = pneg %p138
    $region22: #{better_cnn_forward.6} parent=5 // pred_check_branch
      %141 = sbr.rel (%p139) target = $region24
    $region23: #{better_cnn_forward.6} parent=5 // pred_region
      // Predicated region
      $region25: #{better_cnn_forward.6} parent=23 // pred_check
        %p142 = pneg %p41
      $region26: #{better_cnn_forward.6} parent=23 // pred_check_branch
        %144 = sbr.rel (%p142) target = $region28
      $region27: #{better_cnn_forward.6} parent=23 // pred_region
        %p145 = scmp.lt.s32.totalorder %s16, 1
        %s146 = scalar_select %p145, %s16, 1
        %s147 = smul.addr %s146, 6
        %s148 = smul.addr %s147, 8
        %s149 = scalar_lea.vmem %s0, %s148
      $region28: #{better_cnn_forward.6} parent=23 // pred_fallthru
        _
    $region24: #{better_cnn_forward.6} parent=5 // pred_fallthru
      _
    %p150 = scmp.le.s32.totalorder 1, %s9
    %p151 = scmp.lt.s32.totalorder %s9, 5
    %p152 = pnand %p150, %p151
    %p153 = pneg %p152
    // Predicated region
    $region29: #{better_cnn_forward.6} parent=5 // pred_check
      _
    $region30: #{better_cnn_forward.6} parent=5 // pred_check_branch
      %155 = sbr.rel (%p152) target = $region32
    $region31: #{better_cnn_forward.6} parent=5 // pred_region
      %s156 = ssub.s32 %s9, 1
      %p157 = scmp.lt.s32.totalorder %s18, 1
      %s158 = scalar_select %p157, %s18, 1
      %s159 = smul.addr %s158, 6
      %s160 = smul.addr %s159, 8
      %s161 = scalar_lea.vmem %s0, %s160
      %p162 = pneg %p47
      %p163 = pneg %p44
      %p164 = pneg %p68
      %p165 = pneg %p65
      %p166 = pneg %p89
      %p167 = pneg %p86
      %p168 = pneg %p117
      %p169 = pneg %p114
      %p170 = scmp.lt.s32.totalorder %s18, 1
      %s171 = scalar_select %p170, %s18, 1
      %p172 = scmp.lt.s32.totalorder %s19, 1
      %s173 = scalar_select %p172, %s19, 1
      %s174 = smul.addr %s171, 2
      %s175 = sadd.s32 %s173, %s174
      %s176 = smul.addr %s175, 2
      %s177 = scalar_lea.vmem %s3, %s176
      %p178 = scmp.lt.s32.totalorder %s18, 1
      %s179 = scalar_select %p178, %s18, 1
      %s180 = smul.addr %s179, 6
      %s181 = smul.addr %s180, 8
      %s182 = scalar_lea.vmem %s0, %s181
      %p183 = scmp.lt.s32.totalorder %s18, 1
      %s184 = scalar_select %p183, %s18, 1
      %p185 = scmp.lt.s32.totalorder %s19, 1
      %s186 = scalar_select %p185, %s19, 1
      %s187 = smul.addr %s184, 2
      %s188 = sadd.s32 %s186, %s187
      %s189 = smul.addr %s188, 2
      %s190 = scalar_lea.vmem %s3, %s189
      %v192 = vld [vmem:[%s2] sm:$0x1]
      %s193 = smul.u32 %s19, 2
      %s194 = smul.u32 %s193, 8
      %s195 = scalar_lea.vmem %s182, %s194
      %v196 = vld [vmem:[%s195] sm:$0xf]
      %v197 = vpack.c.bf16 %v196, %v196
      %v198 = vld [vmem:[%s1] sm:$0xf]
      %v199 = vld [vmem:[%s1 + $0x4] sm:$0xf]
      %v200 = vld [vmem:[%s1 + $0x8] sm:$0xf]
      %v201 = vld [vmem:[%s1 + $0xc] sm:$0xf]
      %v202 = vld [vmem:[%s195 + $0x1] sm:$0xf]
      %v203 = vpack.c.bf16 %v202, %v202
      %s204 = scalar_lea.vmem %s1, 16
      %v205 = vld [vmem:[%s204] sm:$0xf]
      %v206 = vld [vmem:[%s204 + $0x4] sm:$0xf]
      %v207 = vld [vmem:[%s204 + $0x8] sm:$0xf]
      %v208 = vld [vmem:[%s204 + $0xc] sm:$0xf]
      %v213 = vunpack.c.l.b16 %v205
      %v214 = vunpack.c.l.b16 %v206
      %v215 = vunpack.c.l.b16 %v207
      %v216 = vunpack.c.l.b16 %v208
      %v217 = vpack.c.b16 %v214, %v213
      %v218 = vpack.c.b16 %v216, %v215
      %vm221 = vcmask 261120
      %v223 = vsel %vm221, %v203, 0
      %225 = vmatprep.subr.bf16.mxu0 0
      %226 = vmatpush1.bf16.msra.mxu0 %v217
      %227 = vmatprep.subr.bf16.mxu0 0
      %228 = vmatpush1.bf16.msra.mxu0 %v218
      %229 = vmatprep.subr.bf16.mxu0 0
      %230 = vmatpush1.bf16.msra.mxu0 0
      %231 = vmatprep.subr.bf16.mxu0 0
      %232 = vmatpush1.bf16.msra.mxu0 0
      %233 = vmatprep.subr.bf16.mxu0 0
      %234 = vmatpush1.bf16.msra.mxu0 0
      %235 = vmatprep.subr.bf16.mxu0 0
      %236 = vmatpush1.bf16.msra.mxu0 0
      %237 = vmatprep.subr.bf16.mxu0 0
      %238 = vmatpush1.bf16.msra.mxu0 0
      %239 = vmatprep.subr.bf16.mxu0 0
      %240 = vmatpush1.bf16.msra.mxu0 0
      %241 = vmatprep.subr.bf16.mxu0 0
      %242 = vmatpush1.bf16.msra.mxu0 0
      %243 = vmatprep.subr.bf16.mxu0 0
      %244 = vmatpush1.bf16.msra.mxu0 0
      %245 = vmatprep.subr.bf16.mxu0 0
      %246 = vmatpush1.bf16.msra.mxu0 0
      %247 = vmatprep.subr.bf16.mxu0 0
      %248 = vmatpush1.bf16.msra.mxu0 0
      %249 = vmatprep.subr.bf16.mxu0 0
      %250 = vmatpush1.bf16.msra.mxu0 0
      %251 = vmatprep.subr.bf16.mxu0 0
      %252 = vmatpush1.bf16.msra.mxu0 0
      %253 = vmatprep.subr.bf16.mxu0 0
      %254 = vmatpush1.bf16.msra.mxu0 0
      %255 = vmatprep.subr.bf16.mxu0 0
      %256 = vmatpush1.bf16.msra.mxu0 0
      %257 = vmatprep.mubr.bf16.mxu0 0
      %258 = vmatmul.mubr.bf16.gmra.mrb[0].mxu0 %v223
      %v259 = vpop.f32.mrb[0].mxu0
      %v260 = vadd.f32 0.0, %v259
      %v261 = vpop.f32.mrb[0].mxu0
      %v262 = vpop.f32.mrb[0].mxu0
      %v263 = vpop.f32.mrb[0].mxu0
      %264 = vdwg.mxu0
      %v269 = vunpack.c.l.b16 %v198
      %v270 = vunpack.c.l.b16 %v199
      %v271 = vunpack.c.l.b16 %v200
      %v272 = vunpack.c.l.b16 %v201
      %v273 = vpack.c.b16 %v270, %v269
      %v274 = vpack.c.b16 %v272, %v271
      %v278 = vsel %vm221, %v197, 0
      %280 = vmatprep.subr.bf16.mxu0 0
      %281 = vmatpush1.bf16.msra.mxu0 %v273
      %282 = vmatprep.subr.bf16.mxu0 0
      %283 = vmatpush1.bf16.msra.mxu0 %v274
      %284 = vmatprep.subr.bf16.mxu0 0
      %285 = vmatpush1.bf16.msra.mxu0 0
      %286 = vmatprep.subr.bf16.mxu0 0
      %287 = vmatpush1.bf16.msra.mxu0 0
      %288 = vmatprep.subr.bf16.mxu0 0
      %289 = vmatpush1.bf16.msra.mxu0 0
      %290 = vmatprep.subr.bf16.mxu0 0
      %291 = vmatpush1.bf16.msra.mxu0 0
      %292 = vmatprep.subr.bf16.mxu0 0
      %293 = vmatpush1.bf16.msra.mxu0 0
      %294 = vmatprep.subr.bf16.mxu0 0
      %295 = vmatpush1.bf16.msra.mxu0 0
      %296 = vmatprep.subr.bf16.mxu0 0
      %297 = vmatpush1.bf16.msra.mxu0 0
      %298 = vmatprep.subr.bf16.mxu0 0
      %299 = vmatpush1.bf16.msra.mxu0 0
      %300 = vmatprep.subr.bf16.mxu0 0
      %301 = vmatpush1.bf16.msra.mxu0 0
      %302 = vmatprep.subr.bf16.mxu0 0
      %303 = vmatpush1.bf16.msra.mxu0 0
      %304 = vmatprep.subr.bf16.mxu0 0
      %305 = vmatpush1.bf16.msra.mxu0 0
      %306 = vmatprep.subr.bf16.mxu0 0
      %307 = vmatpush1.bf16.msra.mxu0 0
      %308 = vmatprep.subr.bf16.mxu0 0
      %309 = vmatpush1.bf16.msra.mxu0 0
      %310 = vmatprep.subr.bf16.mxu0 0
      %311 = vmatpush1.bf16.msra.mxu0 0
      %312 = vmatprep.mubr.bf16.mxu0 0
      %313 = vmatmul.mubr.bf16.gmra.mrb[0].mxu0 %v278
      %v314 = vpop.f32.mrb[0].mxu0
      %v315 = vadd.f32 %v260, %v314
      %v316 = vpop.f32.mrb[0].mxu0
      %v317 = vpop.f32.mrb[0].mxu0
      %v318 = vpop.f32.mrb[0].mxu0
      %319 = vdwg.mxu0
      %v320 = vld [vmem:[%s195 + $0x2] sm:$0xf]
      %v321 = vpack.c.bf16 %v320, %v320
      %s322 = scalar_lea.vmem %s1, 32
      %v323 = vld [vmem:[%s322] sm:$0xf]
      %v324 = vld [vmem:[%s322 + $0x4] sm:$0xf]
      %v325 = vld [vmem:[%s322 + $0x8] sm:$0xf]
      %v326 = vld [vmem:[%s322 + $0xc] sm:$0xf]
      %v331 = vunpack.c.l.b16 %v323
      %v332 = vunpack.c.l.b16 %v324
      %v333 = vunpack.c.l.b16 %v325
      %v334 = vunpack.c.l.b16 %v326
      %v335 = vpack.c.b16 %v332, %v331
      %v336 = vpack.c.b16 %v334, %v333
      %v340 = vsel %vm221, %v321, 0
      %342 = vmatprep.subr.bf16.mxu0 0
      %343 = vmatpush1.bf16.msra.mxu0 %v335
      %344 = vmatprep.subr.bf16.mxu0 0
      %345 = vmatpush1.bf16.msra.mxu0 %v336
      %346 = vmatprep.subr.bf16.mxu0 0
      %347 = vmatpush1.bf16.msra.mxu0 0
      %348 = vmatprep.subr.bf16.mxu0 0
      %349 = vmatpush1.bf16.msra.mxu0 0
      %350 = vmatprep.subr.bf16.mxu0 0
      %351 = vmatpush1.bf16.msra.mxu0 0
      %352 = vmatprep.subr.bf16.mxu0 0
      %353 = vmatpush1.bf16.msra.mxu0 0
      %354 = vmatprep.subr.bf16.mxu0 0
      %355 = vmatpush1.bf16.msra.mxu0 0
      %356 = vmatprep.subr.bf16.mxu0 0
      %357 = vmatpush1.bf16.msra.mxu0 0
      %358 = vmatprep.subr.bf16.mxu0 0
      %359 = vmatpush1.bf16.msra.mxu0 0
      %360 = vmatprep.subr.bf16.mxu0 0
      %361 = vmatpush1.bf16.msra.mxu0 0
      %362 = vmatprep.subr.bf16.mxu0 0
      %363 = vmatpush1.bf16.msra.mxu0 0
      %364 = vmatprep.subr.bf16.mxu0 0
      %365 = vmatpush1.bf16.msra.mxu0 0
      %366 = vmatprep.subr.bf16.mxu0 0
      %367 = vmatpush1.bf16.msra.mxu0 0
      %368 = vmatprep.subr.bf16.mxu0 0
      %369 = vmatpush1.bf16.msra.mxu0 0
      %370 = vmatprep.subr.bf16.mxu0 0
      %371 = vmatpush1.bf16.msra.mxu0 0
      %372 = vmatprep.subr.bf16.mxu0 0
      %373 = vmatpush1.bf16.msra.mxu0 0
      %374 = vmatprep.mubr.bf16.mxu0 0
      %375 = vmatmul.mubr.bf16.gmra.mrb[0].mxu0 %v340
      %v376 = vpop.f32.mrb[0].mxu0
      %v377 = vadd.f32 0.0, %v376
      %v378 = vpop.f32.mrb[0].mxu0
      %v379 = vpop.f32.mrb[0].mxu0
      %v380 = vpop.f32.mrb[0].mxu0
      %381 = vdwg.mxu0
      %v382 = vadd.f32 %v315, %v377
      %s383 = sadd.s32 %s193, 1
      %s384 = smul.u32 %s383, 8
      %s385 = scalar_lea.vmem %s182, %s384
      %v386 = vld [vmem:[%s385] sm:$0xf]
      %v387 = vpack.c.bf16 %v386, %v386
      %s388 = scalar_lea.vmem %s1, 48
      %v389 = vld [vmem:[%s388] sm:$0xf]
      %v390 = vld [vmem:[%s388 + $0x4] sm:$0xf]
      %v391 = vld [vmem:[%s388 + $0x8] sm:$0xf]
      %v392 = vld [vmem:[%s388 + $0xc] sm:$0xf]
      %v397 = vunpack.c.l.b16 %v389
      %v398 = vunpack.c.l.b16 %v390
      %v399 = vunpack.c.l.b16 %v391
      %v400 = vunpack.c.l.b16 %v392
      %v401 = vpack.c.b16 %v398, %v397
      %v402 = vpack.c.b16 %v400, %v399
      %v406 = vsel %vm221, %v387, 0
      %408 = vmatprep.subr.bf16.mxu0 0
      %409 = vmatpush1.bf16.msra.mxu0 %v401
      %410 = vmatprep.subr.bf16.mxu0 0
      %411 = vmatpush1.bf16.msra.mxu0 %v402
      %412 = vmatprep.subr.bf16.mxu0 0
      %413 = vmatpush1.bf16.msra.mxu0 0
      %414 = vmatprep.subr.bf16.mxu0 0
      %415 = vmatpush1.bf16.msra.mxu0 0
      %416 = vmatprep.subr.bf16.mxu0 0
      %417 = vmatpush1.bf16.msra.mxu0 0
      %418 = vmatprep.subr.bf16.mxu0 0
      %419 = vmatpush1.bf16.msra.mxu0 0
      %420 = vmatprep.subr.bf16.mxu0 0
      %421 = vmatpush1.bf16.msra.mxu0 0
      %422 = vmatprep.subr.bf16.mxu0 0
      %423 = vmatpush1.bf16.msra.mxu0 0
      %424 = vmatprep.subr.bf16.mxu0 0
      %425 = vmatpush1.bf16.msra.mxu0 0
      %426 = vmatprep.subr.bf16.mxu0 0
      %427 = vmatpush1.bf16.msra.mxu0 0
      %428 = vmatprep.subr.bf16.mxu0 0
      %429 = vmatpush1.bf16.msra.mxu0 0
      %430 = vmatprep.subr.bf16.mxu0 0
      %431 = vmatpush1.bf16.msra.mxu0 0
      %432 = vmatprep.subr.bf16.mxu0 0
      %433 = vmatpush1.bf16.msra.mxu0 0
      %434 = vmatprep.subr.bf16.mxu0 0
      %435 = vmatpush1.bf16.msra.mxu0 0
      %436 = vmatprep.subr.bf16.mxu0 0
      %437 = vmatpush1.bf16.msra.mxu0 0
      %438 = vmatprep.subr.bf16.mxu0 0
      %439 = vmatpush1.bf16.msra.mxu0 0
      %440 = vmatprep.mubr.bf16.mxu0 0
      %441 = vmatmul.mubr.bf16.gmra.mrb[0].mxu0 %v406
      %v442 = vpop.f32.mrb[0].mxu0
      %v443 = vadd.f32 0.0, %v442
      %v444 = vpop.f32.mrb[0].mxu0
      %v445 = vpop.f32.mrb[0].mxu0
      %v446 = vpop.f32.mrb[0].mxu0
      %447 = vdwg.mxu0
      %v448 = vadd.f32 %v382, %v443
      %v449 = vld [vmem:[%s385 + $0x1] sm:$0xf]
      %v450 = vpack.c.bf16 %v449, %v449
      %s451 = scalar_lea.vmem %s1, 64
      %v452 = vld [vmem:[%s451] sm:$0xf]
      %v453 = vld [vmem:[%s451 + $0x4] sm:$0xf]
      %v454 = vld [vmem:[%s451 + $0x8] sm:$0xf]
      %v455 = vld [vmem:[%s451 + $0xc] sm:$0xf]
      %v460 = vunpack.c.l.b16 %v452
      %v461 = vunpack.c.l.b16 %v453
      %v462 = vunpack.c.l.b16 %v454
      %v463 = vunpack.c.l.b16 %v455
      %v464 = vpack.c.b16 %v461, %v460
      %v465 = vpack.c.b16 %v463, %v462
      %v469 = vsel %vm221, %v450, 0
      %471 = vmatprep.subr.bf16.mxu0 0
      %472 = vmatpush1.bf16.msra.mxu0 %v464
      %473 = vmatprep.subr.bf16.mxu0 0
      %474 = vmatpush1.bf16.msra.mxu0 %v465
      %475 = vmatprep.subr.bf16.mxu0 0
      %476 = vmatpush1.bf16.msra.mxu0 0
      %477 = vmatprep.subr.bf16.mxu0 0
      %478 = vmatpush1.bf16.msra.mxu0 0
      %479 = vmatprep.subr.bf16.mxu0 0
      %480 = vmatpush1.bf16.msra.mxu0 0
      %481 = vmatprep.subr.bf16.mxu0 0
      %482 = vmatpush1.bf16.msra.mxu0 0
      %483 = vmatprep.subr.bf16.mxu0 0
      %484 = vmatpush1.bf16.msra.mxu0 0
      %485 = vmatprep.subr.bf16.mxu0 0
      %486 = vmatpush1.bf16.msra.mxu0 0
      %487 = vmatprep.subr.bf16.mxu0 0
      %488 = vmatpush1.bf16.msra.mxu0 0
      %489 = vmatprep.subr.bf16.mxu0 0
      %490 = vmatpush1.bf16.msra.mxu0 0
      %491 = vmatprep.subr.bf16.mxu0 0
      %492 = vmatpush1.bf16.msra.mxu0 0
      %493 = vmatprep.subr.bf16.mxu0 0
      %494 = vmatpush1.bf16.msra.mxu0 0
      %495 = vmatprep.subr.bf16.mxu0 0
      %496 = vmatpush1.bf16.msra.mxu0 0
      %497 = vmatprep.subr.bf16.mxu0 0
      %498 = vmatpush1.bf16.msra.mxu0 0
      %499 = vmatprep.subr.bf16.mxu0 0
      %500 = vmatpush1.bf16.msra.mxu0 0
      %501 = vmatprep.subr.bf16.mxu0 0
      %502 = vmatpush1.bf16.msra.mxu0 0
      %503 = vmatprep.mubr.bf16.mxu0 0
      %504 = vmatmul.mubr.bf16.gmra.mrb[0].mxu0 %v469
      %v505 = vpop.f32.mrb[0].mxu0
      %v506 = vadd.f32 0.0, %v505
      %v507 = vpop.f32.mrb[0].mxu0
      %v508 = vpop.f32.mrb[0].mxu0
      %v509 = vpop.f32.mrb[0].mxu0
      %510 = vdwg.mxu0
      %v511 = vadd.f32 %v448, %v506
      %v512 = vld [vmem:[%s385 + $0x2] sm:$0xf]
      %v513 = vpack.c.bf16 %v512, %v512
      %s514 = scalar_lea.vmem %s1, 80
      %v515 = vld [vmem:[%s514] sm:$0xf]
      %v516 = vld [vmem:[%s514 + $0x4] sm:$0xf]
      %v517 = vld [vmem:[%s514 + $0x8] sm:$0xf]
      %v518 = vld [vmem:[%s514 + $0xc] sm:$0xf]
      %v523 = vunpack.c.l.b16 %v515
      %v524 = vunpack.c.l.b16 %v516
      %v525 = vunpack.c.l.b16 %v517
      %v526 = vunpack.c.l.b16 %v518
      %v527 = vpack.c.b16 %v524, %v523
      %v528 = vpack.c.b16 %v526, %v525
      %v532 = vsel %vm221, %v513, 0
      %534 = vmatprep.subr.bf16.mxu0 0
      %535 = vmatpush1.bf16.msra.mxu0 %v527
      %536 = vmatprep.subr.bf16.mxu0 0
      %537 = vmatpush1.bf16.msra.mxu0 %v528
      %538 = vmatprep.subr.bf16.mxu0 0
      %539 = vmatpush1.bf16.msra.mxu0 0
      %540 = vmatprep.subr.bf16.mxu0 0
      %541 = vmatpush1.bf16.msra.mxu0 0
      %542 = vmatprep.subr.bf16.mxu0 0
      %543 = vmatpush1.bf16.msra.mxu0 0
      %544 = vmatprep.subr.bf16.mxu0 0
      %545 = vmatpush1.bf16.msra.mxu0 0
      %546 = vmatprep.subr.bf16.mxu0 0
      %547 = vmatpush1.bf16.msra.mxu0 0
      %548 = vmatprep.subr.bf16.mxu0 0
      %549 = vmatpush1.bf16.msra.mxu0 0
      %550 = vmatprep.subr.bf16.mxu0 0
      %551 = vmatpush1.bf16.msra.mxu0 0
      %552 = vmatprep.subr.bf16.mxu0 0
      %553 = vmatpush1.bf16.msra.mxu0 0
      %554 = vmatprep.subr.bf16.mxu0 0
      %555 = vmatpush1.bf16.msra.mxu0 0
      %556 = vmatprep.subr.bf16.mxu0 0
      %557 = vmatpush1.bf16.msra.mxu0 0
      %558 = vmatprep.subr.bf16.mxu0 0
      %559 = vmatpush1.bf16.msra.mxu0 0
      %560 = vmatprep.subr.bf16.mxu0 0
      %561 = vmatpush1.bf16.msra.mxu0 0
      %562 = vmatprep.subr.bf16.mxu0 0
      %563 = vmatpush1.bf16.msra.mxu0 0
      %564 = vmatprep.subr.bf16.mxu0 0
      %565 = vmatpush1.bf16.msra.mxu0 0
      %566 = vmatprep.mubr.bf16.mxu0 0
      %567 = vmatmul.mubr.bf16.gmra.mrb[0].mxu0 %v532
      %v568 = vpop.f32.mrb[0].mxu0
      %v569 = vadd.f32 0.0, %v568
      %v570 = vpop.f32.mrb[0].mxu0
      %v571 = vpop.f32.mrb[0].mxu0
      %v572 = vpop.f32.mrb[0].mxu0
      %573 = vdwg.mxu0
      %v574 = vadd.f32 %v511, %v569
      %s575 = sadd.s32 %s193, 2
      %s576 = smul.u32 %s575, 8
      %s577 = scalar_lea.vmem %s182, %s576
      %v578 = vld [vmem:[%s577] sm:$0xf]
      %v579 = vpack.c.bf16 %v578, %v578
      %s580 = scalar_lea.vmem %s1, 96
      %v581 = vld [vmem:[%s580] sm:$0xf]
      %v582 = vld [vmem:[%s580 + $0x4] sm:$0xf]
      %v583 = vld [vmem:[%s580 + $0x8] sm:$0xf]
      %v584 = vld [vmem:[%s580 + $0xc] sm:$0xf]
      %v589 = vunpack.c.l.b16 %v581
      %v590 = vunpack.c.l.b16 %v582
      %v591 = vunpack.c.l.b16 %v583
      %v592 = vunpack.c.l.b16 %v584
      %v593 = vpack.c.b16 %v590, %v589
      %v594 = vpack.c.b16 %v592, %v591
      %v598 = vsel %vm221, %v579, 0
      %600 = vmatprep.subr.bf16.mxu0 0
      %601 = vmatpush1.bf16.msra.mxu0 %v593
      %602 = vmatprep.subr.bf16.mxu0 0
      %603 = vmatpush1.bf16.msra.mxu0 %v594
      %604 = vmatprep.subr.bf16.mxu0 0
      %605 = vmatpush1.bf16.msra.mxu0 0
      %606 = vmatprep.subr.bf16.mxu0 0
      %607 = vmatpush1.bf16.msra.mxu0 0
      %608 = vmatprep.subr.bf16.mxu0 0
      %609 = vmatpush1.bf16.msra.mxu0 0
      %610 = vmatprep.subr.bf16.mxu0 0
      %611 = vmatpush1.bf16.msra.mxu0 0
      %612 = vmatprep.subr.bf16.mxu0 0
      %613 = vmatpush1.bf16.msra.mxu0 0
      %614 = vmatprep.subr.bf16.mxu0 0
      %615 = vmatpush1.bf16.msra.mxu0 0
      %616 = vmatprep.subr.bf16.mxu0 0
      %617 = vmatpush1.bf16.msra.mxu0 0
      %618 = vmatprep.subr.bf16.mxu0 0
      %619 = vmatpush1.bf16.msra.mxu0 0
      %620 = vmatprep.subr.bf16.mxu0 0
      %621 = vmatpush1.bf16.msra.mxu0 0
      %622 = vmatprep.subr.bf16.mxu0 0
      %623 = vmatpush1.bf16.msra.mxu0 0
      %624 = vmatprep.subr.bf16.mxu0 0
      %625 = vmatpush1.bf16.msra.mxu0 0
      %626 = vmatprep.subr.bf16.mxu0 0
      %627 = vmatpush1.bf16.msra.mxu0 0
      %628 = vmatprep.subr.bf16.mxu0 0
      %629 = vmatpush1.bf16.msra.mxu0 0
      %630 = vmatprep.subr.bf16.mxu0 0
      %631 = vmatpush1.bf16.msra.mxu0 0
      %632 = vmatprep.mubr.bf16.mxu0 0
      %633 = vmatmul.mubr.bf16.gmra.mrb[0].mxu0 %v598
      %v634 = vpop.f32.mrb[0].mxu0
      %v635 = vadd.f32 0.0, %v634
      %v636 = vpop.f32.mrb[0].mxu0
      %v637 = vpop.f32.mrb[0].mxu0
      %v638 = vpop.f32.mrb[0].mxu0
      %639 = vdwg.mxu0
      %v640 = vadd.f32 %v574, %v635
      %v641 = vld [vmem:[%s577 + $0x1] sm:$0xf]
      %v642 = vpack.c.bf16 %v641, %v641
      %s643 = scalar_lea.vmem %s1, 112
      %v644 = vld [vmem:[%s643] sm:$0xf]
      %v645 = vld [vmem:[%s643 + $0x4] sm:$0xf]
      %v646 = vld [vmem:[%s643 + $0x8] sm:$0xf]
      %v647 = vld [vmem:[%s643 + $0xc] sm:$0xf]
      %v652 = vunpack.c.l.b16 %v644
      %v653 = vunpack.c.l.b16 %v645
      %v654 = vunpack.c.l.b16 %v646
      %v655 = vunpack.c.l.b16 %v647
      %v656 = vpack.c.b16 %v653, %v652
      %v657 = vpack.c.b16 %v655, %v654
      %v661 = vsel %vm221, %v642, 0
      %663 = vmatprep.subr.bf16.mxu0 0
      %664 = vmatpush1.bf16.msra.mxu0 %v656
      %665 = vmatprep.subr.bf16.mxu0 0
      %666 = vmatpush1.bf16.msra.mxu0 %v657
      %667 = vmatprep.subr.bf16.mxu0 0
      %668 = vmatpush1.bf16.msra.mxu0 0
      %669 = vmatprep.subr.bf16.mxu0 0
      %670 = vmatpush1.bf16.msra.mxu0 0
      %671 = vmatprep.subr.bf16.mxu0 0
      %672 = vmatpush1.bf16.msra.mxu0 0
      %673 = vmatprep.subr.bf16.mxu0 0
      %674 = vmatpush1.bf16.msra.mxu0 0
      %675 = vmatprep.subr.bf16.mxu0 0
      %676 = vmatpush1.bf16.msra.mxu0 0
      %677 = vmatprep.subr.bf16.mxu0 0
      %678 = vmatpush1.bf16.msra.mxu0 0
      %679 = vmatprep.subr.bf16.mxu0 0
      %680 = vmatpush1.bf16.msra.mxu0 0
      %681 = vmatprep.subr.bf16.mxu0 0
      %682 = vmatpush1.bf16.msra.mxu0 0
      %683 = vmatprep.subr.bf16.mxu0 0
      %684 = vmatpush1.bf16.msra.mxu0 0
      %685 = vmatprep.subr.bf16.mxu0 0
      %686 = vmatpush1.bf16.msra.mxu0 0
      %687 = vmatprep.subr.bf16.mxu0 0
      %688 = vmatpush1.bf16.msra.mxu0 0
      %689 = vmatprep.subr.bf16.mxu0 0
      %690 = vmatpush1.bf16.msra.mxu0 0
      %691 = vmatprep.subr.bf16.mxu0 0
      %692 = vmatpush1.bf16.msra.mxu0 0
      %693 = vmatprep.subr.bf16.mxu0 0
      %694 = vmatpush1.bf16.msra.mxu0 0
      %695 = vmatprep.mubr.bf16.mxu0 0
      %696 = vmatmul.mubr.bf16.gmra.mrb[0].mxu0 %v661
      %v697 = vpop.f32.mrb[0].mxu0
      %v698 = vadd.f32 0.0, %v697
      %v699 = vpop.f32.mrb[0].mxu0
      %v700 = vpop.f32.mrb[0].mxu0
      %v701 = vpop.f32.mrb[0].mxu0
      %702 = vdwg.mxu0
      %v703 = vadd.f32 %v640, %v698
      %v704 = vld [vmem:[%s577 + $0x2] sm:$0xf]
      %v705 = vpack.c.bf16 %v704, %v704
      %s706 = scalar_lea.vmem %s1, 128
      %v707 = vld [vmem:[%s706] sm:$0xf]
      %v708 = vld [vmem:[%s706 + $0x4] sm:$0xf]
      %v709 = vld [vmem:[%s706 + $0x8] sm:$0xf]
      %v710 = vld [vmem:[%s706 + $0xc] sm:$0xf]
      %v715 = vunpack.c.l.b16 %v707
      %v716 = vunpack.c.l.b16 %v708
      %v717 = vunpack.c.l.b16 %v709
      %v718 = vunpack.c.l.b16 %v710
      %v719 = vpack.c.b16 %v716, %v715
      %v720 = vpack.c.b16 %v718, %v717
      %v724 = vsel %vm221, %v705, 0
      %726 = vmatprep.subr.bf16.mxu0 0
      %727 = vmatpush1.bf16.msra.mxu0 %v719
      %728 = vmatprep.subr.bf16.mxu0 0
      %729 = vmatpush1.bf16.msra.mxu0 %v720
      %730 = vmatprep.subr.bf16.mxu0 0
      %731 = vmatpush1.bf16.msra.mxu0 0
      %732 = vmatprep.subr.bf16.mxu0 0
      %733 = vmatpush1.bf16.msra.mxu0 0
      %734 = vmatprep.subr.bf16.mxu0 0
      %735 = vmatpush1.bf16.msra.mxu0 0
      %736 = vmatprep.subr.bf16.mxu0 0
      %737 = vmatpush1.bf16.msra.mxu0 0
      %738 = vmatprep.subr.bf16.mxu0 0
      %739 = vmatpush1.bf16.msra.mxu0 0
      %740 = vmatprep.subr.bf16.mxu0 0
      %741 = vmatpush1.bf16.msra.mxu0 0
      %742 = vmatprep.subr.bf16.mxu0 0
      %743 = vmatpush1.bf16.msra.mxu0 0
      %744 = vmatprep.subr.bf16.mxu0 0
      %745 = vmatpush1.bf16.msra.mxu0 0
      %746 = vmatprep.subr.bf16.mxu0 0
      %747 = vmatpush1.bf16.msra.mxu0 0
      %748 = vmatprep.subr.bf16.mxu0 0
      %749 = vmatpush1.bf16.msra.mxu0 0
      %750 = vmatprep.subr.bf16.mxu0 0
      %751 = vmatpush1.bf16.msra.mxu0 0
      %752 = vmatprep.subr.bf16.mxu0 0
      %753 = vmatpush1.bf16.msra.mxu0 0
      %754 = vmatprep.subr.bf16.mxu0 0
      %755 = vmatpush1.bf16.msra.mxu0 0
      %756 = vmatprep.subr.bf16.mxu0 0
      %757 = vmatpush1.bf16.msra.mxu0 0
      %758 = vmatprep.mubr.bf16.mxu0 0
      %759 = vmatmul.mubr.bf16.gmra.mrb[0].mxu0 %v724
      %v760 = vpop.f32.mrb[0].mxu0
      %v761 = vadd.f32 0.0, %v760
      %v762 = vpop.f32.mrb[0].mxu0
      %v763 = vpop.f32.mrb[0].mxu0
      %v764 = vpop.f32.mrb[0].mxu0
      %765 = vdwg.mxu0
      %v766 = vadd.f32 %v703, %v761
      %v768 = vlaneseq
      %v769 = vshrl.u32 %v768, 7
      %v770 = vsub.s32 0, %v769
      %v771 = vrot.slane %v192, %v770
      %v773 = vadd.f32 %v766, %v771
      %v774 = vmax.f32 %v773, 0.0
      %775 = vmatprep.subr.bf16.mxu0 0
      %776 = vmatpush1.bf16.msra.mxu0 %v217
      %777 = vmatprep.subr.bf16.mxu0 0
      %778 = vmatpush1.bf16.msra.mxu0 %v218
      %779 = vmatprep.subr.bf16.mxu0 0
      %780 = vmatpush1.bf16.msra.mxu0 0
      %781 = vmatprep.subr.bf16.mxu0 0
      %782 = vmatpush1.bf16.msra.mxu0 0
      %783 = vmatprep.subr.bf16.mxu0 0
      %784 = vmatpush1.bf16.msra.mxu0 0
      %785 = vmatprep.subr.bf16.mxu0 0
      %786 = vmatpush1.bf16.msra.mxu0 0
      %787 = vmatprep.subr.bf16.mxu0 0
      %788 = vmatpush1.bf16.msra.mxu0 0
      %789 = vmatprep.subr.bf16.mxu0 0
      %790 = vmatpush1.bf16.msra.mxu0 0
      %791 = vmatprep.subr.bf16.mxu0 0
      %792 = vmatpush1.bf16.msra.mxu0 0
      %793 = vmatprep.subr.bf16.mxu0 0
      %794 = vmatpush1.bf16.msra.mxu0 0
      %795 = vmatprep.subr.bf16.mxu0 0
      %796 = vmatpush1.bf16.msra.mxu0 0
      %797 = vmatprep.subr.bf16.mxu0 0
      %798 = vmatpush1.bf16.msra.mxu0 0
      %799 = vmatprep.subr.bf16.mxu0 0
      %800 = vmatpush1.bf16.msra.mxu0 0
      %801 = vmatprep.subr.bf16.mxu0 0
      %802 = vmatpush1.bf16.msra.mxu0 0
      %803 = vmatprep.subr.bf16.mxu0 0
      %804 = vmatpush1.bf16.msra.mxu0 0
      %805 = vmatprep.subr.bf16.mxu0 0
      %806 = vmatpush1.bf16.msra.mxu0 0
      %807 = vmatprep.mubr.bf16.mxu0 0
      %808 = vmatmul.mubr.bf16.gmra.mrb[0].mxu0 %v469
      %v809 = vpop.f32.mrb[0].mxu0
      %v810 = vadd.f32 0.0, %v809
      %v811 = vpop.f32.mrb[0].mxu0
      %v812 = vpop.f32.mrb[0].mxu0
      %v813 = vpop.f32.mrb[0].mxu0
      %814 = vdwg.mxu0
      %815 = vmatprep.subr.bf16.mxu0 0
      %816 = vmatpush1.bf16.msra.mxu0 %v273
      %817 = vmatprep.subr.bf16.mxu0 0
      %818 = vmatpush1.bf16.msra.mxu0 %v274
      %819 = vmatprep.subr.bf16.mxu0 0
      %820 = vmatpush1.bf16.msra.mxu0 0
      %821 = vmatprep.subr.bf16.mxu0 0
      %822 = vmatpush1.bf16.msra.mxu0 0
      %823 = vmatprep.subr.bf16.mxu0 0
      %824 = vmatpush1.bf16.msra.mxu0 0
      %825 = vmatprep.subr.bf16.mxu0 0
      %826 = vmatpush1.bf16.msra.mxu0 0
      %827 = vmatprep.subr.bf16.mxu0 0
      %828 = vmatpush1.bf16.msra.mxu0 0
      %829 = vmatprep.subr.bf16.mxu0 0
      %830 = vmatpush1.bf16.msra.mxu0 0
      %831 = vmatprep.subr.bf16.mxu0 0
      %832 = vmatpush1.bf16.msra.mxu0 0
      %833 = vmatprep.subr.bf16.mxu0 0
      %834 = vmatpush1.bf16.msra.mxu0 0
      %835 = vmatprep.subr.bf16.mxu0 0
      %836 = vmatpush1.bf16.msra.mxu0 0
      %837 = vmatprep.subr.bf16.mxu0 0
      %838 = vmatpush1.bf16.msra.mxu0 0
      %839 = vmatprep.subr.bf16.mxu0 0
      %840 = vmatpush1.bf16.msra.mxu0 0
      %841 = vmatprep.subr.bf16.mxu0 0
      %842 = vmatpush1.bf16.msra.mxu0 0
      %843 = vmatprep.subr.bf16.mxu0 0
      %844 = vmatpush1.bf16.msra.mxu0 0
      %845 = vmatprep.subr.bf16.mxu0 0
      %846 = vmatpush1.bf16.msra.mxu0 0
      %847 = vmatprep.mubr.bf16.mxu0 0
      %848 = vmatmul.mubr.bf16.gmra.mrb[0].mxu0 %v406
      %v849 = vpop.f32.mrb[0].mxu0
      %v850 = vadd.f32 %v810, %v849
      %v851 = vpop.f32.mrb[0].mxu0
      %v852 = vpop.f32.mrb[0].mxu0
      %v853 = vpop.f32.mrb[0].mxu0
      %854 = vdwg.mxu0
      %855 = vmatprep.subr.bf16.mxu0 0
      %856 = vmatpush1.bf16.msra.mxu0 %v335
      %857 = vmatprep.subr.bf16.mxu0 0
      %858 = vmatpush1.bf16.msra.mxu0 %v336
      %859 = vmatprep.subr.bf16.mxu0 0
      %860 = vmatpush1.bf16.msra.mxu0 0
      %861 = vmatprep.subr.bf16.mxu0 0
      %862 = vmatpush1.bf16.msra.mxu0 0
      %863 = vmatprep.subr.bf16.mxu0 0
      %864 = vmatpush1.bf16.msra.mxu0 0
      %865 = vmatprep.subr.bf16.mxu0 0
      %866 = vmatpush1.bf16.msra.mxu0 0
      %867 = vmatprep.subr.bf16.mxu0 0
      %868 = vmatpush1.bf16.msra.mxu0 0
      %869 = vmatprep.subr.bf16.mxu0 0
      %870 = vmatpush1.bf16.msra.mxu0 0
      %871 = vmatprep.subr.bf16.mxu0 0
      %872 = vmatpush1.bf16.msra.mxu0 0
      %873 = vmatprep.subr.bf16.mxu0 0
      %874 = vmatpush1.bf16.msra.mxu0 0
      %875 = vmatprep.subr.bf16.mxu0 0
      %876 = vmatpush1.bf16.msra.mxu0 0
      %877 = vmatprep.subr.bf16.mxu0 0
      %878 = vmatpush1.bf16.msra.mxu0 0
      %879 = vmatprep.subr.bf16.mxu0 0
      %880 = vmatpush1.bf16.msra.mxu0 0
      %881 = vmatprep.subr.bf16.mxu0 0
      %882 = vmatpush1.bf16.msra.mxu0 0
      %883 = vmatprep.subr.bf16.mxu0 0
      %884 = vmatpush1.bf16.msra.mxu0 0
      %885 = vmatprep.subr.bf16.mxu0 0
      %886 = vmatpush1.bf16.msra.mxu0 0
      %887 = vmatprep.mubr.bf16.mxu0 0
      %888 = vmatmul.mubr.bf16.gmra.mrb[0].mxu0 %v532
      %v889 = vpop.f32.mrb[0].mxu0
      %v890 = vadd.f32 0.0, %v889
      %v891 = vpop.f32.mrb[0].mxu0
      %v892 = vpop.f32.mrb[0].mxu0
      %v893 = vpop.f32.mrb[0].mxu0
      %894 = vdwg.mxu0
      %v895 = vadd.f32 %v850, %v890
      %896 = vmatprep.subr.bf16.mxu0 0
      %897 = vmatpush1.bf16.msra.mxu0 %v401
      %898 = vmatprep.subr.bf16.mxu0 0
      %899 = vmatpush1.bf16.msra.mxu0 %v402
      %900 = vmatprep.subr.bf16.mxu0 0
      %901 = vmatpush1.bf16.msra.mxu0 0
      %902 = vmatprep.subr.bf16.mxu0 0
      %903 = vmatpush1.bf16.msra.mxu0 0
      %904 = vmatprep.subr.bf16.mxu0 0
      %905 = vmatpush1.bf16.msra.mxu0 0
      %906 = vmatprep.subr.bf16.mxu0 0
      %907 = vmatpush1.bf16.msra.mxu0 0
      %908 = vmatprep.subr.bf16.mxu0 0
      %909 = vmatpush1.bf16.msra.mxu0 0
      %910 = vmatprep.subr.bf16.mxu0 0
      %911 = vmatpush1.bf16.msra.mxu0 0
      %912 = vmatprep.subr.bf16.mxu0 0
      %913 = vmatpush1.bf16.msra.mxu0 0
      %914 = vmatprep.subr.bf16.mxu0 0
      %915 = vmatpush1.bf16.msra.mxu0 0
      %916 = vmatprep.subr.bf16.mxu0 0
      %917 = vmatpush1.bf16.msra.mxu0 0
      %918 = vmatprep.subr.bf16.mxu0 0
      %919 = vmatpush1.bf16.msra.mxu0 0
      %920 = vmatprep.subr.bf16.mxu0 0
      %921 = vmatpush1.bf16.msra.mxu0 0
      %922 = vmatprep.subr.bf16.mxu0 0
      %923 = vmatpush1.bf16.msra.mxu0 0
      %924 = vmatprep.subr.bf16.mxu0 0
      %925 = vmatpush1.bf16.msra.mxu0 0
      %926 = vmatprep.subr.bf16.mxu0 0
      %927 = vmatpush1.bf16.msra.mxu0 0
      %928 = vmatprep.mubr.bf16.mxu0 0
      %929 = vmatmul.mubr.bf16.gmra.mrb[0].mxu0 %v598
      %v930 = vpop.f32.mrb[0].mxu0
      %v931 = vadd.f32 0.0, %v930
      %v932 = vpop.f32.mrb[0].mxu0
      %v933 = vpop.f32.mrb[0].mxu0
      %v934 = vpop.f32.mrb[0].mxu0
      %935 = vdwg.mxu0
      %v936 = vadd.f32 %v895, %v931
      %937 = vmatprep.subr.bf16.mxu0 0
      %938 = vmatpush1.bf16.msra.mxu0 %v464
      %939 = vmatprep.subr.bf16.mxu0 0
      %940 = vmatpush1.bf16.msra.mxu0 %v465
      %941 = vmatprep.subr.bf16.mxu0 0
      %942 = vmatpush1.bf16.msra.mxu0 0
      %943 = vmatprep.subr.bf16.mxu0 0
      %944 = vmatpush1.bf16.msra.mxu0 0
      %945 = vmatprep.subr.bf16.mxu0 0
      %946 = vmatpush1.bf16.msra.mxu0 0
      %947 = vmatprep.subr.bf16.mxu0 0
      %948 = vmatpush1.bf16.msra.mxu0 0
      %949 = vmatprep.subr.bf16.mxu0 0
      %950 = vmatpush1.bf16.msra.mxu0 0
      %951 = vmatprep.subr.bf16.mxu0 0
      %952 = vmatpush1.bf16.msra.mxu0 0
      %953 = vmatprep.subr.bf16.mxu0 0
      %954 = vmatpush1.bf16.msra.mxu0 0
      %955 = vmatprep.subr.bf16.mxu0 0
      %956 = vmatpush1.bf16.msra.mxu0 0
      %957 = vmatprep.subr.bf16.mxu0 0
      %958 = vmatpush1.bf16.msra.mxu0 0
      %959 = vmatprep.subr.bf16.mxu0 0
      %960 = vmatpush1.bf16.msra.mxu0 0
      %961 = vmatprep.subr.bf16.mxu0 0
      %962 = vmatpush1.bf16.msra.mxu0 0
      %963 = vmatprep.subr.bf16.mxu0 0
      %964 = vmatpush1.bf16.msra.mxu0 0
      %965 = vmatprep.subr.bf16.mxu0 0
      %966 = vmatpush1.bf16.msra.mxu0 0
      %967 = vmatprep.subr.bf16.mxu0 0
      %968 = vmatpush1.bf16.msra.mxu0 0
      %969 = vmatprep.mubr.bf16.mxu0 0
      %970 = vmatmul.mubr.bf16.gmra.mrb[0].mxu0 %v661
      %v971 = vpop.f32.mrb[0].mxu0
      %v972 = vadd.f32 0.0, %v971
      %v973 = vpop.f32.mrb[0].mxu0
      %v974 = vpop.f32.mrb[0].mxu0
      %v975 = vpop.f32.mrb[0].mxu0
      %976 = vdwg.mxu0
      %v977 = vadd.f32 %v936, %v972
      %978 = vmatprep.subr.bf16.mxu0 0
      %979 = vmatpush1.bf16.msra.mxu0 %v527
      %980 = vmatprep.subr.bf16.mxu0 0
      %981 = vmatpush1.bf16.msra.mxu0 %v528
      %982 = vmatprep.subr.bf16.mxu0 0
      %983 = vmatpush1.bf16.msra.mxu0 0
      %984 = vmatprep.subr.bf16.mxu0 0
      %985 = vmatpush1.bf16.msra.mxu0 0
      %986 = vmatprep.subr.bf16.mxu0 0
      %987 = vmatpush1.bf16.msra.mxu0 0
      %988 = vmatprep.subr.bf16.mxu0 0
      %989 = vmatpush1.bf16.msra.mxu0 0
      %990 = vmatprep.subr.bf16.mxu0 0
      %991 = vmatpush1.bf16.msra.mxu0 0
      %992 = vmatprep.subr.bf16.mxu0 0
      %993 = vmatpush1.bf16.msra.mxu0 0
      %994 = vmatprep.subr.bf16.mxu0 0
      %995 = vmatpush1.bf16.msra.mxu0 0
      %996 = vmatprep.subr.bf16.mxu0 0
      %997 = vmatpush1.bf16.msra.mxu0 0
      %998 = vmatprep.subr.bf16.mxu0 0
      %999 = vmatpush1.bf16.msra.mxu0 0
      %1000 = vmatprep.subr.bf16.mxu0 0
      %1001 = vmatpush1.bf16.msra.mxu0 0
      %1002 = vmatprep.subr.bf16.mxu0 0
      %1003 = vmatpush1.bf16.msra.mxu0 0
      %1004 = vmatprep.subr.bf16.mxu0 0
      %1005 = vmatpush1.bf16.msra.mxu0 0
      %1006 = vmatprep.subr.bf16.mxu0 0
      %1007 = vmatpush1.bf16.msra.mxu0 0
      %1008 = vmatprep.subr.bf16.mxu0 0
      %1009 = vmatpush1.bf16.msra.mxu0 0
      %1010 = vmatprep.mubr.bf16.mxu0 0
      %1011 = vmatmul.mubr.bf16.gmra.mrb[0].mxu0 %v724
      %v1012 = vpop.f32.mrb[0].mxu0
      %v1013 = vadd.f32 0.0, %v1012
      %v1014 = vpop.f32.mrb[0].mxu0
      %v1015 = vpop.f32.mrb[0].mxu0
      %v1016 = vpop.f32.mrb[0].mxu0
      %1017 = vdwg.mxu0
      %v1018 = vadd.f32 %v977, %v1013
      %s1019 = sadd.s32 %s193, 3
      %s1020 = smul.u32 %s1019, 8
      %s1021 = scalar_lea.vmem %s182, %s1020
      %v1022 = vld [vmem:[%s1021] sm:$0xf]
      %v1023 = vpack.c.bf16 %v1022, %v1022
      %v1025 = vsel %vm221, %v1023, 0
      %1027 = vmatprep.subr.bf16.mxu0 0
      %1028 = vmatpush1.bf16.msra.mxu0 %v593
      %1029 = vmatprep.subr.bf16.mxu0 0
      %1030 = vmatpush1.bf16.msra.mxu0 %v594
      %1031 = vmatprep.subr.bf16.mxu0 0
      %1032 = vmatpush1.bf16.msra.mxu0 0
      %1033 = vmatprep.subr.bf16.mxu0 0
      %1034 = vmatpush1.bf16.msra.mxu0 0
      %1035 = vmatprep.subr.bf16.mxu0 0
      %1036 = vmatpush1.bf16.msra.mxu0 0
      %1037 = vmatprep.subr.bf16.mxu0 0
      %1038 = vmatpush1.bf16.msra.mxu0 0
      %1039 = vmatprep.subr.bf16.mxu0 0
      %1040 = vmatpush1.bf16.msra.mxu0 0
      %1041 = vmatprep.subr.bf16.mxu0 0
      %1042 = vmatpush1.bf16.msra.mxu0 0
      %1043 = vmatprep.subr.bf16.mxu0 0
      %1044 = vmatpush1.bf16.msra.mxu0 0
      %1045 = vmatprep.subr.bf16.mxu0 0
      %1046 = vmatpush1.bf16.msra.mxu0 0
      %1047 = vmatprep.subr.bf16.mxu0 0
      %1048 = vmatpush1.bf16.msra.mxu0 0
      %1049 = vmatprep.subr.bf16.mxu0 0
      %1050 = vmatpush1.bf16.msra.mxu0 0
      %1051 = vmatprep.subr.bf16.mxu0 0
      %1052 = vmatpush1.bf16.msra.mxu0 0
      %1053 = vmatprep.subr.bf16.mxu0 0
      %1054 = vmatpush1.bf16.msra.mxu0 0
      %1055 = vmatprep.subr.bf16.mxu0 0
      %1056 = vmatpush1.bf16.msra.mxu0 0
      %1057 = vmatprep.subr.bf16.mxu0 0
      %1058 = vmatpush1.bf16.msra.mxu0 0
      %1059 = vmatprep.mubr.bf16.mxu0 0
      %1060 = vmatmul.mubr.bf16.gmra.mrb[0].mxu0 %v1025
      %v1061 = vpop.f32.mrb[0].mxu0
      %v1062 = vadd.f32 0.0, %v1061
      %v1063 = vpop.f32.mrb[0].mxu0
      %v1064 = vpop.f32.mrb[0].mxu0
      %v1065 = vpop.f32.mrb[0].mxu0
      %1066 = vdwg.mxu0
      %v1067 = vadd.f32 %v1018, %v1062
      %v1068 = vld [vmem:[%s1021 + $0x1] sm:$0xf]
      %v1069 = vpack.c.bf16 %v1068, %v1068
      %v1071 = vsel %vm221, %v1069, 0
      %1073 = vmatprep.subr.bf16.mxu0 0
      %1074 = vmatpush1.bf16.msra.mxu0 %v656
      %1075 = vmatprep.subr.bf16.mxu0 0
      %1076 = vmatpush1.bf16.msra.mxu0 %v657
      %1077 = vmatprep.subr.bf16.mxu0 0
      %1078 = vmatpush1.bf16.msra.mxu0 0
      %1079 = vmatprep.subr.bf16.mxu0 0
      %1080 = vmatpush1.bf16.msra.mxu0 0
      %1081 = vmatprep.subr.bf16.mxu0 0
      %1082 = vmatpush1.bf16.msra.mxu0 0
      %1083 = vmatprep.subr.bf16.mxu0 0
      %1084 = vmatpush1.bf16.msra.mxu0 0
      %1085 = vmatprep.subr.bf16.mxu0 0
      %1086 = vmatpush1.bf16.msra.mxu0 0
      %1087 = vmatprep.subr.bf16.mxu0 0
      %1088 = vmatpush1.bf16.msra.mxu0 0
      %1089 = vmatprep.subr.bf16.mxu0 0
      %1090 = vmatpush1.bf16.msra.mxu0 0
      %1091 = vmatprep.subr.bf16.mxu0 0
      %1092 = vmatpush1.bf16.msra.mxu0 0
      %1093 = vmatprep.subr.bf16.mxu0 0
      %1094 = vmatpush1.bf16.msra.mxu0 0
      %1095 = vmatprep.subr.bf16.mxu0 0
      %1096 = vmatpush1.bf16.msra.mxu0 0
      %1097 = vmatprep.subr.bf16.mxu0 0
      %1098 = vmatpush1.bf16.msra.mxu0 0
      %1099 = vmatprep.subr.bf16.mxu0 0
      %1100 = vmatpush1.bf16.msra.mxu0 0
      %1101 = vmatprep.subr.bf16.mxu0 0
      %1102 = vmatpush1.bf16.msra.mxu0 0
      %1103 = vmatprep.subr.bf16.mxu0 0
      %1104 = vmatpush1.bf16.msra.mxu0 0
      %1105 = vmatprep.mubr.bf16.mxu0 0
      %1106 = vmatmul.mubr.bf16.gmra.mrb[0].mxu0 %v1071
      %v1107 = vpop.f32.mrb[0].mxu0
      %v1108 = vadd.f32 0.0, %v1107
      %v1109 = vpop.f32.mrb[0].mxu0
      %v1110 = vpop.f32.mrb[0].mxu0
      %v1111 = vpop.f32.mrb[0].mxu0
      %1112 = vdwg.mxu0
      %v1113 = vadd.f32 %v1067, %v1108
      %v1114 = vld [vmem:[%s1021 + $0x2] sm:$0xf]
      %v1115 = vpack.c.bf16 %v1114, %v1114
      %v1117 = vsel %vm221, %v1115, 0
      %1119 = vmatprep.subr.bf16.mxu0 0
      %1120 = vmatpush1.bf16.msra.mxu0 %v719
      %1121 = vmatprep.subr.bf16.mxu0 0
      %1122 = vmatpush1.bf16.msra.mxu0 %v720
      %1123 = vmatprep.subr.bf16.mxu0 0
      %1124 = vmatpush1.bf16.msra.mxu0 0
      %1125 = vmatprep.subr.bf16.mxu0 0
      %1126 = vmatpush1.bf16.msra.mxu0 0
      %1127 = vmatprep.subr.bf16.mxu0 0
      %1128 = vmatpush1.bf16.msra.mxu0 0
      %1129 = vmatprep.subr.bf16.mxu0 0
      %1130 = vmatpush1.bf16.msra.mxu0 0
      %1131 = vmatprep.subr.bf16.mxu0 0
      %1132 = vmatpush1.bf16.msra.mxu0 0
      %1133 = vmatprep.subr.bf16.mxu0 0
      %1134 = vmatpush1.bf16.msra.mxu0 0
      %1135 = vmatprep.subr.bf16.mxu0 0
      %1136 = vmatpush1.bf16.msra.mxu0 0
      %1137 = vmatprep.subr.bf16.mxu0 0
      %1138 = vmatpush1.bf16.msra.mxu0 0
      %1139 = vmatprep.subr.bf16.mxu0 0
      %1140 = vmatpush1.bf16.msra.mxu0 0
      %1141 = vmatprep.subr.bf16.mxu0 0
      %1142 = vmatpush1.bf16.msra.mxu0 0
      %1143 = vmatprep.subr.bf16.mxu0 0
      %1144 = vmatpush1.bf16.msra.mxu0 0
      %1145 = vmatprep.subr.bf16.mxu0 0
      %1146 = vmatpush1.bf16.msra.mxu0 0
      %1147 = vmatprep.subr.bf16.mxu0 0
      %1148 = vmatpush1.bf16.msra.mxu0 0
      %1149 = vmatprep.subr.bf16.mxu0 0
      %1150 = vmatpush1.bf16.msra.mxu0 0
      %1151 = vmatprep.mubr.bf16.mxu0 0
      %1152 = vmatmul.mubr.bf16.gmra.mrb[0].mxu0 %v1117
      %v1153 = vpop.f32.mrb[0].mxu0
      %v1154 = vadd.f32 0.0, %v1153
      %v1155 = vpop.f32.mrb[0].mxu0
      %v1156 = vpop.f32.mrb[0].mxu0
      %v1157 = vpop.f32.mrb[0].mxu0
      %1158 = vdwg.mxu0
      %v1159 = vadd.f32 %v1113, %v1154
      %v1160 = vadd.f32 %v1159, %v771
      %v1161 = vmax.f32 %v1160, 0.0
      %v1162 = vmax.f32 %v774, %v1161
      %vm1163 = vcmask 519168
      %1164 = vst.msk [vmem:[#allocation2] sm:$0xf] %vm1163, %v1162
      %v1165 = vld [vmem:[#allocation2] ss:$2 sm:$0x3]
      %s1166 = scalar_lea.vmem [#allocation2], 1
      %v1167 = vld [vmem:[%s1166] ss:$2 sm:$0x3]
      %v1168 = vmax.f32 %v1165, %v1167
      %vm1169 = vcmask 517120
      %1170 = vst.msk [vmem:[%s190] sm:$0x3] %vm1169, %v1168
      %p1171 = scmp.lt.s32.totalorder %s18, 1
      %s1172 = scalar_select %p1171, %s18, 1
      %p1173 = scmp.lt.s32.totalorder %s19, 1
      %s1174 = scalar_select %p1173, %s19, 1
      %s1175 = smul.addr %s1172, 2
      %s1176 = sadd.s32 %s1174, %s1175
      %s1177 = smul.addr %s1176, 2
      %s1178 = scalar_lea.vmem %s3, %s1177
      // Predicated region
      $region33: #{better_cnn_forward.6} parent=31 // pred_check
        %p1179 = pneg %p114
      $region34: #{better_cnn_forward.6} parent=31 // pred_check_branch
        %1181 = sbr.rel (%p1179) target = $region36
      $region35: #{better_cnn_forward.6} parent=31 // pred_region
        _
      $region36: #{better_cnn_forward.6} parent=31 // pred_fallthru
        _
    $region32: #{better_cnn_forward.6} parent=5 // pred_fallthru
      _
    %p1182 = scmp.le.s32.totalorder 2, %s9
    // Predicated region
    $region37: #{better_cnn_forward.6} parent=5 // pred_check
      %p1183 = pneg %p1182
    $region38: #{better_cnn_forward.6} parent=5 // pred_check_branch
      %1185 = sbr.rel (%p1183) target = $region40
    $region39: #{better_cnn_forward.6} parent=5 // pred_region
      %s1186 = ssub.s32 %s9, 2
      // Predicated region
      $region41: #{better_cnn_forward.6} parent=39 // pred_check
        %p1187 = pneg %p120
      $region42: #{better_cnn_forward.6} parent=39 // pred_check_branch
        %1189 = sbr.rel (%p1187) target = $region44
      $region43: #{better_cnn_forward.6} parent=39 // pred_region
        %p1190 = scmp.lt.s32.totalorder %s20, 1
        %s1191 = scalar_select %p1190, %s20, 1
        %p1192 = scmp.lt.s32.totalorder %s21, 1
        %s1193 = scalar_select %p1192, %s21, 1
        %s1194 = smul.addr %s1191, 2
        %s1195 = sadd.s32 %s1193, %s1194
        %s1196 = smul.addr %s1195, 2
        %s1197 = scalar_lea.vmem %s3, %s1196
      $region44: #{better_cnn_forward.6} parent=39 // pred_fallthru
        _
    $region40: #{better_cnn_forward.6} parent=5 // pred_fallthru
      _
  $region6: #{better_cnn_forward.6} parent=0 // loop_footer
    %s13 = sadd.s32 1, %s9
  $region7: #{better_cnn_forward.6} parent=0 // loop_footer_branch
    %8 = sbr.rel target = $region3
  $region8: #{better_cnn_forward.6} parent=0 // loop_exit
    _

// kernel: better_cnn_forward.7
$region0: #{better_cnn_forward.7}
  #allocation0 [shape = 'u32[]', space=smem, size = 0x4, offset = 0x4, fixed_abs, tag = 'smem constant byte address 0x4 - core index']
  #allocation1 [shape = 'u32[144,128]{1,0:T(1,128)}', space=vmem, size = 0x12000, scoped, tag = 'internal scratch']
  #allocation2 [shape = 'f32[2,512]{1,0:T(2,128)}', space=vmem, size = 0x1000, scoped, tag = 'scratch operand']
  %s0 = inlined_call_operand.vmem [shape: bf16[2,256], index: 0, kind: input, shape index: {}]
  %s1 = inlined_call_operand.vmem [shape: bf16[256,512], index: 1, kind: input, shape index: {}]
  %s2 = inlined_call_operand.vmem [shape: f32[1,512], index: 2, kind: input, shape index: {}]
  %s3 = inlined_call_operand.vmem [shape: bf16[512,128], index: 3, kind: input, shape index: {}]
  %s4 = inlined_call_operand.vmem [shape: f32[1,128], index: 4, kind: input, shape index: {}]
  %s5 = inlined_call_operand.hbm [shape: f32[2,128], index: 5, kind: output, shape index: {}]
  %s6 = sld [smem:[#allocation0]]
  $region61: #{better_cnn_forward.7} parent=0
    _
  %s8 = ssub.s32 1, %s6
  %s9 = scalar_select 0, %s8, %s6
  $region1: #{better_cnn_forward.7} parent=0
    #allocation3 [shape = 'u8[1024]{0}', space=vmem, size = 0x400, scoped, tag = 'output window, operand 0, single buffered']
    #allocation4 [shape = 's32[2]{0}', space=sflag, size = 0x8, scoped, tag = 'scoped memory for better_cnn_forward.7']
    %10 = vsyncpa [#allocation4], 0
    loop: start=0, step=1, limit=4
    $region2: #{better_cnn_forward.7} parent=1 // loop_pre_header
      _
    $region3: #{better_cnn_forward.7} parent=1 // loop_header
      %s12 = sphi 0, %s16
      %p13 = scmp.ge.s32.totalorder %s12, 4
      %s22 = sphi 0, %s24
      %s25 = sphi 0, %s22
      %s26 = sphi 0, %s25
      %s42 = sphi 0, %s26
      %s48 = sphi 0, %s50
      %s51 = sphi 0, %s48
      %s52 = sphi 0, %s51
      %s68 = sphi 0, %s52
      %s72 = sphi 0, %s72
      %s74 = sphi 0, %s72
      %s75 = sphi 0, %s74
      %s89 = sphi 0, %s75
      %s93 = sphi 0, %s93
      %s95 = sphi 0, %s93
      %s96 = sphi 0, %s95
      %s110 = sphi 0, %s96
      %s114 = sphi 0, %s114
      %s116 = sphi 0, %s114
      %s117 = sphi 0, %s116
      %s131 = sphi 0, %s117
      %s135 = sphi 0, %s135
      %s137 = sphi 0, %s135
      %s138 = sphi 0, %s137
      %s152 = sphi 0, %s138
    $region4: #{better_cnn_forward.7} parent=1 // loop_header_branch
      %15 = sbr.rel (%p13) target = $region8
    $region5: #{better_cnn_forward.7} parent=1 // loop_body
      %s17 = ssub.s32 %s12, 1
      %s18 = ssub.s32 %s12, 2
      %s19 = sadd.s32 %s12, 1
      %s20 = ssub.s32 %s12, %s19
      %p21 = scmp.eq.s32.totalorder %s20, 0
      %s23 = sadd.s32 %s22, 1
      %s24 = scalar_select %p21, %s22, %s23
      %p27 = pneg %p21
      %p28 = scmp.eq.s32.totalorder %s12, 1
      %p29 = por %p27, %p28
      %p30 = scmp.ne.s32.totalorder %s22, %s25
      %p31 = scmp.eq.s32.totalorder %s12, 0
      %p32 = por %p30, %p31
      %p33 = scmp.ne.s32.totalorder %s22, %s25
      %p34 = scmp.eq.s32.totalorder %s17, 1
      %p35 = por %p33, %p34
      %p36 = scmp.ne.s32.totalorder %s25, %s26
      %p37 = scmp.eq.s32.totalorder %s17, 0
      %p38 = por %p36, %p37
      %p39 = scmp.ne.s32.totalorder %s25, %s26
      %p40 = scmp.eq.s32.totalorder %s18, 1
      %p41 = por %p39, %p40
      %p43 = scmp.ne.s32.totalorder %s26, %s42
      %p44 = scmp.eq.s32.totalorder %s18, 0
      %p45 = por %p43, %p44
      %s46 = ssub.s32 %s12, %s19
      %p47 = scmp.eq.s32.totalorder %s46, 0
      %s49 = sadd.s32 %s48, 1
      %s50 = scalar_select %p47, %s48, %s49
      %p53 = pneg %p47
      %p54 = scmp.eq.s32.totalorder %s12, 1
      %p55 = por %p53, %p54
      %p56 = scmp.ne.s32.totalorder %s48, %s51
      %p57 = scmp.eq.s32.totalorder %s12, 0
      %p58 = por %p56, %p57
      %p59 = scmp.ne.s32.totalorder %s48, %s51
      %p60 = scmp.eq.s32.totalorder %s17, 1
      %p61 = por %p59, %p60
      %p62 = scmp.ne.s32.totalorder %s51, %s52
      %p63 = scmp.eq.s32.totalorder %s17, 0
      %p64 = por %p62, %p63
      %p65 = scmp.ne.s32.totalorder %s51, %s52
      %p66 = scmp.eq.s32.totalorder %s18, 1
      %p67 = por %p65, %p66
      %p69 = scmp.ne.s32.totalorder %s52, %s68
      %p70 = scmp.eq.s32.totalorder %s18, 0
      %p71 = por %p69, %p70
      %s73 = sadd.s32 %s72, 1
      %p76 = scmp.eq.s32.totalorder %s12, 1
      %p77 = scmp.ne.s32.totalorder %s72, %s74
      %p78 = scmp.eq.s32.totalorder %s12, 0
      %p79 = por %p77, %p78
      %p80 = scmp.ne.s32.totalorder %s72, %s74
      %p81 = scmp.eq.s32.totalorder %s17, 1
      %p82 = por %p80, %p81
      %p83 = scmp.ne.s32.totalorder %s74, %s75
      %p84 = scmp.eq.s32.totalorder %s17, 0
      %p85 = por %p83, %p84
      %p86 = scmp.ne.s32.totalorder %s74, %s75
      %p87 = scmp.eq.s32.totalorder %s18, 1
      %p88 = por %p86, %p87
      %p90 = scmp.ne.s32.totalorder %s75, %s89
      %p91 = scmp.eq.s32.totalorder %s18, 0
      %p92 = por %p90, %p91
      %s94 = sadd.s32 %s93, 1
      %p97 = scmp.eq.s32.totalorder %s12, 1
      %p98 = scmp.ne.s32.totalorder %s93, %s95
      %p99 = scmp.eq.s32.totalorder %s12, 0
      %p100 = por %p98, %p99
      %p101 = scmp.ne.s32.totalorder %s93, %s95
      %p102 = scmp.eq.s32.totalorder %s17, 1
      %p103 = por %p101, %p102
      %p104 = scmp.ne.s32.totalorder %s95, %s96
      %p105 = scmp.eq.s32.totalorder %s17, 0
      %p106 = por %p104, %p105
      %p107 = scmp.ne.s32.totalorder %s95, %s96
      %p108 = scmp.eq.s32.totalorder %s18, 1
      %p109 = por %p107, %p108
      %p111 = scmp.ne.s32.totalorder %s96, %s110
      %p112 = scmp.eq.s32.totalorder %s18, 0
      %p113 = por %p111, %p112
      %s115 = sadd.s32 %s114, 1
      %p118 = scmp.eq.s32.totalorder %s12, 1
      %p119 = scmp.ne.s32.totalorder %s114, %s116
      %p120 = scmp.eq.s32.totalorder %s12, 0
      %p121 = por %p119, %p120
      %p122 = scmp.ne.s32.totalorder %s114, %s116
      %p123 = scmp.eq.s32.totalorder %s17, 1
      %p124 = por %p122, %p123
      %p125 = scmp.ne.s32.totalorder %s116, %s117
      %p126 = scmp.eq.s32.totalorder %s17, 0
      %p127 = por %p125, %p126
      %p128 = scmp.ne.s32.totalorder %s116, %s117
      %p129 = scmp.eq.s32.totalorder %s18, 1
      %p130 = por %p128, %p129
      %p132 = scmp.ne.s32.totalorder %s117, %s131
      %p133 = scmp.eq.s32.totalorder %s18, 0
      %p134 = por %p132, %p133
      %s136 = sadd.s32 %s135, 1
      %p139 = scmp.eq.s32.totalorder %s12, 1
      %p140 = scmp.ne.s32.totalorder %s135, %s137
      %p141 = scmp.eq.s32.totalorder %s12, 0
      %p142 = por %p140, %p141
      %p143 = scmp.ne.s32.totalorder %s135, %s137
      %p144 = scmp.eq.s32.totalorder %s17, 1
      %p145 = por %p143, %p144
      %p146 = scmp.ne.s32.totalorder %s137, %s138
      %p147 = scmp.eq.s32.totalorder %s17, 0
      %p148 = por %p146, %p147
      %p149 = scmp.ne.s32.totalorder %s137, %s138
      %p150 = scmp.eq.s32.totalorder %s18, 1
      %p151 = por %p149, %p150
      %p153 = scmp.ne.s32.totalorder %s138, %s152
      %p154 = scmp.eq.s32.totalorder %s18, 0
      %p155 = por %p153, %p154
      %p156 = scmp.le.s32.totalorder 1, %s12
      %p157 = scmp.lt.s32.totalorder %s12, 3
      %p158 = pnand %p156, %p157
      %p159 = pneg %p158
      // Predicated region
      $region9: #{better_cnn_forward.7} parent=5 // pred_check
        _
      $region10: #{better_cnn_forward.7} parent=5 // pred_check_branch
        %161 = sbr.rel (%p158) target = $region12
      $region11: #{better_cnn_forward.7} parent=5 // pred_region
        %s162 = ssub.s32 %s12, 1
        // Predicated region
        $region13: #{better_cnn_forward.7} parent=11 // pred_check
          %p163 = pneg %p85
        $region14: #{better_cnn_forward.7} parent=11 // pred_check_branch
          %165 = sbr.rel (%p163) target = $region16
        $region15: #{better_cnn_forward.7} parent=11 // pred_region
          _
        $region16: #{better_cnn_forward.7} parent=11 // pred_fallthru
          _
        // Predicated region
        $region17: #{better_cnn_forward.7} parent=11 // pred_check
          %p166 = pneg %p106
        $region18: #{better_cnn_forward.7} parent=11 // pred_check_branch
          %168 = sbr.rel (%p166) target = $region20
        $region19: #{better_cnn_forward.7} parent=11 // pred_region
          _
        $region20: #{better_cnn_forward.7} parent=11 // pred_fallthru
          _
        // Predicated region
        $region21: #{better_cnn_forward.7} parent=11 // pred_check
          %p169 = pneg %p127
        $region22: #{better_cnn_forward.7} parent=11 // pred_check_branch
          %171 = sbr.rel (%p169) target = $region24
        $region23: #{better_cnn_forward.7} parent=11 // pred_region
          _
        $region24: #{better_cnn_forward.7} parent=11 // pred_fallthru
          _
      $region12: #{better_cnn_forward.7} parent=5 // pred_fallthru
        _
      %p172 = scmp.lt.s32.totalorder %s12, 2
      // Predicated region
      $region25: #{better_cnn_forward.7} parent=5 // pred_check
        %p173 = pneg %p172
      $region26: #{better_cnn_forward.7} parent=5 // pred_check_branch
        %175 = sbr.rel (%p173) target = $region28
      $region27: #{better_cnn_forward.7} parent=5 // pred_region
        // Predicated region
        $region29: #{better_cnn_forward.7} parent=27 // pred_check
          %p176 = pneg %p32
        $region30: #{better_cnn_forward.7} parent=27 // pred_check_branch
          %178 = sbr.rel (%p176) target = $region32
        $region31: #{better_cnn_forward.7} parent=27 // pred_region
          %p179 = scmp.lt.s32.totalorder %s12, 1
          %s180 = scalar_select %p179, %s12, 1
          %s181 = scalar_lea.vmem %s0, %s180
        $region32: #{better_cnn_forward.7} parent=27 // pred_fallthru
          _
        // Predicated region
        $region33: #{better_cnn_forward.7} parent=27 // pred_check
          %p182 = pneg %p58
        $region34: #{better_cnn_forward.7} parent=27 // pred_check_branch
          %184 = sbr.rel (%p182) target = $region36
        $region35: #{better_cnn_forward.7} parent=27 // pred_region
          %s185 = smul.u32 16, %s12
          %p186 = scmp.lt.s32.totalorder %s185, 31
          %s187 = scalar_select %p186, %s185, 31
          %s188 = smul.addr %s187, 4
          %s189 = smul.addr %s188, 4
          %s190 = scalar_lea.vmem %s1, %s189
          %s191 = smul.u32 16, %s12
        $region36: #{better_cnn_forward.7} parent=27 // pred_fallthru
          _
      $region28: #{better_cnn_forward.7} parent=5 // pred_fallthru
        _
      %p192 = scmp.le.s32.totalorder 1, %s12
      %p193 = scmp.lt.s32.totalorder %s12, 3
      %p194 = pnand %p192, %p193
      %p195 = pneg %p194
      // Predicated region
      $region37: #{better_cnn_forward.7} parent=5 // pred_check
        _
      $region38: #{better_cnn_forward.7} parent=5 // pred_check_branch
        %197 = sbr.rel (%p194) target = $region40
      $region39: #{better_cnn_forward.7} parent=5 // pred_region
        %s198 = ssub.s32 %s12, 1
        %p199 = scmp.lt.s32.totalorder %s17, 1
        %s200 = scalar_select %p199, %s17, 1
        %s201 = scalar_lea.vmem %s0, %s200
        %p202 = pneg %p38
        %p203 = pneg %p35
        %s204 = smul.u32 16, %s17
        %p205 = scmp.lt.s32.totalorder %s204, 31
        %s206 = scalar_select %p205, %s204, 31
        %s207 = smul.addr %s206, 4
        %s208 = smul.addr %s207, 4
        %s209 = scalar_lea.vmem %s1, %s208
        %p210 = pneg %p64
        %p211 = pneg %p61
        %p212 = pneg %p85
        %p213 = pneg %p82
        %p214 = pneg %p106
        %p215 = pneg %p103
        %p216 = pneg %p127
        %p217 = pneg %p124
        %p218 = pneg %p148
        %p219 = pneg %p145
        %p220 = scmp.lt.s32.totalorder %s17, 1
        %s221 = scalar_select %p220, %s17, 1
        %s222 = scalar_lea.vmem %s0, %s221
        %s223 = smul.u32 16, %s17
        %p224 = scmp.lt.s32.totalorder %s223, 31
        %s225 = scalar_select %p224, %s223, 31
        %s226 = smul.addr %s225, 4
        %s227 = smul.addr %s226, 4
        %s228 = scalar_lea.vmem %s1, %s227
        %s229 = smul.u32 16, %s17
        %p231 = scmp.eq.s32.totalorder %s17, 0
        // Predicated region
        $region41: #{better_cnn_forward.7} parent=39 // pred_check
          %p232 = pneg %p231
        $region42: #{better_cnn_forward.7} parent=39 // pred_check_branch
          %234 = sbr.rel (%p232) target = $region44
        $region43: #{better_cnn_forward.7} parent=39 // pred_region
          %235 = vst [vmem:[#allocation2] sm:$0xff] 0.0
        $region44: #{better_cnn_forward.7} parent=39 // pred_fallthru
          _
        %v236 = vld [vmem:[#allocation2] sm:$0xff]
        %v237 = vld [vmem:[%s222] sm:$0x1]
        %v238 = vld [vmem:[%s228] sm:$0xff]
        %v239 = vld [vmem:[%s228 + $0x8] sm:$0xff]
        %v240 = vld [vmem:[%s228 + $0x10] sm:$0xff]
        %v241 = vld [vmem:[%s228 + $0x18] sm:$0xff]
        %v242 = vld [vmem:[%s228 + $0x20] sm:$0xff]
        %v243 = vld [vmem:[%s228 + $0x28] sm:$0xff]
        %v244 = vld [vmem:[%s228 + $0x30] sm:$0xff]
        %v245 = vld [vmem:[%s228 + $0x38] sm:$0xff]
        %v246 = vld [vmem:[%s228 + $0x40] sm:$0xff]
        %v247 = vld [vmem:[%s228 + $0x48] sm:$0xff]
        %v248 = vld [vmem:[%s228 + $0x50] sm:$0xff]
        %v249 = vld [vmem:[%s228 + $0x58] sm:$0xff]
        %v250 = vld [vmem:[%s228 + $0x60] sm:$0xff]
        %v251 = vld [vmem:[%s228 + $0x68] sm:$0xff]
        %v252 = vld [vmem:[%s228 + $0x70] sm:$0xff]
        %v253 = vld [vmem:[%s228 + $0x78] sm:$0xff]
        %v254 = vld [vmem:[%s228 + $0x80] sm:$0xff]
        %v255 = vld [vmem:[%s228 + $0x88] sm:$0xff]
        %v256 = vld [vmem:[%s228 + $0x90] sm:$0xff]
        %v257 = vld [vmem:[%s228 + $0x98] sm:$0xff]
        %v258 = vld [vmem:[%s228 + $0xa0] sm:$0xff]
        %v259 = vld [vmem:[%s228 + $0xa8] sm:$0xff]
        %v260 = vld [vmem:[%s228 + $0xb0] sm:$0xff]
        %v261 = vld [vmem:[%s228 + $0xb8] sm:$0xff]
        %v262 = vld [vmem:[%s228 + $0xc0] sm:$0xff]
        %v263 = vld [vmem:[%s228 + $0xc8] sm:$0xff]
        %v264 = vld [vmem:[%s228 + $0xd0] sm:$0xff]
        %v265 = vld [vmem:[%s228 + $0xd8] sm:$0xff]
        %v266 = vld [vmem:[%s228 + $0xe0] sm:$0xff]
        %v267 = vld [vmem:[%s228 + $0xe8] sm:$0xff]
        %v268 = vld [vmem:[%s228 + $0xf0] sm:$0xff]
        %v269 = vld [vmem:[%s228 + $0xf8] sm:$0xff]
        %v302 = vunpack.c.l.b16 %v238
        %v303 = vunpack.c.h.b16 %v238
        %v304 = vunpack.c.l.b16 %v239
        %v305 = vunpack.c.h.b16 %v239
        %v306 = vunpack.c.l.b16 %v240
        %v307 = vunpack.c.h.b16 %v240
        %v308 = vunpack.c.l.b16 %v241
        %v309 = vunpack.c.h.b16 %v241
        %v310 = vunpack.c.l.b16 %v242
        %v311 = vunpack.c.h.b16 %v242
        %v312 = vunpack.c.l.b16 %v243
        %v313 = vunpack.c.h.b16 %v243
        %v314 = vunpack.c.l.b16 %v244
        %v315 = vunpack.c.h.b16 %v244
        %v316 = vunpack.c.l.b16 %v245
        %v317 = vunpack.c.h.b16 %v245
        %v318 = vunpack.c.l.b16 %v246
        %v319 = vunpack.c.h.b16 %v246
        %v320 = vunpack.c.l.b16 %v247
        %v321 = vunpack.c.h.b16 %v247
        %v322 = vunpack.c.l.b16 %v248
        %v323 = vunpack.c.h.b16 %v248
        %v324 = vunpack.c.l.b16 %v249
        %v325 = vunpack.c.h.b16 %v249
        %v326 = vunpack.c.l.b16 %v250
        %v327 = vunpack.c.h.b16 %v250
        %v328 = vunpack.c.l.b16 %v251
        %v329 = vunpack.c.h.b16 %v251
        %v330 = vunpack.c.l.b16 %v252
        %v331 = vunpack.c.h.b16 %v252
        %v332 = vunpack.c.l.b16 %v253
        %v333 = vunpack.c.h.b16 %v253
        %v334 = vunpack.c.l.b16 %v254
        %v335 = vunpack.c.h.b16 %v254
        %v336 = vunpack.c.l.b16 %v255
        %v337 = vunpack.c.h.b16 %v255
        %v338 = vunpack.c.l.b16 %v256
        %v339 = vunpack.c.h.b16 %v256
        %v340 = vunpack.c.l.b16 %v257
        %v341 = vunpack.c.h.b16 %v257
        %v342 = vunpack.c.l.b16 %v258
        %v343 = vunpack.c.h.b16 %v258
        %v344 = vunpack.c.l.b16 %v259
        %v345 = vunpack.c.h.b16 %v259
        %v346 = vunpack.c.l.b16 %v260
        %v347 = vunpack.c.h.b16 %v260
        %v348 = vunpack.c.l.b16 %v261
        %v349 = vunpack.c.h.b16 %v261
        %v350 = vunpack.c.l.b16 %v262
        %v351 = vunpack.c.h.b16 %v262
        %v352 = vunpack.c.l.b16 %v263
        %v353 = vunpack.c.h.b16 %v263
        %v354 = vunpack.c.l.b16 %v264
        %v355 = vunpack.c.h.b16 %v264
        %v356 = vunpack.c.l.b16 %v265
        %v357 = vunpack.c.h.b16 %v265
        %v358 = vunpack.c.l.b16 %v266
        %v359 = vunpack.c.h.b16 %v266
        %v360 = vunpack.c.l.b16 %v267
        %v361 = vunpack.c.h.b16 %v267
        %v362 = vunpack.c.l.b16 %v268
        %v363 = vunpack.c.h.b16 %v268
        %v364 = vunpack.c.l.b16 %v269
        %v365 = vunpack.c.h.b16 %v269
        %v366 = vpack.c.b16 %v306, %v302
        %v367 = vpack.c.b16 %v307, %v303
        %v368 = vpack.c.b16 %v308, %v304
        %v369 = vpack.c.b16 %v309, %v305
        %v370 = vpack.c.b16 %v314, %v310
        %v371 = vpack.c.b16 %v315, %v311
        %v372 = vpack.c.b16 %v316, %v312
        %v373 = vpack.c.b16 %v317, %v313
        %v374 = vpack.c.b16 %v322, %v318
        %v375 = vpack.c.b16 %v323, %v319
        %v376 = vpack.c.b16 %v324, %v320
        %v377 = vpack.c.b16 %v325, %v321
        %v378 = vpack.c.b16 %v330, %v326
        %v379 = vpack.c.b16 %v331, %v327
        %v380 = vpack.c.b16 %v332, %v328
        %v381 = vpack.c.b16 %v333, %v329
        %v382 = vpack.c.b16 %v338, %v334
        %v383 = vpack.c.b16 %v339, %v335
        %v384 = vpack.c.b16 %v340, %v336
        %v385 = vpack.c.b16 %v341, %v337
        %v386 = vpack.c.b16 %v346, %v342
        %v387 = vpack.c.b16 %v347, %v343
        %v388 = vpack.c.b16 %v348, %v344
        %v389 = vpack.c.b16 %v349, %v345
        %v390 = vpack.c.b16 %v354, %v350
        %v391 = vpack.c.b16 %v355, %v351
        %v392 = vpack.c.b16 %v356, %v352
        %v393 = vpack.c.b16 %v357, %v353
        %v394 = vpack.c.b16 %v362, %v358
        %v395 = vpack.c.b16 %v363, %v359
        %v396 = vpack.c.b16 %v364, %v360
        %v397 = vpack.c.b16 %v365, %v361
        %430 = vmatprep.subr.bf16.mxu0 %v367
        %431 = vmatpush1.bf16.msra.mxu0 %v366
        %432 = vmatprep.subr.bf16.mxu0 %v371
        %433 = vmatpush1.bf16.msra.mxu0 %v370
        %434 = vmatprep.subr.bf16.mxu0 %v375
        %435 = vmatpush1.bf16.msra.mxu0 %v374
        %436 = vmatprep.subr.bf16.mxu0 %v379
        %437 = vmatpush1.bf16.msra.mxu0 %v378
        %438 = vmatprep.subr.bf16.mxu0 %v383
        %439 = vmatpush1.bf16.msra.mxu0 %v382
        %440 = vmatprep.subr.bf16.mxu0 %v387
        %441 = vmatpush1.bf16.msra.mxu0 %v386
        %442 = vmatprep.subr.bf16.mxu0 %v391
        %443 = vmatpush1.bf16.msra.mxu0 %v390
        %444 = vmatprep.subr.bf16.mxu0 %v395
        %445 = vmatpush1.bf16.msra.mxu0 %v394
        %446 = vmatprep.subr.bf16.mxu0 0
        %447 = vmatpush1.bf16.msra.mxu0 0
        %448 = vmatprep.subr.bf16.mxu0 0
        %449 = vmatpush1.bf16.msra.mxu0 0
        %450 = vmatprep.subr.bf16.mxu0 0
        %451 = vmatpush1.bf16.msra.mxu0 0
        %452 = vmatprep.subr.bf16.mxu0 0
        %453 = vmatpush1.bf16.msra.mxu0 0
        %454 = vmatprep.subr.bf16.mxu0 0
        %455 = vmatpush1.bf16.msra.mxu0 0
        %456 = vmatprep.subr.bf16.mxu0 0
        %457 = vmatpush1.bf16.msra.mxu0 0
        %458 = vmatprep.subr.bf16.mxu0 0
        %459 = vmatpush1.bf16.msra.mxu0 0
        %460 = vmatprep.subr.bf16.mxu0 0
        %461 = vmatpush1.bf16.msra.mxu0 0
        %462 = vmatprep.mubr.bf16.mxu0 0
        %463 = vmatmul.mubr.bf16.gmra.mrb[0].mxu0 %v237
        %v464 = vpop.f32.mrb[0].mxu0
        %v465 = vadd.f32 0.0, %v464
        %v466 = vpop.f32.mrb[0].mxu0
        %v467 = vadd.f32 0.0, %v466
        %v468 = vpop.f32.mrb[0].mxu0
        %v469 = vpop.f32.mrb[0].mxu0
        %470 = vdwg.mxu0
        %471 = vmatprep.subr.bf16.mxu0 %v369
        %472 = vmatpush1.bf16.msra.mxu0 %v368
        %473 = vmatprep.subr.bf16.mxu0 %v373
        %474 = vmatpush1.bf16.msra.mxu0 %v372
        %475 = vmatprep.subr.bf16.mxu0 %v377
        %476 = vmatpush1.bf16.msra.mxu0 %v376
        %477 = vmatprep.subr.bf16.mxu0 %v381
        %478 = vmatpush1.bf16.msra.mxu0 %v380
        %479 = vmatprep.subr.bf16.mxu0 %v385
        %480 = vmatpush1.bf16.msra.mxu0 %v384
        %481 = vmatprep.subr.bf16.mxu0 %v389
        %482 = vmatpush1.bf16.msra.mxu0 %v388
        %483 = vmatprep.subr.bf16.mxu0 %v393
        %484 = vmatpush1.bf16.msra.mxu0 %v392
        %485 = vmatprep.subr.bf16.mxu0 %v397
        %486 = vmatpush1.bf16.msra.mxu0 %v396
        %487 = vmatprep.subr.bf16.mxu0 0
        %488 = vmatpush1.bf16.msra.mxu0 0
        %489 = vmatprep.subr.bf16.mxu0 0
        %490 = vmatpush1.bf16.msra.mxu0 0
        %491 = vmatprep.subr.bf16.mxu0 0
        %492 = vmatpush1.bf16.msra.mxu0 0
        %493 = vmatprep.subr.bf16.mxu0 0
        %494 = vmatpush1.bf16.msra.mxu0 0
        %495 = vmatprep.subr.bf16.mxu0 0
        %496 = vmatpush1.bf16.msra.mxu0 0
        %497 = vmatprep.subr.bf16.mxu0 0
        %498 = vmatpush1.bf16.msra.mxu0 0
        %499 = vmatprep.subr.bf16.mxu0 0
        %500 = vmatpush1.bf16.msra.mxu0 0
        %501 = vmatprep.subr.bf16.mxu0 0
        %502 = vmatpush1.bf16.msra.mxu0 0
        %503 = vmatprep.mubr.bf16.mxu0 0
        %504 = vmatmul.mubr.bf16.gmra.mrb[0].mxu0 %v237
        %v505 = vpop.f32.mrb[0].mxu0
        %v506 = vadd.f32 0.0, %v505
        %v507 = vpop.f32.mrb[0].mxu0
        %v508 = vadd.f32 0.0, %v507
        %v509 = vpop.f32.mrb[0].mxu0
        %v510 = vpop.f32.mrb[0].mxu0
        %511 = vdwg.mxu0
        %v516 = vcombine.low %v465, %v467
        %v517 = vcombine.low %v506, %v508
        %v519 = vunpack.c.l.s4 1983009808
        %v520 = vunpack.c.0.s8 %v519
        %v521 = vlaneseq
        %v522 = vshrl.u32 %v521, 7
        %v523 = vsub.s32 %v520, %v522
        %v524 = vrot.slane %v516, %v523
        %v526 = vunpack.c.l.s4 1983009808
        %v527 = vunpack.c.0.s8 %v526
        %v528 = vlaneseq
        %v529 = vshrl.u32 %v528, 7
        %v530 = vsub.s32 %v527, %v529
        %v531 = vrot.slane %v517, %v530
        %v532 = vcombine.low %v524, %v531
        %v534 = vadd.f32 %v236, %v532
        %535 = vst [vmem:[#allocation2] sm:$0xff] %v534
        %p536 = scmp.eq.s32.totalorder %s17, 1
        // Predicated region
        $region45: #{better_cnn_forward.7} parent=39 // pred_check
          %p537 = pneg %p536
        $region46: #{better_cnn_forward.7} parent=39 // pred_check_branch
          %539 = sbr.rel (%p537) target = $region48
        $region47: #{better_cnn_forward.7} parent=39 // pred_region
          %v540 = vld [vmem:[#allocation2] sm:$0xff]
          %v541 = vld [vmem:[%s2] sm:$0xf]
          %v543 = vlaneseq
          %v544 = vshrl.u32 %v543, 7
          %v545 = vsub.s32 0, %v544
          %v546 = vrot.slane %v541, %v545
          %v547 = vlaneseq
          %v548 = vshrl.u32 %v547, 7
          %v549 = vsub.s32 1, %v548
          %v550 = vrot.slane %v541, %v549
          %v551 = vlaneseq
          %v552 = vshrl.u32 %v551, 7
          %v553 = vsub.s32 2, %v552
          %v554 = vrot.slane %v541, %v553
          %v555 = vlaneseq
          %v556 = vshrl.u32 %v555, 7
          %v557 = vsub.s32 3, %v556
          %v558 = vrot.slane %v541, %v557
          %v559 = vcombine.low %v546, %v550
          %v560 = vcombine.low %v554, %v558
          %v562 = vunpack.c.l.s4 1983009808
          %v563 = vunpack.c.0.s8 %v562
          %v564 = vlaneseq
          %v565 = vshrl.u32 %v564, 7
          %v566 = vsub.s32 %v563, %v565
          %v567 = vrot.slane %v559, %v566
          %v569 = vunpack.c.l.s4 1983009808
          %v570 = vunpack.c.0.s8 %v569
          %v571 = vlaneseq
          %v572 = vshrl.u32 %v571, 7
          %v573 = vsub.s32 %v570, %v572
          %v574 = vrot.slane %v560, %v573
          %v575 = vcombine.low %v567, %v574
          %v577 = vadd.f32 %v540, %v575
          %v578 = vmax.f32 %v577, 0.0
          %v580 = vcombine.high %v578, %v578
          %v582 = vunpack.c.l.s4 1983009808
          %v583 = vunpack.c.0.s8 %v582
          %v584 = vlaneseq
          %v585 = vshrl.u32 %v584, 7
          %v586 = vsub.s32 %v583, %v585
          %v587 = vrot.slane %v578, %v586
          %v589 = vunpack.c.l.s4 1983009808
          %v590 = vunpack.c.0.s8 %v589
          %v591 = vlaneseq
          %v592 = vshrl.u32 %v591, 7
          %v593 = vsub.s32 %v590, %v592
          %v594 = vrot.slane %v580, %v593
          %v595 = vcombine.high %v587, %v587
          %v596 = vcombine.high %v594, %v594
          %v601 = vpack.c.bf16 %v587, %v587
          %v602 = vpack.c.bf16 %v595, %v595
          %v603 = vpack.c.bf16 %v594, %v594
          %v604 = vpack.c.bf16 %v596, %v596
          %v605 = vld [vmem:[%s3] sm:$0xf]
          %v606 = vld [vmem:[%s3 + $0x4] sm:$0xf]
          %v607 = vld [vmem:[%s3 + $0x8] sm:$0xf]
          %v608 = vld [vmem:[%s3 + $0xc] sm:$0xf]
          %v609 = vld [vmem:[%s3 + $0x10] sm:$0xf]
          %v610 = vld [vmem:[%s3 + $0x14] sm:$0xf]
          %v611 = vld [vmem:[%s3 + $0x18] sm:$0xf]
          %v612 = vld [vmem:[%s3 + $0x1c] sm:$0xf]
          %v613 = vld [vmem:[%s3 + $0x20] sm:$0xf]
          %v614 = vld [vmem:[%s3 + $0x24] sm:$0xf]
          %v615 = vld [vmem:[%s3 + $0x28] sm:$0xf]
          %v616 = vld [vmem:[%s3 + $0x2c] sm:$0xf]
          %v617 = vld [vmem:[%s3 + $0x30] sm:$0xf]
          %v618 = vld [vmem:[%s3 + $0x34] sm:$0xf]
          %v619 = vld [vmem:[%s3 + $0x38] sm:$0xf]
          %v620 = vld [vmem:[%s3 + $0x3c] sm:$0xf]
          %v621 = vld [vmem:[%s3 + $0x40] sm:$0xf]
          %v622 = vld [vmem:[%s3 + $0x44] sm:$0xf]
          %v623 = vld [vmem:[%s3 + $0x48] sm:$0xf]
          %v624 = vld [vmem:[%s3 + $0x4c] sm:$0xf]
          %v625 = vld [vmem:[%s3 + $0x50] sm:$0xf]
          %v626 = vld [vmem:[%s3 + $0x54] sm:$0xf]
          %v627 = vld [vmem:[%s3 + $0x58] sm:$0xf]
          %v628 = vld [vmem:[%s3 + $0x5c] sm:$0xf]
          %v629 = vld [vmem:[%s3 + $0x60] sm:$0xf]
          %v630 = vld [vmem:[%s3 + $0x64] sm:$0xf]
          %v631 = vld [vmem:[%s3 + $0x68] sm:$0xf]
          %v632 = vld [vmem:[%s3 + $0x6c] sm:$0xf]
          %v633 = vld [vmem:[%s3 + $0x70] sm:$0xf]
          %v634 = vld [vmem:[%s3 + $0x74] sm:$0xf]
          %v635 = vld [vmem:[%s3 + $0x78] sm:$0xf]
          %v636 = vld [vmem:[%s3 + $0x7c] sm:$0xf]
          %v637 = vld [vmem:[%s3 + $0x80] sm:$0xf]
          %v638 = vld [vmem:[%s3 + $0x84] sm:$0xf]
          %v639 = vld [vmem:[%s3 + $0x88] sm:$0xf]
          %v640 = vld [vmem:[%s3 + $0x8c] sm:$0xf]
          %v641 = vld [vmem:[%s3 + $0x90] sm:$0xf]
          %v642 = vld [vmem:[%s3 + $0x94] sm:$0xf]
          %v643 = vld [vmem:[%s3 + $0x98] sm:$0xf]
          %v644 = vld [vmem:[%s3 + $0x9c] sm:$0xf]
          %v645 = vld [vmem:[%s3 + $0xa0] sm:$0xf]
          %v646 = vld [vmem:[%s3 + $0xa4] sm:$0xf]
          %v647 = vld [vmem:[%s3 + $0xa8] sm:$0xf]
          %v648 = vld [vmem:[%s3 + $0xac] sm:$0xf]
          %v649 = vld [vmem:[%s3 + $0xb0] sm:$0xf]
          %v650 = vld [vmem:[%s3 + $0xb4] sm:$0xf]
          %v651 = vld [vmem:[%s3 + $0xb8] sm:$0xf]
          %v652 = vld [vmem:[%s3 + $0xbc] sm:$0xf]
          %v653 = vld [vmem:[%s3 + $0xc0] sm:$0xf]
          %v654 = vld [vmem:[%s3 + $0xc4] sm:$0xf]
          %v655 = vld [vmem:[%s3 + $0xc8] sm:$0xf]
          %v656 = vld [vmem:[%s3 + $0xcc] sm:$0xf]
          %v657 = vld [vmem:[%s3 + $0xd0] sm:$0xf]
          %v658 = vld [vmem:[%s3 + $0xd4] sm:$0xf]
          %v659 = vld [vmem:[%s3 + $0xd8] sm:$0xf]
          %v660 = vld [vmem:[%s3 + $0xdc] sm:$0xf]
          %v661 = vld [vmem:[%s3 + $0xe0] sm:$0xf]
          %v662 = vld [vmem:[%s3 + $0xe4] sm:$0xf]
          %v663 = vld [vmem:[%s3 + $0xe8] sm:$0xf]
          %v664 = vld [vmem:[%s3 + $0xec] sm:$0xf]
          %v665 = vld [vmem:[%s3 + $0xf0] sm:$0xf]
          %v666 = vld [vmem:[%s3 + $0xf4] sm:$0xf]
          %v667 = vld [vmem:[%s3 + $0xf8] sm:$0xf]
          %v668 = vld [vmem:[%s3 + $0xfc] sm:$0xf]
          %v669 = vld [vmem:[%s4] sm:$0x1]
          %v671 = vlaneseq
          %v672 = vshrl.u32 %v671, 7
          %v673 = vsub.s32 0, %v672
          %v674 = vrot.slane %v669, %v673
          %v740 = vunpack.c.l.b16 %v605
          %v741 = vunpack.c.l.b16 %v606
          %v742 = vunpack.c.l.b16 %v607
          %v743 = vunpack.c.l.b16 %v608
          %v744 = vunpack.c.l.b16 %v609
          %v745 = vunpack.c.l.b16 %v610
          %v746 = vunpack.c.l.b16 %v611
          %v747 = vunpack.c.l.b16 %v612
          %v748 = vunpack.c.l.b16 %v613
          %v749 = vunpack.c.l.b16 %v614
          %v750 = vunpack.c.l.b16 %v615
          %v751 = vunpack.c.l.b16 %v616
          %v752 = vunpack.c.l.b16 %v617
          %v753 = vunpack.c.l.b16 %v618
          %v754 = vunpack.c.l.b16 %v619
          %v755 = vunpack.c.l.b16 %v620
          %v756 = vunpack.c.l.b16 %v621
          %v757 = vunpack.c.l.b16 %v622
          %v758 = vunpack.c.l.b16 %v623
          %v759 = vunpack.c.l.b16 %v624
          %v760 = vunpack.c.l.b16 %v625
          %v761 = vunpack.c.l.b16 %v626
          %v762 = vunpack.c.l.b16 %v627
          %v763 = vunpack.c.l.b16 %v628
          %v764 = vunpack.c.l.b16 %v629
          %v765 = vunpack.c.l.b16 %v630
          %v766 = vunpack.c.l.b16 %v631
          %v767 = vunpack.c.l.b16 %v632
          %v768 = vunpack.c.l.b16 %v633
          %v769 = vunpack.c.l.b16 %v634
          %v770 = vunpack.c.l.b16 %v635
          %v771 = vunpack.c.l.b16 %v636
          %v772 = vunpack.c.l.b16 %v637
          %v773 = vunpack.c.l.b16 %v638
          %v774 = vunpack.c.l.b16 %v639
          %v775 = vunpack.c.l.b16 %v640
          %v776 = vunpack.c.l.b16 %v641
          %v777 = vunpack.c.l.b16 %v642
          %v778 = vunpack.c.l.b16 %v643
          %v779 = vunpack.c.l.b16 %v644
          %v780 = vunpack.c.l.b16 %v645
          %v781 = vunpack.c.l.b16 %v646
          %v782 = vunpack.c.l.b16 %v647
          %v783 = vunpack.c.l.b16 %v648
          %v784 = vunpack.c.l.b16 %v649
          %v785 = vunpack.c.l.b16 %v650
          %v786 = vunpack.c.l.b16 %v651
          %v787 = vunpack.c.l.b16 %v652
          %v788 = vunpack.c.l.b16 %v653
          %v789 = vunpack.c.l.b16 %v654
          %v790 = vunpack.c.l.b16 %v655
          %v791 = vunpack.c.l.b16 %v656
          %v792 = vunpack.c.l.b16 %v657
          %v793 = vunpack.c.l.b16 %v658
          %v794 = vunpack.c.l.b16 %v659
          %v795 = vunpack.c.l.b16 %v660
          %v796 = vunpack.c.l.b16 %v661
          %v797 = vunpack.c.l.b16 %v662
          %v798 = vunpack.c.l.b16 %v663
          %v799 = vunpack.c.l.b16 %v664
          %v800 = vunpack.c.l.b16 %v665
          %v801 = vunpack.c.l.b16 %v666
          %v802 = vunpack.c.l.b16 %v667
          %v803 = vunpack.c.l.b16 %v668
          %v804 = vpack.c.b16 %v741, %v740
          %v805 = vpack.c.b16 %v743, %v742
          %v806 = vpack.c.b16 %v745, %v744
          %v807 = vpack.c.b16 %v747, %v746
          %v808 = vpack.c.b16 %v749, %v748
          %v809 = vpack.c.b16 %v751, %v750
          %v810 = vpack.c.b16 %v753, %v752
          %v811 = vpack.c.b16 %v755, %v754
          %v812 = vpack.c.b16 %v757, %v756
          %v813 = vpack.c.b16 %v759, %v758
          %v814 = vpack.c.b16 %v761, %v760
          %v815 = vpack.c.b16 %v763, %v762
          %v816 = vpack.c.b16 %v765, %v764
          %v817 = vpack.c.b16 %v767, %v766
          %v818 = vpack.c.b16 %v769, %v768
          %v819 = vpack.c.b16 %v771, %v770
          %v820 = vpack.c.b16 %v773, %v772
          %v821 = vpack.c.b16 %v775, %v774
          %v822 = vpack.c.b16 %v777, %v776
          %v823 = vpack.c.b16 %v779, %v778
          %v824 = vpack.c.b16 %v781, %v780
          %v825 = vpack.c.b16 %v783, %v782
          %v826 = vpack.c.b16 %v785, %v784
          %v827 = vpack.c.b16 %v787, %v786
          %v828 = vpack.c.b16 %v789, %v788
          %v829 = vpack.c.b16 %v791, %v790
          %v830 = vpack.c.b16 %v793, %v792
          %v831 = vpack.c.b16 %v795, %v794
          %v832 = vpack.c.b16 %v797, %v796
          %v833 = vpack.c.b16 %v799, %v798
          %v834 = vpack.c.b16 %v801, %v800
          %v835 = vpack.c.b16 %v803, %v802
          %868 = vmatprep.subr.bf16.mxu0 0
          %869 = vmatpush1.bf16.msra.mxu0 %v804
          %870 = vmatprep.subr.bf16.mxu0 0
          %871 = vmatpush1.bf16.msra.mxu0 %v805
          %872 = vmatprep.subr.bf16.mxu0 0
          %873 = vmatpush1.bf16.msra.mxu0 %v806
          %874 = vmatprep.subr.bf16.mxu0 0
          %875 = vmatpush1.bf16.msra.mxu0 %v807
          %876 = vmatprep.subr.bf16.mxu0 0
          %877 = vmatpush1.bf16.msra.mxu0 %v808
          %878 = vmatprep.subr.bf16.mxu0 0
          %879 = vmatpush1.bf16.msra.mxu0 %v809
          %880 = vmatprep.subr.bf16.mxu0 0
          %881 = vmatpush1.bf16.msra.mxu0 %v810
          %882 = vmatprep.subr.bf16.mxu0 0
          %883 = vmatpush1.bf16.msra.mxu0 %v811
          %884 = vmatprep.subr.bf16.mxu0 0
          %885 = vmatpush1.bf16.msra.mxu0 %v812
          %886 = vmatprep.subr.bf16.mxu0 0
          %887 = vmatpush1.bf16.msra.mxu0 %v813
          %888 = vmatprep.subr.bf16.mxu0 0
          %889 = vmatpush1.bf16.msra.mxu0 %v814
          %890 = vmatprep.subr.bf16.mxu0 0
          %891 = vmatpush1.bf16.msra.mxu0 %v815
          %892 = vmatprep.subr.bf16.mxu0 0
          %893 = vmatpush1.bf16.msra.mxu0 %v816
          %894 = vmatprep.subr.bf16.mxu0 0
          %895 = vmatpush1.bf16.msra.mxu0 %v817
          %896 = vmatprep.subr.bf16.mxu0 0
          %897 = vmatpush1.bf16.msra.mxu0 %v818
          %898 = vmatprep.subr.bf16.mxu0 0
          %899 = vmatpush1.bf16.msra.mxu0 %v819
          %900 = vmatprep.mubr.bf16.mxu0 %v602
          %901 = vmatmul.mubr.bf16.gmra.mrb[0].mxu0 %v601
          %v902 = vpop.f32.mrb[0].mxu0
          %v903 = vadd.f32 %v674, %v902
          %v904 = vpop.f32.mrb[0].mxu0
          %v905 = vpop.f32.mrb[0].mxu0
          %v906 = vpop.f32.mrb[0].mxu0
          %907 = vdwg.mxu0
          %908 = vmatprep.subr.bf16.mxu0 0
          %909 = vmatpush1.bf16.msra.mxu0 %v820
          %910 = vmatprep.subr.bf16.mxu0 0
          %911 = vmatpush1.bf16.msra.mxu0 %v821
          %912 = vmatprep.subr.bf16.mxu0 0
          %913 = vmatpush1.bf16.msra.mxu0 %v822
          %914 = vmatprep.subr.bf16.mxu0 0
          %915 = vmatpush1.bf16.msra.mxu0 %v823
          %916 = vmatprep.subr.bf16.mxu0 0
          %917 = vmatpush1.bf16.msra.mxu0 %v824
          %918 = vmatprep.subr.bf16.mxu0 0
          %919 = vmatpush1.bf16.msra.mxu0 %v825
          %920 = vmatprep.subr.bf16.mxu0 0
          %921 = vmatpush1.bf16.msra.mxu0 %v826
          %922 = vmatprep.subr.bf16.mxu0 0
          %923 = vmatpush1.bf16.msra.mxu0 %v827
          %924 = vmatprep.subr.bf16.mxu0 0
          %925 = vmatpush1.bf16.msra.mxu0 %v828
          %926 = vmatprep.subr.bf16.mxu0 0
          %927 = vmatpush1.bf16.msra.mxu0 %v829
          %928 = vmatprep.subr.bf16.mxu0 0
          %929 = vmatpush1.bf16.msra.mxu0 %v830
          %930 = vmatprep.subr.bf16.mxu0 0
          %931 = vmatpush1.bf16.msra.mxu0 %v831
          %932 = vmatprep.subr.bf16.mxu0 0
          %933 = vmatpush1.bf16.msra.mxu0 %v832
          %934 = vmatprep.subr.bf16.mxu0 0
          %935 = vmatpush1.bf16.msra.mxu0 %v833
          %936 = vmatprep.subr.bf16.mxu0 0
          %937 = vmatpush1.bf16.msra.mxu0 %v834
          %938 = vmatprep.subr.bf16.mxu0 0
          %939 = vmatpush1.bf16.msra.mxu0 %v835
          %940 = vmatprep.mubr.bf16.mxu0 %v604
          %941 = vmatmul.mubr.bf16.gmra.mrb[0].mxu0 %v603
          %v942 = vpop.f32.mrb[0].mxu0
          %v943 = vadd.f32 %v903, %v942
          %v944 = vpop.f32.mrb[0].mxu0
          %v945 = vpop.f32.mrb[0].mxu0
          %v946 = vpop.f32.mrb[0].mxu0
          %947 = vdwg.mxu0
          %948 = vst [vmem:[#allocation3] sm:$0x3] %v943
        $region48: #{better_cnn_forward.7} parent=39 // pred_fallthru
          _
        // Predicated region
        $region49: #{better_cnn_forward.7} parent=39 // pred_check
          %p949 = pneg %p145
        $region50: #{better_cnn_forward.7} parent=39 // pred_check_branch
          %951 = sbr.rel (%p949) target = $region52
        $region51: #{better_cnn_forward.7} parent=39 // pred_region
          %s953 = ssub.s32 32, 32
          %954 = vsyncadd [#allocation4], %s953
          %s956 = sshll.u32 [#allocation3], 4
          %s957 = int_to_ptr.vmem [resolvable:$true] %s956
          %959 = dma.vmem_to_hbm [thread:$0]  %s957, 32, %s5, [#allocation4]
        $region52: #{better_cnn_forward.7} parent=39 // pred_fallthru
          _
        // Predicated region
        $region53: #{better_cnn_forward.7} parent=39 // pred_check
          %p960 = pneg %p145
        $region54: #{better_cnn_forward.7} parent=39 // pred_check_branch
          %962 = sbr.rel (%p960) target = $region56
        $region55: #{better_cnn_forward.7} parent=39 // pred_region
          %963 = dma.done [#allocation4], 32
        $region56: #{better_cnn_forward.7} parent=39 // pred_fallthru
          _
      $region40: #{better_cnn_forward.7} parent=5 // pred_fallthru
        _
      %p964 = scmp.le.s32.totalorder 2, %s12
      // Predicated region
      $region57: #{better_cnn_forward.7} parent=5 // pred_check
        %p965 = pneg %p964
      $region58: #{better_cnn_forward.7} parent=5 // pred_check_branch
        %967 = sbr.rel (%p965) target = $region60
      $region59: #{better_cnn_forward.7} parent=5 // pred_region
        %s968 = ssub.s32 %s12, 2
      $region60: #{better_cnn_forward.7} parent=5 // pred_fallthru
        _
    $region6: #{better_cnn_forward.7} parent=1 // loop_footer
      %s16 = sadd.s32 1, %s12
    $region7: #{better_cnn_forward.7} parent=1 // loop_footer_branch
      %11 = sbr.rel target = $region3
    $region8: #{better_cnn_forward.7} parent=1 // loop_exit
      _
    %969 = vsyncpa [#allocation4], 1
    %s970 = scalar_lea.sflag [#allocation4], 1
    %971 = vsyncpa %s970, 1

</llo_original>
